<compile_context>
chip_gen: v6e
topology: v6e:2x2x1
jax: 0.10.0
libtpu: 0.0.40
codegen_flags: <defaults>
</compile_context>

<pallas_src>
import jax
import jax.numpy as jnp
from jax.experimental import pallas as pl
from jax.experimental.pallas import tpu as pltpu

DIM = 32          # dim
N_MATS = 2        # n_mats
LENGTH = 128      # length
N_LAYERS = 6
BN_EPS = 1e-5


def _hic_kernel(x0_ref, matl_ref, zbp_ref, w_ref, out_ref):
    """x0:(D,L) f32, matl:(L,M*L) bf16, zbp:(nl,D,L) f32, w:(nl,2+M,D,D) bf16."""
    D, L = x0_ref.shape
    n_layers = w_ref.shape[0]
    M = matl_ref.shape[1] // L

    def batchnorm(h):
        # Training-mode BatchNorm1d, batch=1, gamma=1 / beta=0.
        # One-pass stats: the two cross-lane reductions are independent and
        # pipeline through the XLU (vs. the dependent two-pass chain).
        inv_n = 1.0 / h.shape[1]
        s1 = jnp.sum(h, axis=1, keepdims=True)
        s2 = jnp.sum(h * h, axis=1, keepdims=True)
        mean = s1 * inv_n
        var = s2 * inv_n - mean * mean
        return (h - mean) * jax.lax.rsqrt(var + BN_EPS)

    x = x0_ref[...]                                      # (D, L) f32 carry

    for i in range(n_layers):                            # unrolled at trace time
        xb = x.astype(jnp.bfloat16)

        # --- l-branch, reordered:  A = x @ [mat_0 | ... | mat_{M-1}]
        # One (D,L)@(L,M*L) MXU pass (N = M*L = 256 on v6e/v7x = full width).
        # mat_lane is (re)loaded here on purpose — do not hoist 16 vregs of
        # operand across the whole unrolled body.
        mat_lane = matl_ref[...]                         # (L, M*L) bf16
        a = jnp.dot(xb, mat_lane,
                    preferred_element_type=jnp.float32)  # (D, M*L) f32
        ab = a.astype(jnp.bfloat16)

        # --- lm conv folded through the l-branch:
        #   h = w_lm@x + Σ_m (w_lm@W_l_m)@A_m + (w_lm@z_bias)
        # w_lm@x depends only on x, so it overlaps with the A chain.
        # (lm conv bias b_lm is cancelled by the BN mean subtraction.)
        h = jnp.dot(w_ref[i, 0], xb,
                    preferred_element_type=jnp.float32)  # (D, L) f32
        for m in range(M):                               # static lane slices
            h = h + jnp.dot(w_ref[i, 1 + m], ab[:, m * L:(m + 1) * L],
                            preferred_element_type=jnp.float32)
        h = h + zbp_ref[i]
        x = batchnorm(h)

        # --- m branch: Conv -> BN -> ReLU -> Conv -> BN -> ReLU, residual add.
        # (Conv biases cancelled by BN mean subtraction.)
        h1 = jnp.dot(w_ref[i, 1 + M], x.astype(jnp.bfloat16),
                     preferred_element_type=jnp.float32)
        h1 = jnp.maximum(batchnorm(h1), 0.0)
        h2 = jnp.dot(w_ref[i, 2 + M], h1.astype(jnp.bfloat16),
                     preferred_element_type=jnp.float32)
        h2 = jnp.maximum(batchnorm(h2), 0.0)
        x = x + h2

    out_ref[...] = x


def init_params(key, dim=DIM, n_mats=N_MATS, length=LENGTH, n_layers=N_LAYERS):
    ks = jax.random.split(key, 11)

    def rn(k, shape, scale=0.1):
        return (scale * jax.random.normal(k, shape)).astype(jnp.float32)

    ones = jnp.ones((n_layers, dim, 1), jnp.float32)
    zeros = jnp.zeros((n_layers, dim, 1), jnp.float32)
    return {
        "initial_x": jax.random.normal(ks[0], (dim, length), jnp.float32),
        # nn.Conv1d(dim, dim*n_mats, 1): weight (dim*n_mats, dim), bias (dim*n_mats,)
        "w_lin": rn(ks[1], (n_layers, n_mats * dim, dim)),
        "b_lin": rn(ks[2], (n_layers, n_mats * dim, 1)),
        # lms: Conv1d(dim, dim, 1) + BatchNorm1d(dim)
        "w_lm": rn(ks[3], (n_layers, dim, dim)),
        "b_lm": rn(ks[4], (n_layers, dim, 1)),       # cancelled by BN (unused)
        "g_lm": ones, "be_lm": zeros,                # identity BN affine (unused)
        # ms: Conv1d + BN + ReLU + Conv1d + BN + ReLU
        "w_m1": rn(ks[5], (n_layers, dim, dim)),
        "b_m1": rn(ks[6], (n_layers, dim, 1)),       # cancelled by BN (unused)
        "g_m1": ones, "be_m1": zeros,                # identity BN affine (unused)
        "w_m2": rn(ks[7], (n_layers, dim, dim)),
        "b_m2": rn(ks[8], (n_layers, dim, 1)),       # cancelled by BN (unused)
        "g_m2": ones, "be_m2": zeros,                # identity BN affine (unused)
    }


def hic_encoder_forward(mat, params):
    """mat: (n_mats, length, length) float32 — the stacked [subdata, mask]
    input of DenoiseNet.hic_encoder with batch 1.  Returns (1, dim, length)."""
    n_layers = params["w_lin"].shape[0]
    D = params["initial_x"].shape[0]
    M, L, _ = mat.shape

    # ---- one-time wrapper-side (XLA) preprocessing ----
    # Lane-concat pre-stack: mat_lane = [mat_0 | mat_1 | ...]  ->  (L, M*L) bf16.
    # The kernel then computes A = x @ mat_lane in one N = M*L MXU pass and
    # slices A at 128-lane (vreg) boundaries — no VMEM relayout scratch.
    mat_bf16 = mat.astype(jnp.bfloat16)
    mat_lane = jnp.transpose(mat_bf16, (1, 0, 2)).reshape(L, M * L)

    # Fold the l-branch conv bias through mat:
    #   (y_m + bl_m·1ᵀ) @ mat_m = y_m @ mat_m + bl_m ⊗ colsum(mat_m)
    # Use the bf16-rounded mat for the colsum so the fold matches the bf16
    # contraction performed in the kernel.
    colsum = jnp.sum(mat_bf16.astype(jnp.float32), axis=1)          # (M, L)
    bl = params["b_lin"].reshape(n_layers, M, D)                    # (nl, M, D)
    z_bias = jnp.einsum("imd,mc->idc", bl, colsum)                  # (nl, D, L)

    # Fold w_lm through the l-branch:
    #   w_lm @ (x + Σ_m W_l_m@A_m + z_bias)
    #     = w_lm@x + Σ_m (w_lm@W_l_m)@A_m + w_lm@z_bias
    w_lin = params["w_lin"].reshape(n_layers, M, D, D)              # (nl, M, D, D)
    w_lm = params["w_lm"]                                           # (nl, D, D)
    w_fold = jnp.einsum("ide,imef->imdf", w_lm, w_lin)              # (nl, M, D, D)
    zb_fold = jnp.einsum("ide,iec->idc", w_lm, z_bias)              # (nl, D, L) f32

    # Packed conv weights: [w_lm, w_lm@W_l_0, ..., w_lm@W_l_{M-1}, w_m1, w_m2]
    w_all = jnp.concatenate(
        [w_lm[:, None], w_fold,
         params["w_m1"][:, None], params["w_m2"][:, None]],
        axis=1).astype(jnp.bfloat16)                                # (nl, 3+M-1+... )=(nl, 2+M+1? ) -> (nl, 3+M? )

    # b_lm / b_m1 / b_m2 and gamma / beta are intentionally NOT passed:
    # per-channel conv biases feeding training-mode BatchNorm1d (stats over the
    # same length axis) cancel exactly, and the BN affine is identity at init.

    args = (params["initial_x"], mat_lane, zb_fold, w_all)
    out = pl.pallas_call(
        _hic_kernel,
        out_shape=jax.ShapeDtypeStruct((D, L), jnp.float32),
        in_specs=[pl.BlockSpec(memory_space=pltpu.MemorySpace.VMEM)] * len(args),
        out_specs=pl.BlockSpec(memory_space=pltpu.MemorySpace.VMEM),
    )(*args)
    return out[None]  # add back batch dim -> (1, dim, length)


if __name__ == "__main__":
    key = jax.random.PRNGKey(0)
    k_mat, k_par = jax.random.split(key)
    params = init_params(k_par)
    # mat: n_mats x length x length (== cat([subdata, mask], 1) with batch 1)
    mat = (jax.random.normal(k_mat, (N_MATS, LENGTH, LENGTH), jnp.float32)
           / jnp.float32(LENGTH))

    out = jax.jit(hic_encoder_forward)(mat, params)
    out = jax.block_until_ready(out)
    assert out.shape == (1, DIM, LENGTH) and out.dtype == jnp.float32
    assert bool(jnp.all(jnp.isfinite(out)))
    print("KERNEL_OK")
</pallas_src>

<mosaic_0001>
module attributes {stable_mosaic.version = 11 : i64} {
  func.func @_hic_kernel(%arg0: memref<32x128xf32, #tpu.memory_space<vmem>>, %arg1: memref<128x256xbf16, #tpu.memory_space<vmem>>, %arg2: memref<6x32x128xf32, #tpu.memory_space<vmem>>, %arg3: memref<6x5x32x32xbf16, #tpu.memory_space<vmem>>, %arg4: memref<32x128xf32, #tpu.memory_space<vmem>>) attributes {dimension_semantics = [], scalar_prefetch = 0 : i64, scratch_operands = 0 : i64, tpu.core_type = #tpu.core_type<tc>} {
    %c0 = arith.constant 0 : index
    %c0_0 = arith.constant 0 : index
    %0 = vector.load %arg0[%c0, %c0_0] : memref<32x128xf32, #tpu.memory_space<vmem>>, vector<32x128xf32>
    %1 = arith.truncf %0 : vector<32x128xf32> to vector<32x128xbf16>
    %c0_1 = arith.constant 0 : index
    %c0_2 = arith.constant 0 : index
    %2 = vector.load %arg1[%c0_1, %c0_2] : memref<128x256xbf16, #tpu.memory_space<vmem>>, vector<128x256xbf16>
    %cst = arith.constant dense<0.000000e+00> : vector<32x256xf32>
    %3 = tpu.matmul %1, %2, %cst {dimension_numbers = #tpu.dot_dimension_numbers<[1], [0], [0], [1], [0, 0, 1, 1], [], []>} : vector<32x128xbf16>, vector<128x256xbf16>, vector<32x256xf32> -> vector<32x256xf32>
    %4 = arith.truncf %3 : vector<32x256xf32> to vector<32x256xbf16>
    %c0_3 = arith.constant 0 : index
    %c0_4 = arith.constant 0 : index
    %c0_5 = arith.constant 0 : index
    %c0_6 = arith.constant 0 : index
    %5 = vector.load %arg3[%c0_3, %c0_4, %c0_5, %c0_6] : memref<6x5x32x32xbf16, #tpu.memory_space<vmem>>, vector<1x1x32x32xbf16>
    %6 = vector.shape_cast %5 : vector<1x1x32x32xbf16> to vector<32x32xbf16>
    %cst_7 = arith.constant dense<0.000000e+00> : vector<32x128xf32>
    %7 = tpu.matmul %6, %1, %cst_7 {dimension_numbers = #tpu.dot_dimension_numbers<[1], [0], [0], [1], [0, 0, 1, 1], [], []>} : vector<32x32xbf16>, vector<32x128xbf16>, vector<32x128xf32> -> vector<32x128xf32>
    %c0_8 = arith.constant 0 : index
    %c1 = arith.constant 1 : index
    %c0_9 = arith.constant 0 : index
    %c0_10 = arith.constant 0 : index
    %8 = vector.load %arg3[%c0_8, %c1, %c0_9, %c0_10] : memref<6x5x32x32xbf16, #tpu.memory_space<vmem>>, vector<1x1x32x32xbf16>
    %9 = vector.shape_cast %8 : vector<1x1x32x32xbf16> to vector<32x32xbf16>
    %10 = vector.extract_strided_slice %4 {offsets = [0, 0], sizes = [32, 128], strides = [1, 1]} : vector<32x256xbf16> to vector<32x128xbf16>
    %cst_11 = arith.constant dense<0.000000e+00> : vector<32x128xf32>
    %11 = tpu.matmul %9, %10, %cst_11 {dimension_numbers = #tpu.dot_dimension_numbers<[1], [0], [0], [1], [0, 0, 1, 1], [], []>} : vector<32x32xbf16>, vector<32x128xbf16>, vector<32x128xf32> -> vector<32x128xf32>
    %12 = arith.addf %7, %11 : vector<32x128xf32>
    %c0_12 = arith.constant 0 : index
    %c2 = arith.constant 2 : index
    %c0_13 = arith.constant 0 : index
    %c0_14 = arith.constant 0 : index
    %13 = vector.load %arg3[%c0_12, %c2, %c0_13, %c0_14] : memref<6x5x32x32xbf16, #tpu.memory_space<vmem>>, vector<1x1x32x32xbf16>
    %14 = vector.shape_cast %13 : vector<1x1x32x32xbf16> to vector<32x32xbf16>
    %15 = vector.extract_strided_slice %4 {offsets = [0, 128], sizes = [32, 128], strides = [1, 1]} : vector<32x256xbf16> to vector<32x128xbf16>
    %cst_15 = arith.constant dense<0.000000e+00> : vector<32x128xf32>
    %16 = tpu.matmul %14, %15, %cst_15 {dimension_numbers = #tpu.dot_dimension_numbers<[1], [0], [0], [1], [0, 0, 1, 1], [], []>} : vector<32x32xbf16>, vector<32x128xbf16>, vector<32x128xf32> -> vector<32x128xf32>
    %17 = arith.addf %12, %16 : vector<32x128xf32>
    %c0_16 = arith.constant 0 : index
    %c0_17 = arith.constant 0 : index
    %c0_18 = arith.constant 0 : index
    %18 = vector.load %arg2[%c0_16, %c0_17, %c0_18] : memref<6x32x128xf32, #tpu.memory_space<vmem>>, vector<1x32x128xf32>
    %19 = vector.shape_cast %18 : vector<1x32x128xf32> to vector<32x128xf32>
    %20 = arith.addf %17, %19 : vector<32x128xf32>
    %cst_19 = arith.constant dense<0.000000e+00> : vector<32xf32>
    %21 = vector.multi_reduction <add>, %20, %cst_19 [1] : vector<32x128xf32> to vector<32xf32>
    %22 = vector.shape_cast %21 : vector<32xf32> to vector<32x1xf32>
    %23 = arith.mulf %20, %20 : vector<32x128xf32>
    %cst_20 = arith.constant dense<0.000000e+00> : vector<32xf32>
    %24 = vector.multi_reduction <add>, %23, %cst_20 [1] : vector<32x128xf32> to vector<32xf32>
    %25 = vector.shape_cast %24 : vector<32xf32> to vector<32x1xf32>
    %cst_21 = arith.constant 7.812500e-03 : f32
    %26 = vector.broadcast %cst_21 : f32 to vector<32x1xf32>
    %27 = arith.mulf %22, %26 : vector<32x1xf32>
    %cst_22 = arith.constant 7.812500e-03 : f32
    %28 = vector.broadcast %cst_22 : f32 to vector<32x1xf32>
    %29 = arith.mulf %25, %28 : vector<32x1xf32>
    %30 = arith.mulf %27, %27 : vector<32x1xf32>
    %31 = arith.subf %29, %30 : vector<32x1xf32>
    %32 = vector.broadcast %27 : vector<32x1xf32> to vector<32x128xf32>
    %33 = arith.subf %20, %32 : vector<32x128xf32>
    %cst_23 = arith.constant 9.99999974E-6 : f32
    %34 = vector.broadcast %cst_23 : f32 to vector<32x1xf32>
    %35 = arith.addf %31, %34 : vector<32x1xf32>
    %36 = math.rsqrt %35 : vector<32x1xf32>
    %37 = vector.broadcast %36 : vector<32x1xf32> to vector<32x128xf32>
    %38 = arith.mulf %33, %37 : vector<32x128xf32>
    %c0_24 = arith.constant 0 : index
    %c3 = arith.constant 3 : index
    %c0_25 = arith.constant 0 : index
    %c0_26 = arith.constant 0 : index
    %39 = vector.load %arg3[%c0_24, %c3, %c0_25, %c0_26] : memref<6x5x32x32xbf16, #tpu.memory_space<vmem>>, vector<1x1x32x32xbf16>
    %40 = vector.shape_cast %39 : vector<1x1x32x32xbf16> to vector<32x32xbf16>
    %41 = arith.truncf %38 : vector<32x128xf32> to vector<32x128xbf16>
    %cst_27 = arith.constant dense<0.000000e+00> : vector<32x128xf32>
    %42 = tpu.matmul %40, %41, %cst_27 {dimension_numbers = #tpu.dot_dimension_numbers<[1], [0], [0], [1], [0, 0, 1, 1], [], []>} : vector<32x32xbf16>, vector<32x128xbf16>, vector<32x128xf32> -> vector<32x128xf32>
    %cst_28 = arith.constant dense<0.000000e+00> : vector<32xf32>
    %43 = vector.multi_reduction <add>, %42, %cst_28 [1] : vector<32x128xf32> to vector<32xf32>
    %44 = vector.shape_cast %43 : vector<32xf32> to vector<32x1xf32>
    %45 = arith.mulf %42, %42 : vector<32x128xf32>
    %cst_29 = arith.constant dense<0.000000e+00> : vector<32xf32>
    %46 = vector.multi_reduction <add>, %45, %cst_29 [1] : vector<32x128xf32> to vector<32xf32>
    %47 = vector.shape_cast %46 : vector<32xf32> to vector<32x1xf32>
    %cst_30 = arith.constant 7.812500e-03 : f32
    %48 = vector.broadcast %cst_30 : f32 to vector<32x1xf32>
    %49 = arith.mulf %44, %48 : vector<32x1xf32>
    %cst_31 = arith.constant 7.812500e-03 : f32
    %50 = vector.broadcast %cst_31 : f32 to vector<32x1xf32>
    %51 = arith.mulf %47, %50 : vector<32x1xf32>
    %52 = arith.mulf %49, %49 : vector<32x1xf32>
    %53 = arith.subf %51, %52 : vector<32x1xf32>
    %54 = vector.broadcast %49 : vector<32x1xf32> to vector<32x128xf32>
    %55 = arith.subf %42, %54 : vector<32x128xf32>
    %cst_32 = arith.constant 9.99999974E-6 : f32
    %56 = vector.broadcast %cst_32 : f32 to vector<32x1xf32>
    %57 = arith.addf %53, %56 : vector<32x1xf32>
    %58 = math.rsqrt %57 : vector<32x1xf32>
    %59 = vector.broadcast %58 : vector<32x1xf32> to vector<32x128xf32>
    %60 = arith.mulf %55, %59 : vector<32x128xf32>
    %cst_33 = arith.constant 0.000000e+00 : f32
    %61 = vector.broadcast %cst_33 : f32 to vector<32x128xf32>
    %62 = arith.maximumf %60, %61 : vector<32x128xf32>
    %c0_34 = arith.constant 0 : index
    %c4 = arith.constant 4 : index
    %c0_35 = arith.constant 0 : index
    %c0_36 = arith.constant 0 : index
    %63 = vector.load %arg3[%c0_34, %c4, %c0_35, %c0_36] : memref<6x5x32x32xbf16, #tpu.memory_space<vmem>>, vector<1x1x32x32xbf16>
    %64 = vector.shape_cast %63 : vector<1x1x32x32xbf16> to vector<32x32xbf16>
    %65 = arith.truncf %62 : vector<32x128xf32> to vector<32x128xbf16>
    %cst_37 = arith.constant dense<0.000000e+00> : vector<32x128xf32>
    %66 = tpu.matmul %64, %65, %cst_37 {dimension_numbers = #tpu.dot_dimension_numbers<[1], [0], [0], [1], [0, 0, 1, 1], [], []>} : vector<32x32xbf16>, vector<32x128xbf16>, vector<32x128xf32> -> vector<32x128xf32>
    %cst_38 = arith.constant dense<0.000000e+00> : vector<32xf32>
    %67 = vector.multi_reduction <add>, %66, %cst_38 [1] : vector<32x128xf32> to vector<32xf32>
    %68 = vector.shape_cast %67 : vector<32xf32> to vector<32x1xf32>
    %69 = arith.mulf %66, %66 : vector<32x128xf32>
    %cst_39 = arith.constant dense<0.000000e+00> : vector<32xf32>
    %70 = vector.multi_reduction <add>, %69, %cst_39 [1] : vector<32x128xf32> to vector<32xf32>
    %71 = vector.shape_cast %70 : vector<32xf32> to vector<32x1xf32>
    %cst_40 = arith.constant 7.812500e-03 : f32
    %72 = vector.broadcast %cst_40 : f32 to vector<32x1xf32>
    %73 = arith.mulf %68, %72 : vector<32x1xf32>
    %cst_41 = arith.constant 7.812500e-03 : f32
    %74 = vector.broadcast %cst_41 : f32 to vector<32x1xf32>
    %75 = arith.mulf %71, %74 : vector<32x1xf32>
    %76 = arith.mulf %73, %73 : vector<32x1xf32>
    %77 = arith.subf %75, %76 : vector<32x1xf32>
    %78 = vector.broadcast %73 : vector<32x1xf32> to vector<32x128xf32>
    %79 = arith.subf %66, %78 : vector<32x128xf32>
    %cst_42 = arith.constant 9.99999974E-6 : f32
    %80 = vector.broadcast %cst_42 : f32 to vector<32x1xf32>
    %81 = arith.addf %77, %80 : vector<32x1xf32>
    %82 = math.rsqrt %81 : vector<32x1xf32>
    %83 = vector.broadcast %82 : vector<32x1xf32> to vector<32x128xf32>
    %84 = arith.mulf %79, %83 : vector<32x128xf32>
    %cst_43 = arith.constant 0.000000e+00 : f32
    %85 = vector.broadcast %cst_43 : f32 to vector<32x128xf32>
    %86 = arith.maximumf %84, %85 : vector<32x128xf32>
    %87 = arith.addf %38, %86 : vector<32x128xf32>
    %88 = arith.truncf %87 : vector<32x128xf32> to vector<32x128xbf16>
    %c0_44 = arith.constant 0 : index
    %c0_45 = arith.constant 0 : index
    %89 = vector.load %arg1[%c0_44, %c0_45] : memref<128x256xbf16, #tpu.memory_space<vmem>>, vector<128x256xbf16>
    %cst_46 = arith.constant dense<0.000000e+00> : vector<32x256xf32>
    %90 = tpu.matmul %88, %89, %cst_46 {dimension_numbers = #tpu.dot_dimension_numbers<[1], [0], [0], [1], [0, 0, 1, 1], [], []>} : vector<32x128xbf16>, vector<128x256xbf16>, vector<32x256xf32> -> vector<32x256xf32>
    %91 = arith.truncf %90 : vector<32x256xf32> to vector<32x256xbf16>
    %c1_47 = arith.constant 1 : index
    %c0_48 = arith.constant 0 : index
    %c0_49 = arith.constant 0 : index
    %c0_50 = arith.constant 0 : index
    %92 = vector.load %arg3[%c1_47, %c0_48, %c0_49, %c0_50] : memref<6x5x32x32xbf16, #tpu.memory_space<vmem>>, vector<1x1x32x32xbf16>
    %93 = vector.shape_cast %92 : vector<1x1x32x32xbf16> to vector<32x32xbf16>
    %cst_51 = arith.constant dense<0.000000e+00> : vector<32x128xf32>
    %94 = tpu.matmul %93, %88, %cst_51 {dimension_numbers = #tpu.dot_dimension_numbers<[1], [0], [0], [1], [0, 0, 1, 1], [], []>} : vector<32x32xbf16>, vector<32x128xbf16>, vector<32x128xf32> -> vector<32x128xf32>
    %c1_52 = arith.constant 1 : index
    %c1_53 = arith.constant 1 : index
    %c0_54 = arith.constant 0 : index
    %c0_55 = arith.constant 0 : index
    %95 = vector.load %arg3[%c1_52, %c1_53, %c0_54, %c0_55] : memref<6x5x32x32xbf16, #tpu.memory_space<vmem>>, vector<1x1x32x32xbf16>
    %96 = vector.shape_cast %95 : vector<1x1x32x32xbf16> to vector<32x32xbf16>
    %97 = vector.extract_strided_slice %91 {offsets = [0, 0], sizes = [32, 128], strides = [1, 1]} : vector<32x256xbf16> to vector<32x128xbf16>
    %cst_56 = arith.constant dense<0.000000e+00> : vector<32x128xf32>
    %98 = tpu.matmul %96, %97, %cst_56 {dimension_numbers = #tpu.dot_dimension_numbers<[1], [0], [0], [1], [0, 0, 1, 1], [], []>} : vector<32x32xbf16>, vector<32x128xbf16>, vector<32x128xf32> -> vector<32x128xf32>
    %99 = arith.addf %94, %98 : vector<32x128xf32>
    %c1_57 = arith.constant 1 : index
    %c2_58 = arith.constant 2 : index
    %c0_59 = arith.constant 0 : index
    %c0_60 = arith.constant 0 : index
    %100 = vector.load %arg3[%c1_57, %c2_58, %c0_59, %c0_60] : memref<6x5x32x32xbf16, #tpu.memory_space<vmem>>, vector<1x1x32x32xbf16>
    %101 = vector.shape_cast %100 : vector<1x1x32x32xbf16> to vector<32x32xbf16>
    %102 = vector.extract_strided_slice %91 {offsets = [0, 128], sizes = [32, 128], strides = [1, 1]} : vector<32x256xbf16> to vector<32x128xbf16>
    %cst_61 = arith.constant dense<0.000000e+00> : vector<32x128xf32>
    %103 = tpu.matmul %101, %102, %cst_61 {dimension_numbers = #tpu.dot_dimension_numbers<[1], [0], [0], [1], [0, 0, 1, 1], [], []>} : vector<32x32xbf16>, vector<32x128xbf16>, vector<32x128xf32> -> vector<32x128xf32>
    %104 = arith.addf %99, %103 : vector<32x128xf32>
    %c1_62 = arith.constant 1 : index
    %c0_63 = arith.constant 0 : index
    %c0_64 = arith.constant 0 : index
    %105 = vector.load %arg2[%c1_62, %c0_63, %c0_64] : memref<6x32x128xf32, #tpu.memory_space<vmem>>, vector<1x32x128xf32>
    %106 = vector.shape_cast %105 : vector<1x32x128xf32> to vector<32x128xf32>
    %107 = arith.addf %104, %106 : vector<32x128xf32>
    %cst_65 = arith.constant dense<0.000000e+00> : vector<32xf32>
    %108 = vector.multi_reduction <add>, %107, %cst_65 [1] : vector<32x128xf32> to vector<32xf32>
    %109 = vector.shape_cast %108 : vector<32xf32> to vector<32x1xf32>
    %110 = arith.mulf %107, %107 : vector<32x128xf32>
    %cst_66 = arith.constant dense<0.000000e+00> : vector<32xf32>
    %111 = vector.multi_reduction <add>, %110, %cst_66 [1] : vector<32x128xf32> to vector<32xf32>
    %112 = vector.shape_cast %111 : vector<32xf32> to vector<32x1xf32>
    %cst_67 = arith.constant 7.812500e-03 : f32
    %113 = vector.broadcast %cst_67 : f32 to vector<32x1xf32>
    %114 = arith.mulf %109, %113 : vector<32x1xf32>
    %cst_68 = arith.constant 7.812500e-03 : f32
    %115 = vector.broadcast %cst_68 : f32 to vector<32x1xf32>
    %116 = arith.mulf %112, %115 : vector<32x1xf32>
    %117 = arith.mulf %114, %114 : vector<32x1xf32>
    %118 = arith.subf %116, %117 : vector<32x1xf32>
    %119 = vector.broadcast %114 : vector<32x1xf32> to vector<32x128xf32>
    %120 = arith.subf %107, %119 : vector<32x128xf32>
    %cst_69 = arith.constant 9.99999974E-6 : f32
    %121 = vector.broadcast %cst_69 : f32 to vector<32x1xf32>
    %122 = arith.addf %118, %121 : vector<32x1xf32>
    %123 = math.rsqrt %122 : vector<32x1xf32>
    %124 = vector.broadcast %123 : vector<32x1xf32> to vector<32x128xf32>
    %125 = arith.mulf %120, %124 : vector<32x128xf32>
    %c1_70 = arith.constant 1 : index
    %c3_71 = arith.constant 3 : index
    %c0_72 = arith.constant 0 : index
    %c0_73 = arith.constant 0 : index
    %126 = vector.load %arg3[%c1_70, %c3_71, %c0_72, %c0_73] : memref<6x5x32x32xbf16, #tpu.memory_space<vmem>>, vector<1x1x32x32xbf16>
    %127 = vector.shape_cast %126 : vector<1x1x32x32xbf16> to vector<32x32xbf16>
    %128 = arith.truncf %125 : vector<32x128xf32> to vector<32x128xbf16>
    %cst_74 = arith.constant dense<0.000000e+00> : vector<32x128xf32>
    %129 = tpu.matmul %127, %128, %cst_74 {dimension_numbers = #tpu.dot_dimension_numbers<[1], [0], [0], [1], [0, 0, 1, 1], [], []>} : vector<32x32xbf16>, vector<32x128xbf16>, vector<32x128xf32> -> vector<32x128xf32>
    %cst_75 = arith.constant dense<0.000000e+00> : vector<32xf32>
    %130 = vector.multi_reduction <add>, %129, %cst_75 [1] : vector<32x128xf32> to vector<32xf32>
    %131 = vector.shape_cast %130 : vector<32xf32> to vector<32x1xf32>
    %132 = arith.mulf %129, %129 : vector<32x128xf32>
    %cst_76 = arith.constant dense<0.000000e+00> : vector<32xf32>
    %133 = vector.multi_reduction <add>, %132, %cst_76 [1] : vector<32x128xf32> to vector<32xf32>
    %134 = vector.shape_cast %133 : vector<32xf32> to vector<32x1xf32>
    %cst_77 = arith.constant 7.812500e-03 : f32
    %135 = vector.broadcast %cst_77 : f32 to vector<32x1xf32>
    %136 = arith.mulf %131, %135 : vector<32x1xf32>
    %cst_78 = arith.constant 7.812500e-03 : f32
    %137 = vector.broadcast %cst_78 : f32 to vector<32x1xf32>
    %138 = arith.mulf %134, %137 : vector<32x1xf32>
    %139 = arith.mulf %136, %136 : vector<32x1xf32>
    %140 = arith.subf %138, %139 : vector<32x1xf32>
    %141 = vector.broadcast %136 : vector<32x1xf32> to vector<32x128xf32>
    %142 = arith.subf %129, %141 : vector<32x128xf32>
    %cst_79 = arith.constant 9.99999974E-6 : f32
    %143 = vector.broadcast %cst_79 : f32 to vector<32x1xf32>
    %144 = arith.addf %140, %143 : vector<32x1xf32>
    %145 = math.rsqrt %144 : vector<32x1xf32>
    %146 = vector.broadcast %145 : vector<32x1xf32> to vector<32x128xf32>
    %147 = arith.mulf %142, %146 : vector<32x128xf32>
    %cst_80 = arith.constant 0.000000e+00 : f32
    %148 = vector.broadcast %cst_80 : f32 to vector<32x128xf32>
    %149 = arith.maximumf %147, %148 : vector<32x128xf32>
    %c1_81 = arith.constant 1 : index
    %c4_82 = arith.constant 4 : index
    %c0_83 = arith.constant 0 : index
    %c0_84 = arith.constant 0 : index
    %150 = vector.load %arg3[%c1_81, %c4_82, %c0_83, %c0_84] : memref<6x5x32x32xbf16, #tpu.memory_space<vmem>>, vector<1x1x32x32xbf16>
    %151 = vector.shape_cast %150 : vector<1x1x32x32xbf16> to vector<32x32xbf16>
    %152 = arith.truncf %149 : vector<32x128xf32> to vector<32x128xbf16>
    %cst_85 = arith.constant dense<0.000000e+00> : vector<32x128xf32>
    %153 = tpu.matmul %151, %152, %cst_85 {dimension_numbers = #tpu.dot_dimension_numbers<[1], [0], [0], [1], [0, 0, 1, 1], [], []>} : vector<32x32xbf16>, vector<32x128xbf16>, vector<32x128xf32> -> vector<32x128xf32>
    %cst_86 = arith.constant dense<0.000000e+00> : vector<32xf32>
    %154 = vector.multi_reduction <add>, %153, %cst_86 [1] : vector<32x128xf32> to vector<32xf32>
    %155 = vector.shape_cast %154 : vector<32xf32> to vector<32x1xf32>
    %156 = arith.mulf %153, %153 : vector<32x128xf32>
    %cst_87 = arith.constant dense<0.000000e+00> : vector<32xf32>
    %157 = vector.multi_reduction <add>, %156, %cst_87 [1] : vector<32x128xf32> to vector<32xf32>
    %158 = vector.shape_cast %157 : vector<32xf32> to vector<32x1xf32>
    %cst_88 = arith.constant 7.812500e-03 : f32
    %159 = vector.broadcast %cst_88 : f32 to vector<32x1xf32>
    %160 = arith.mulf %155, %159 : vector<32x1xf32>
    %cst_89 = arith.constant 7.812500e-03 : f32
    %161 = vector.broadcast %cst_89 : f32 to vector<32x1xf32>
    %162 = arith.mulf %158, %161 : vector<32x1xf32>
    %163 = arith.mulf %160, %160 : vector<32x1xf32>
    %164 = arith.subf %162, %163 : vector<32x1xf32>
    %165 = vector.broadcast %160 : vector<32x1xf32> to vector<32x128xf32>
    %166 = arith.subf %153, %165 : vector<32x128xf32>
    %cst_90 = arith.constant 9.99999974E-6 : f32
    %167 = vector.broadcast %cst_90 : f32 to vector<32x1xf32>
    %168 = arith.addf %164, %167 : vector<32x1xf32>
    %169 = math.rsqrt %168 : vector<32x1xf32>
    %170 = vector.broadcast %169 : vector<32x1xf32> to vector<32x128xf32>
    %171 = arith.mulf %166, %170 : vector<32x128xf32>
    %cst_91 = arith.constant 0.000000e+00 : f32
    %172 = vector.broadcast %cst_91 : f32 to vector<32x128xf32>
    %173 = arith.maximumf %171, %172 : vector<32x128xf32>
    %174 = arith.addf %125, %173 : vector<32x128xf32>
    %175 = arith.truncf %174 : vector<32x128xf32> to vector<32x128xbf16>
    %c0_92 = arith.constant 0 : index
    %c0_93 = arith.constant 0 : index
    %176 = vector.load %arg1[%c0_92, %c0_93] : memref<128x256xbf16, #tpu.memory_space<vmem>>, vector<128x256xbf16>
    %cst_94 = arith.constant dense<0.000000e+00> : vector<32x256xf32>
    %177 = tpu.matmul %175, %176, %cst_94 {dimension_numbers = #tpu.dot_dimension_numbers<[1], [0], [0], [1], [0, 0, 1, 1], [], []>} : vector<32x128xbf16>, vector<128x256xbf16>, vector<32x256xf32> -> vector<32x256xf32>
    %178 = arith.truncf %177 : vector<32x256xf32> to vector<32x256xbf16>
    %c2_95 = arith.constant 2 : index
    %c0_96 = arith.constant 0 : index
    %c0_97 = arith.constant 0 : index
    %c0_98 = arith.constant 0 : index
    %179 = vector.load %arg3[%c2_95, %c0_96, %c0_97, %c0_98] : memref<6x5x32x32xbf16, #tpu.memory_space<vmem>>, vector<1x1x32x32xbf16>
    %180 = vector.shape_cast %179 : vector<1x1x32x32xbf16> to vector<32x32xbf16>
    %cst_99 = arith.constant dense<0.000000e+00> : vector<32x128xf32>
    %181 = tpu.matmul %180, %175, %cst_99 {dimension_numbers = #tpu.dot_dimension_numbers<[1], [0], [0], [1], [0, 0, 1, 1], [], []>} : vector<32x32xbf16>, vector<32x128xbf16>, vector<32x128xf32> -> vector<32x128xf32>
    %c2_100 = arith.constant 2 : index
    %c1_101 = arith.constant 1 : index
    %c0_102 = arith.constant 0 : index
    %c0_103 = arith.constant 0 : index
    %182 = vector.load %arg3[%c2_100, %c1_101, %c0_102, %c0_103] : memref<6x5x32x32xbf16, #tpu.memory_space<vmem>>, vector<1x1x32x32xbf16>
    %183 = vector.shape_cast %182 : vector<1x1x32x32xbf16> to vector<32x32xbf16>
    %184 = vector.extract_strided_slice %178 {offsets = [0, 0], sizes = [32, 128], strides = [1, 1]} : vector<32x256xbf16> to vector<32x128xbf16>
    %cst_104 = arith.constant dense<0.000000e+00> : vector<32x128xf32>
    %185 = tpu.matmul %183, %184, %cst_104 {dimension_numbers = #tpu.dot_dimension_numbers<[1], [0], [0], [1], [0, 0, 1, 1], [], []>} : vector<32x32xbf16>, vector<32x128xbf16>, vector<32x128xf32> -> vector<32x128xf32>
    %186 = arith.addf %181, %185 : vector<32x128xf32>
    %c2_105 = arith.constant 2 : index
    %c2_106 = arith.constant 2 : index
    %c0_107 = arith.constant 0 : index
    %c0_108 = arith.constant 0 : index
    %187 = vector.load %arg3[%c2_105, %c2_106, %c0_107, %c0_108] : memref<6x5x32x32xbf16, #tpu.memory_space<vmem>>, vector<1x1x32x32xbf16>
    %188 = vector.shape_cast %187 : vector<1x1x32x32xbf16> to vector<32x32xbf16>
    %189 = vector.extract_strided_slice %178 {offsets = [0, 128], sizes = [32, 128], strides = [1, 1]} : vector<32x256xbf16> to vector<32x128xbf16>
    %cst_109 = arith.constant dense<0.000000e+00> : vector<32x128xf32>
    %190 = tpu.matmul %188, %189, %cst_109 {dimension_numbers = #tpu.dot_dimension_numbers<[1], [0], [0], [1], [0, 0, 1, 1], [], []>} : vector<32x32xbf16>, vector<32x128xbf16>, vector<32x128xf32> -> vector<32x128xf32>
    %191 = arith.addf %186, %190 : vector<32x128xf32>
    %c2_110 = arith.constant 2 : index
    %c0_111 = arith.constant 0 : index
    %c0_112 = arith.constant 0 : index
    %192 = vector.load %arg2[%c2_110, %c0_111, %c0_112] : memref<6x32x128xf32, #tpu.memory_space<vmem>>, vector<1x32x128xf32>
    %193 = vector.shape_cast %192 : vector<1x32x128xf32> to vector<32x128xf32>
    %194 = arith.addf %191, %193 : vector<32x128xf32>
    %cst_113 = arith.constant dense<0.000000e+00> : vector<32xf32>
    %195 = vector.multi_reduction <add>, %194, %cst_113 [1] : vector<32x128xf32> to vector<32xf32>
    %196 = vector.shape_cast %195 : vector<32xf32> to vector<32x1xf32>
    %197 = arith.mulf %194, %194 : vector<32x128xf32>
    %cst_114 = arith.constant dense<0.000000e+00> : vector<32xf32>
    %198 = vector.multi_reduction <add>, %197, %cst_114 [1] : vector<32x128xf32> to vector<32xf32>
    %199 = vector.shape_cast %198 : vector<32xf32> to vector<32x1xf32>
    %cst_115 = arith.constant 7.812500e-03 : f32
    %200 = vector.broadcast %cst_115 : f32 to vector<32x1xf32>
    %201 = arith.mulf %196, %200 : vector<32x1xf32>
    %cst_116 = arith.constant 7.812500e-03 : f32
    %202 = vector.broadcast %cst_116 : f32 to vector<32x1xf32>
    %203 = arith.mulf %199, %202 : vector<32x1xf32>
    %204 = arith.mulf %201, %201 : vector<32x1xf32>
    %205 = arith.subf %203, %204 : vector<32x1xf32>
    %206 = vector.broadcast %201 : vector<32x1xf32> to vector<32x128xf32>
    %207 = arith.subf %194, %206 : vector<32x128xf32>
    %cst_117 = arith.constant 9.99999974E-6 : f32
    %208 = vector.broadcast %cst_117 : f32 to vector<32x1xf32>
    %209 = arith.addf %205, %208 : vector<32x1xf32>
    %210 = math.rsqrt %209 : vector<32x1xf32>
    %211 = vector.broadcast %210 : vector<32x1xf32> to vector<32x128xf32>
    %212 = arith.mulf %207, %211 : vector<32x128xf32>
    %c2_118 = arith.constant 2 : index
    %c3_119 = arith.constant 3 : index
    %c0_120 = arith.constant 0 : index
    %c0_121 = arith.constant 0 : index
    %213 = vector.load %arg3[%c2_118, %c3_119, %c0_120, %c0_121] : memref<6x5x32x32xbf16, #tpu.memory_space<vmem>>, vector<1x1x32x32xbf16>
    %214 = vector.shape_cast %213 : vector<1x1x32x32xbf16> to vector<32x32xbf16>
    %215 = arith.truncf %212 : vector<32x128xf32> to vector<32x128xbf16>
    %cst_122 = arith.constant dense<0.000000e+00> : vector<32x128xf32>
    %216 = tpu.matmul %214, %215, %cst_122 {dimension_numbers = #tpu.dot_dimension_numbers<[1], [0], [0], [1], [0, 0, 1, 1], [], []>} : vector<32x32xbf16>, vector<32x128xbf16>, vector<32x128xf32> -> vector<32x128xf32>
    %cst_123 = arith.constant dense<0.000000e+00> : vector<32xf32>
    %217 = vector.multi_reduction <add>, %216, %cst_123 [1] : vector<32x128xf32> to vector<32xf32>
    %218 = vector.shape_cast %217 : vector<32xf32> to vector<32x1xf32>
    %219 = arith.mulf %216, %216 : vector<32x128xf32>
    %cst_124 = arith.constant dense<0.000000e+00> : vector<32xf32>
    %220 = vector.multi_reduction <add>, %219, %cst_124 [1] : vector<32x128xf32> to vector<32xf32>
    %221 = vector.shape_cast %220 : vector<32xf32> to vector<32x1xf32>
    %cst_125 = arith.constant 7.812500e-03 : f32
    %222 = vector.broadcast %cst_125 : f32 to vector<32x1xf32>
    %223 = arith.mulf %218, %222 : vector<32x1xf32>
    %cst_126 = arith.constant 7.812500e-03 : f32
    %224 = vector.broadcast %cst_126 : f32 to vector<32x1xf32>
    %225 = arith.mulf %221, %224 : vector<32x1xf32>
    %226 = arith.mulf %223, %223 : vector<32x1xf32>
    %227 = arith.subf %225, %226 : vector<32x1xf32>
    %228 = vector.broadcast %223 : vector<32x1xf32> to vector<32x128xf32>
    %229 = arith.subf %216, %228 : vector<32x128xf32>
    %cst_127 = arith.constant 9.99999974E-6 : f32
    %230 = vector.broadcast %cst_127 : f32 to vector<32x1xf32>
    %231 = arith.addf %227, %230 : vector<32x1xf32>
    %232 = math.rsqrt %231 : vector<32x1xf32>
    %233 = vector.broadcast %232 : vector<32x1xf32> to vector<32x128xf32>
    %234 = arith.mulf %229, %233 : vector<32x128xf32>
    %cst_128 = arith.constant 0.000000e+00 : f32
    %235 = vector.broadcast %cst_128 : f32 to vector<32x128xf32>
    %236 = arith.maximumf %234, %235 : vector<32x128xf32>
    %c2_129 = arith.constant 2 : index
    %c4_130 = arith.constant 4 : index
    %c0_131 = arith.constant 0 : index
    %c0_132 = arith.constant 0 : index
    %237 = vector.load %arg3[%c2_129, %c4_130, %c0_131, %c0_132] : memref<6x5x32x32xbf16, #tpu.memory_space<vmem>>, vector<1x1x32x32xbf16>
    %238 = vector.shape_cast %237 : vector<1x1x32x32xbf16> to vector<32x32xbf16>
    %239 = arith.truncf %236 : vector<32x128xf32> to vector<32x128xbf16>
    %cst_133 = arith.constant dense<0.000000e+00> : vector<32x128xf32>
    %240 = tpu.matmul %238, %239, %cst_133 {dimension_numbers = #tpu.dot_dimension_numbers<[1], [0], [0], [1], [0, 0, 1, 1], [], []>} : vector<32x32xbf16>, vector<32x128xbf16>, vector<32x128xf32> -> vector<32x128xf32>
    %cst_134 = arith.constant dense<0.000000e+00> : vector<32xf32>
    %241 = vector.multi_reduction <add>, %240, %cst_134 [1] : vector<32x128xf32> to vector<32xf32>
    %242 = vector.shape_cast %241 : vector<32xf32> to vector<32x1xf32>
    %243 = arith.mulf %240, %240 : vector<32x128xf32>
    %cst_135 = arith.constant dense<0.000000e+00> : vector<32xf32>
    %244 = vector.multi_reduction <add>, %243, %cst_135 [1] : vector<32x128xf32> to vector<32xf32>
    %245 = vector.shape_cast %244 : vector<32xf32> to vector<32x1xf32>
    %cst_136 = arith.constant 7.812500e-03 : f32
    %246 = vector.broadcast %cst_136 : f32 to vector<32x1xf32>
    %247 = arith.mulf %242, %246 : vector<32x1xf32>
    %cst_137 = arith.constant 7.812500e-03 : f32
    %248 = vector.broadcast %cst_137 : f32 to vector<32x1xf32>
    %249 = arith.mulf %245, %248 : vector<32x1xf32>
    %250 = arith.mulf %247, %247 : vector<32x1xf32>
    %251 = arith.subf %249, %250 : vector<32x1xf32>
    %252 = vector.broadcast %247 : vector<32x1xf32> to vector<32x128xf32>
    %253 = arith.subf %240, %252 : vector<32x128xf32>
    %cst_138 = arith.constant 9.99999974E-6 : f32
    %254 = vector.broadcast %cst_138 : f32 to vector<32x1xf32>
    %255 = arith.addf %251, %254 : vector<32x1xf32>
    %256 = math.rsqrt %255 : vector<32x1xf32>
    %257 = vector.broadcast %256 : vector<32x1xf32> to vector<32x128xf32>
    %258 = arith.mulf %253, %257 : vector<32x128xf32>
    %cst_139 = arith.constant 0.000000e+00 : f32
    %259 = vector.broadcast %cst_139 : f32 to vector<32x128xf32>
    %260 = arith.maximumf %258, %259 : vector<32x128xf32>
    %261 = arith.addf %212, %260 : vector<32x128xf32>
    %262 = arith.truncf %261 : vector<32x128xf32> to vector<32x128xbf16>
    %c0_140 = arith.constant 0 : index
    %c0_141 = arith.constant 0 : index
    %263 = vector.load %arg1[%c0_140, %c0_141] : memref<128x256xbf16, #tpu.memory_space<vmem>>, vector<128x256xbf16>
    %cst_142 = arith.constant dense<0.000000e+00> : vector<32x256xf32>
    %264 = tpu.matmul %262, %263, %cst_142 {dimension_numbers = #tpu.dot_dimension_numbers<[1], [0], [0], [1], [0, 0, 1, 1], [], []>} : vector<32x128xbf16>, vector<128x256xbf16>, vector<32x256xf32> -> vector<32x256xf32>
    %265 = arith.truncf %264 : vector<32x256xf32> to vector<32x256xbf16>
    %c3_143 = arith.constant 3 : index
    %c0_144 = arith.constant 0 : index
    %c0_145 = arith.constant 0 : index
    %c0_146 = arith.constant 0 : index
    %266 = vector.load %arg3[%c3_143, %c0_144, %c0_145, %c0_146] : memref<6x5x32x32xbf16, #tpu.memory_space<vmem>>, vector<1x1x32x32xbf16>
    %267 = vector.shape_cast %266 : vector<1x1x32x32xbf16> to vector<32x32xbf16>
    %cst_147 = arith.constant dense<0.000000e+00> : vector<32x128xf32>
    %268 = tpu.matmul %267, %262, %cst_147 {dimension_numbers = #tpu.dot_dimension_numbers<[1], [0], [0], [1], [0, 0, 1, 1], [], []>} : vector<32x32xbf16>, vector<32x128xbf16>, vector<32x128xf32> -> vector<32x128xf32>
    %c3_148 = arith.constant 3 : index
    %c1_149 = arith.constant 1 : index
    %c0_150 = arith.constant 0 : index
    %c0_151 = arith.constant 0 : index
    %269 = vector.load %arg3[%c3_148, %c1_149, %c0_150, %c0_151] : memref<6x5x32x32xbf16, #tpu.memory_space<vmem>>, vector<1x1x32x32xbf16>
    %270 = vector.shape_cast %269 : vector<1x1x32x32xbf16> to vector<32x32xbf16>
    %271 = vector.extract_strided_slice %265 {offsets = [0, 0], sizes = [32, 128], strides = [1, 1]} : vector<32x256xbf16> to vector<32x128xbf16>
    %cst_152 = arith.constant dense<0.000000e+00> : vector<32x128xf32>
    %272 = tpu.matmul %270, %271, %cst_152 {dimension_numbers = #tpu.dot_dimension_numbers<[1], [0], [0], [1], [0, 0, 1, 1], [], []>} : vector<32x32xbf16>, vector<32x128xbf16>, vector<32x128xf32> -> vector<32x128xf32>
    %273 = arith.addf %268, %272 : vector<32x128xf32>
    %c3_153 = arith.constant 3 : index
    %c2_154 = arith.constant 2 : index
    %c0_155 = arith.constant 0 : index
    %c0_156 = arith.constant 0 : index
    %274 = vector.load %arg3[%c3_153, %c2_154, %c0_155, %c0_156] : memref<6x5x32x32xbf16, #tpu.memory_space<vmem>>, vector<1x1x32x32xbf16>
    %275 = vector.shape_cast %274 : vector<1x1x32x32xbf16> to vector<32x32xbf16>
    %276 = vector.extract_strided_slice %265 {offsets = [0, 128], sizes = [32, 128], strides = [1, 1]} : vector<32x256xbf16> to vector<32x128xbf16>
    %cst_157 = arith.constant dense<0.000000e+00> : vector<32x128xf32>
    %277 = tpu.matmul %275, %276, %cst_157 {dimension_numbers = #tpu.dot_dimension_numbers<[1], [0], [0], [1], [0, 0, 1, 1], [], []>} : vector<32x32xbf16>, vector<32x128xbf16>, vector<32x128xf32> -> vector<32x128xf32>
    %278 = arith.addf %273, %277 : vector<32x128xf32>
    %c3_158 = arith.constant 3 : index
    %c0_159 = arith.constant 0 : index
    %c0_160 = arith.constant 0 : index
    %279 = vector.load %arg2[%c3_158, %c0_159, %c0_160] : memref<6x32x128xf32, #tpu.memory_space<vmem>>, vector<1x32x128xf32>
    %280 = vector.shape_cast %279 : vector<1x32x128xf32> to vector<32x128xf32>
    %281 = arith.addf %278, %280 : vector<32x128xf32>
    %cst_161 = arith.constant dense<0.000000e+00> : vector<32xf32>
    %282 = vector.multi_reduction <add>, %281, %cst_161 [1] : vector<32x128xf32> to vector<32xf32>
    %283 = vector.shape_cast %282 : vector<32xf32> to vector<32x1xf32>
    %284 = arith.mulf %281, %281 : vector<32x128xf32>
    %cst_162 = arith.constant dense<0.000000e+00> : vector<32xf32>
    %285 = vector.multi_reduction <add>, %284, %cst_162 [1] : vector<32x128xf32> to vector<32xf32>
    %286 = vector.shape_cast %285 : vector<32xf32> to vector<32x1xf32>
    %cst_163 = arith.constant 7.812500e-03 : f32
    %287 = vector.broadcast %cst_163 : f32 to vector<32x1xf32>
    %288 = arith.mulf %283, %287 : vector<32x1xf32>
    %cst_164 = arith.constant 7.812500e-03 : f32
    %289 = vector.broadcast %cst_164 : f32 to vector<32x1xf32>
    %290 = arith.mulf %286, %289 : vector<32x1xf32>
    %291 = arith.mulf %288, %288 : vector<32x1xf32>
    %292 = arith.subf %290, %291 : vector<32x1xf32>
    %293 = vector.broadcast %288 : vector<32x1xf32> to vector<32x128xf32>
    %294 = arith.subf %281, %293 : vector<32x128xf32>
    %cst_165 = arith.constant 9.99999974E-6 : f32
    %295 = vector.broadcast %cst_165 : f32 to vector<32x1xf32>
    %296 = arith.addf %292, %295 : vector<32x1xf32>
    %297 = math.rsqrt %296 : vector<32x1xf32>
    %298 = vector.broadcast %297 : vector<32x1xf32> to vector<32x128xf32>
    %299 = arith.mulf %294, %298 : vector<32x128xf32>
    %c3_166 = arith.constant 3 : index
    %c3_167 = arith.constant 3 : index
    %c0_168 = arith.constant 0 : index
    %c0_169 = arith.constant 0 : index
    %300 = vector.load %arg3[%c3_166, %c3_167, %c0_168, %c0_169] : memref<6x5x32x32xbf16, #tpu.memory_space<vmem>>, vector<1x1x32x32xbf16>
    %301 = vector.shape_cast %300 : vector<1x1x32x32xbf16> to vector<32x32xbf16>
    %302 = arith.truncf %299 : vector<32x128xf32> to vector<32x128xbf16>
    %cst_170 = arith.constant dense<0.000000e+00> : vector<32x128xf32>
    %303 = tpu.matmul %301, %302, %cst_170 {dimension_numbers = #tpu.dot_dimension_numbers<[1], [0], [0], [1], [0, 0, 1, 1], [], []>} : vector<32x32xbf16>, vector<32x128xbf16>, vector<32x128xf32> -> vector<32x128xf32>
    %cst_171 = arith.constant dense<0.000000e+00> : vector<32xf32>
    %304 = vector.multi_reduction <add>, %303, %cst_171 [1] : vector<32x128xf32> to vector<32xf32>
    %305 = vector.shape_cast %304 : vector<32xf32> to vector<32x1xf32>
    %306 = arith.mulf %303, %303 : vector<32x128xf32>
    %cst_172 = arith.constant dense<0.000000e+00> : vector<32xf32>
    %307 = vector.multi_reduction <add>, %306, %cst_172 [1] : vector<32x128xf32> to vector<32xf32>
    %308 = vector.shape_cast %307 : vector<32xf32> to vector<32x1xf32>
    %cst_173 = arith.constant 7.812500e-03 : f32
    %309 = vector.broadcast %cst_173 : f32 to vector<32x1xf32>
    %310 = arith.mulf %305, %309 : vector<32x1xf32>
    %cst_174 = arith.constant 7.812500e-03 : f32
    %311 = vector.broadcast %cst_174 : f32 to vector<32x1xf32>
    %312 = arith.mulf %308, %311 : vector<32x1xf32>
    %313 = arith.mulf %310, %310 : vector<32x1xf32>
    %314 = arith.subf %312, %313 : vector<32x1xf32>
    %315 = vector.broadcast %310 : vector<32x1xf32> to vector<32x128xf32>
    %316 = arith.subf %303, %315 : vector<32x128xf32>
    %cst_175 = arith.constant 9.99999974E-6 : f32
    %317 = vector.broadcast %cst_175 : f32 to vector<32x1xf32>
    %318 = arith.addf %314, %317 : vector<32x1xf32>
    %319 = math.rsqrt %318 : vector<32x1xf32>
    %320 = vector.broadcast %319 : vector<32x1xf32> to vector<32x128xf32>
    %321 = arith.mulf %316, %320 : vector<32x128xf32>
    %cst_176 = arith.constant 0.000000e+00 : f32
    %322 = vector.broadcast %cst_176 : f32 to vector<32x128xf32>
    %323 = arith.maximumf %321, %322 : vector<32x128xf32>
    %c3_177 = arith.constant 3 : index
    %c4_178 = arith.constant 4 : index
    %c0_179 = arith.constant 0 : index
    %c0_180 = arith.constant 0 : index
    %324 = vector.load %arg3[%c3_177, %c4_178, %c0_179, %c0_180] : memref<6x5x32x32xbf16, #tpu.memory_space<vmem>>, vector<1x1x32x32xbf16>
    %325 = vector.shape_cast %324 : vector<1x1x32x32xbf16> to vector<32x32xbf16>
    %326 = arith.truncf %323 : vector<32x128xf32> to vector<32x128xbf16>
    %cst_181 = arith.constant dense<0.000000e+00> : vector<32x128xf32>
    %327 = tpu.matmul %325, %326, %cst_181 {dimension_numbers = #tpu.dot_dimension_numbers<[1], [0], [0], [1], [0, 0, 1, 1], [], []>} : vector<32x32xbf16>, vector<32x128xbf16>, vector<32x128xf32> -> vector<32x128xf32>
    %cst_182 = arith.constant dense<0.000000e+00> : vector<32xf32>
    %328 = vector.multi_reduction <add>, %327, %cst_182 [1] : vector<32x128xf32> to vector<32xf32>
    %329 = vector.shape_cast %328 : vector<32xf32> to vector<32x1xf32>
    %330 = arith.mulf %327, %327 : vector<32x128xf32>
    %cst_183 = arith.constant dense<0.000000e+00> : vector<32xf32>
    %331 = vector.multi_reduction <add>, %330, %cst_183 [1] : vector<32x128xf32> to vector<32xf32>
    %332 = vector.shape_cast %331 : vector<32xf32> to vector<32x1xf32>
    %cst_184 = arith.constant 7.812500e-03 : f32
    %333 = vector.broadcast %cst_184 : f32 to vector<32x1xf32>
    %334 = arith.mulf %329, %333 : vector<32x1xf32>
    %cst_185 = arith.constant 7.812500e-03 : f32
    %335 = vector.broadcast %cst_185 : f32 to vector<32x1xf32>
    %336 = arith.mulf %332, %335 : vector<32x1xf32>
    %337 = arith.mulf %334, %334 : vector<32x1xf32>
    %338 = arith.subf %336, %337 : vector<32x1xf32>
    %339 = vector.broadcast %334 : vector<32x1xf32> to vector<32x128xf32>
    %340 = arith.subf %327, %339 : vector<32x128xf32>
    %cst_186 = arith.constant 9.99999974E-6 : f32
    %341 = vector.broadcast %cst_186 : f32 to vector<32x1xf32>
    %342 = arith.addf %338, %341 : vector<32x1xf32>
    %343 = math.rsqrt %342 : vector<32x1xf32>
    %344 = vector.broadcast %343 : vector<32x1xf32> to vector<32x128xf32>
    %345 = arith.mulf %340, %344 : vector<32x128xf32>
    %cst_187 = arith.constant 0.000000e+00 : f32
    %346 = vector.broadcast %cst_187 : f32 to vector<32x128xf32>
    %347 = arith.maximumf %345, %346 : vector<32x128xf32>
    %348 = arith.addf %299, %347 : vector<32x128xf32>
    %349 = arith.truncf %348 : vector<32x128xf32> to vector<32x128xbf16>
    %c0_188 = arith.constant 0 : index
    %c0_189 = arith.constant 0 : index
    %350 = vector.load %arg1[%c0_188, %c0_189] : memref<128x256xbf16, #tpu.memory_space<vmem>>, vector<128x256xbf16>
    %cst_190 = arith.constant dense<0.000000e+00> : vector<32x256xf32>
    %351 = tpu.matmul %349, %350, %cst_190 {dimension_numbers = #tpu.dot_dimension_numbers<[1], [0], [0], [1], [0, 0, 1, 1], [], []>} : vector<32x128xbf16>, vector<128x256xbf16>, vector<32x256xf32> -> vector<32x256xf32>
    %352 = arith.truncf %351 : vector<32x256xf32> to vector<32x256xbf16>
    %c4_191 = arith.constant 4 : index
    %c0_192 = arith.constant 0 : index
    %c0_193 = arith.constant 0 : index
    %c0_194 = arith.constant 0 : index
    %353 = vector.load %arg3[%c4_191, %c0_192, %c0_193, %c0_194] : memref<6x5x32x32xbf16, #tpu.memory_space<vmem>>, vector<1x1x32x32xbf16>
    %354 = vector.shape_cast %353 : vector<1x1x32x32xbf16> to vector<32x32xbf16>
    %cst_195 = arith.constant dense<0.000000e+00> : vector<32x128xf32>
    %355 = tpu.matmul %354, %349, %cst_195 {dimension_numbers = #tpu.dot_dimension_numbers<[1], [0], [0], [1], [0, 0, 1, 1], [], []>} : vector<32x32xbf16>, vector<32x128xbf16>, vector<32x128xf32> -> vector<32x128xf32>
    %c4_196 = arith.constant 4 : index
    %c1_197 = arith.constant 1 : index
    %c0_198 = arith.constant 0 : index
    %c0_199 = arith.constant 0 : index
    %356 = vector.load %arg3[%c4_196, %c1_197, %c0_198, %c0_199] : memref<6x5x32x32xbf16, #tpu.memory_space<vmem>>, vector<1x1x32x32xbf16>
    %357 = vector.shape_cast %356 : vector<1x1x32x32xbf16> to vector<32x32xbf16>
    %358 = vector.extract_strided_slice %352 {offsets = [0, 0], sizes = [32, 128], strides = [1, 1]} : vector<32x256xbf16> to vector<32x128xbf16>
    %cst_200 = arith.constant dense<0.000000e+00> : vector<32x128xf32>
    %359 = tpu.matmul %357, %358, %cst_200 {dimension_numbers = #tpu.dot_dimension_numbers<[1], [0], [0], [1], [0, 0, 1, 1], [], []>} : vector<32x32xbf16>, vector<32x128xbf16>, vector<32x128xf32> -> vector<32x128xf32>
    %360 = arith.addf %355, %359 : vector<32x128xf32>
    %c4_201 = arith.constant 4 : index
    %c2_202 = arith.constant 2 : index
    %c0_203 = arith.constant 0 : index
    %c0_204 = arith.constant 0 : index
    %361 = vector.load %arg3[%c4_201, %c2_202, %c0_203, %c0_204] : memref<6x5x32x32xbf16, #tpu.memory_space<vmem>>, vector<1x1x32x32xbf16>
    %362 = vector.shape_cast %361 : vector<1x1x32x32xbf16> to vector<32x32xbf16>
    %363 = vector.extract_strided_slice %352 {offsets = [0, 128], sizes = [32, 128], strides = [1, 1]} : vector<32x256xbf16> to vector<32x128xbf16>
    %cst_205 = arith.constant dense<0.000000e+00> : vector<32x128xf32>
    %364 = tpu.matmul %362, %363, %cst_205 {dimension_numbers = #tpu.dot_dimension_numbers<[1], [0], [0], [1], [0, 0, 1, 1], [], []>} : vector<32x32xbf16>, vector<32x128xbf16>, vector<32x128xf32> -> vector<32x128xf32>
    %365 = arith.addf %360, %364 : vector<32x128xf32>
    %c4_206 = arith.constant 4 : index
    %c0_207 = arith.constant 0 : index
    %c0_208 = arith.constant 0 : index
    %366 = vector.load %arg2[%c4_206, %c0_207, %c0_208] : memref<6x32x128xf32, #tpu.memory_space<vmem>>, vector<1x32x128xf32>
    %367 = vector.shape_cast %366 : vector<1x32x128xf32> to vector<32x128xf32>
    %368 = arith.addf %365, %367 : vector<32x128xf32>
    %cst_209 = arith.constant dense<0.000000e+00> : vector<32xf32>
    %369 = vector.multi_reduction <add>, %368, %cst_209 [1] : vector<32x128xf32> to vector<32xf32>
    %370 = vector.shape_cast %369 : vector<32xf32> to vector<32x1xf32>
    %371 = arith.mulf %368, %368 : vector<32x128xf32>
    %cst_210 = arith.constant dense<0.000000e+00> : vector<32xf32>
    %372 = vector.multi_reduction <add>, %371, %cst_210 [1] : vector<32x128xf32> to vector<32xf32>
    %373 = vector.shape_cast %372 : vector<32xf32> to vector<32x1xf32>
    %cst_211 = arith.constant 7.812500e-03 : f32
    %374 = vector.broadcast %cst_211 : f32 to vector<32x1xf32>
    %375 = arith.mulf %370, %374 : vector<32x1xf32>
    %cst_212 = arith.constant 7.812500e-03 : f32
    %376 = vector.broadcast %cst_212 : f32 to vector<32x1xf32>
    %377 = arith.mulf %373, %376 : vector<32x1xf32>
    %378 = arith.mulf %375, %375 : vector<32x1xf32>
    %379 = arith.subf %377, %378 : vector<32x1xf32>
    %380 = vector.broadcast %375 : vector<32x1xf32> to vector<32x128xf32>
    %381 = arith.subf %368, %380 : vector<32x128xf32>
    %cst_213 = arith.constant 9.99999974E-6 : f32
    %382 = vector.broadcast %cst_213 : f32 to vector<32x1xf32>
    %383 = arith.addf %379, %382 : vector<32x1xf32>
    %384 = math.rsqrt %383 : vector<32x1xf32>
    %385 = vector.broadcast %384 : vector<32x1xf32> to vector<32x128xf32>
    %386 = arith.mulf %381, %385 : vector<32x128xf32>
    %c4_214 = arith.constant 4 : index
    %c3_215 = arith.constant 3 : index
    %c0_216 = arith.constant 0 : index
    %c0_217 = arith.constant 0 : index
    %387 = vector.load %arg3[%c4_214, %c3_215, %c0_216, %c0_217] : memref<6x5x32x32xbf16, #tpu.memory_space<vmem>>, vector<1x1x32x32xbf16>
    %388 = vector.shape_cast %387 : vector<1x1x32x32xbf16> to vector<32x32xbf16>
    %389 = arith.truncf %386 : vector<32x128xf32> to vector<32x128xbf16>
    %cst_218 = arith.constant dense<0.000000e+00> : vector<32x128xf32>
    %390 = tpu.matmul %388, %389, %cst_218 {dimension_numbers = #tpu.dot_dimension_numbers<[1], [0], [0], [1], [0, 0, 1, 1], [], []>} : vector<32x32xbf16>, vector<32x128xbf16>, vector<32x128xf32> -> vector<32x128xf32>
    %cst_219 = arith.constant dense<0.000000e+00> : vector<32xf32>
    %391 = vector.multi_reduction <add>, %390, %cst_219 [1] : vector<32x128xf32> to vector<32xf32>
    %392 = vector.shape_cast %391 : vector<32xf32> to vector<32x1xf32>
    %393 = arith.mulf %390, %390 : vector<32x128xf32>
    %cst_220 = arith.constant dense<0.000000e+00> : vector<32xf32>
    %394 = vector.multi_reduction <add>, %393, %cst_220 [1] : vector<32x128xf32> to vector<32xf32>
    %395 = vector.shape_cast %394 : vector<32xf32> to vector<32x1xf32>
    %cst_221 = arith.constant 7.812500e-03 : f32
    %396 = vector.broadcast %cst_221 : f32 to vector<32x1xf32>
    %397 = arith.mulf %392, %396 : vector<32x1xf32>
    %cst_222 = arith.constant 7.812500e-03 : f32
    %398 = vector.broadcast %cst_222 : f32 to vector<32x1xf32>
    %399 = arith.mulf %395, %398 : vector<32x1xf32>
    %400 = arith.mulf %397, %397 : vector<32x1xf32>
    %401 = arith.subf %399, %400 : vector<32x1xf32>
    %402 = vector.broadcast %397 : vector<32x1xf32> to vector<32x128xf32>
    %403 = arith.subf %390, %402 : vector<32x128xf32>
    %cst_223 = arith.constant 9.99999974E-6 : f32
    %404 = vector.broadcast %cst_223 : f32 to vector<32x1xf32>
    %405 = arith.addf %401, %404 : vector<32x1xf32>
    %406 = math.rsqrt %405 : vector<32x1xf32>
    %407 = vector.broadcast %406 : vector<32x1xf32> to vector<32x128xf32>
    %408 = arith.mulf %403, %407 : vector<32x128xf32>
    %cst_224 = arith.constant 0.000000e+00 : f32
    %409 = vector.broadcast %cst_224 : f32 to vector<32x128xf32>
    %410 = arith.maximumf %408, %409 : vector<32x128xf32>
    %c4_225 = arith.constant 4 : index
    %c4_226 = arith.constant 4 : index
    %c0_227 = arith.constant 0 : index
    %c0_228 = arith.constant 0 : index
    %411 = vector.load %arg3[%c4_225, %c4_226, %c0_227, %c0_228] : memref<6x5x32x32xbf16, #tpu.memory_space<vmem>>, vector<1x1x32x32xbf16>
    %412 = vector.shape_cast %411 : vector<1x1x32x32xbf16> to vector<32x32xbf16>
    %413 = arith.truncf %410 : vector<32x128xf32> to vector<32x128xbf16>
    %cst_229 = arith.constant dense<0.000000e+00> : vector<32x128xf32>
    %414 = tpu.matmul %412, %413, %cst_229 {dimension_numbers = #tpu.dot_dimension_numbers<[1], [0], [0], [1], [0, 0, 1, 1], [], []>} : vector<32x32xbf16>, vector<32x128xbf16>, vector<32x128xf32> -> vector<32x128xf32>
    %cst_230 = arith.constant dense<0.000000e+00> : vector<32xf32>
    %415 = vector.multi_reduction <add>, %414, %cst_230 [1] : vector<32x128xf32> to vector<32xf32>
    %416 = vector.shape_cast %415 : vector<32xf32> to vector<32x1xf32>
    %417 = arith.mulf %414, %414 : vector<32x128xf32>
    %cst_231 = arith.constant dense<0.000000e+00> : vector<32xf32>
    %418 = vector.multi_reduction <add>, %417, %cst_231 [1] : vector<32x128xf32> to vector<32xf32>
    %419 = vector.shape_cast %418 : vector<32xf32> to vector<32x1xf32>
    %cst_232 = arith.constant 7.812500e-03 : f32
    %420 = vector.broadcast %cst_232 : f32 to vector<32x1xf32>
    %421 = arith.mulf %416, %420 : vector<32x1xf32>
    %cst_233 = arith.constant 7.812500e-03 : f32
    %422 = vector.broadcast %cst_233 : f32 to vector<32x1xf32>
    %423 = arith.mulf %419, %422 : vector<32x1xf32>
    %424 = arith.mulf %421, %421 : vector<32x1xf32>
    %425 = arith.subf %423, %424 : vector<32x1xf32>
    %426 = vector.broadcast %421 : vector<32x1xf32> to vector<32x128xf32>
    %427 = arith.subf %414, %426 : vector<32x128xf32>
    %cst_234 = arith.constant 9.99999974E-6 : f32
    %428 = vector.broadcast %cst_234 : f32 to vector<32x1xf32>
    %429 = arith.addf %425, %428 : vector<32x1xf32>
    %430 = math.rsqrt %429 : vector<32x1xf32>
    %431 = vector.broadcast %430 : vector<32x1xf32> to vector<32x128xf32>
    %432 = arith.mulf %427, %431 : vector<32x128xf32>
    %cst_235 = arith.constant 0.000000e+00 : f32
    %433 = vector.broadcast %cst_235 : f32 to vector<32x128xf32>
    %434 = arith.maximumf %432, %433 : vector<32x128xf32>
    %435 = arith.addf %386, %434 : vector<32x128xf32>
    %436 = arith.truncf %435 : vector<32x128xf32> to vector<32x128xbf16>
    %c0_236 = arith.constant 0 : index
    %c0_237 = arith.constant 0 : index
    %437 = vector.load %arg1[%c0_236, %c0_237] : memref<128x256xbf16, #tpu.memory_space<vmem>>, vector<128x256xbf16>
    %cst_238 = arith.constant dense<0.000000e+00> : vector<32x256xf32>
    %438 = tpu.matmul %436, %437, %cst_238 {dimension_numbers = #tpu.dot_dimension_numbers<[1], [0], [0], [1], [0, 0, 1, 1], [], []>} : vector<32x128xbf16>, vector<128x256xbf16>, vector<32x256xf32> -> vector<32x256xf32>
    %439 = arith.truncf %438 : vector<32x256xf32> to vector<32x256xbf16>
    %c5 = arith.constant 5 : index
    %c0_239 = arith.constant 0 : index
    %c0_240 = arith.constant 0 : index
    %c0_241 = arith.constant 0 : index
    %440 = vector.load %arg3[%c5, %c0_239, %c0_240, %c0_241] : memref<6x5x32x32xbf16, #tpu.memory_space<vmem>>, vector<1x1x32x32xbf16>
    %441 = vector.shape_cast %440 : vector<1x1x32x32xbf16> to vector<32x32xbf16>
    %cst_242 = arith.constant dense<0.000000e+00> : vector<32x128xf32>
    %442 = tpu.matmul %441, %436, %cst_242 {dimension_numbers = #tpu.dot_dimension_numbers<[1], [0], [0], [1], [0, 0, 1, 1], [], []>} : vector<32x32xbf16>, vector<32x128xbf16>, vector<32x128xf32> -> vector<32x128xf32>
    %c5_243 = arith.constant 5 : index
    %c1_244 = arith.constant 1 : index
    %c0_245 = arith.constant 0 : index
    %c0_246 = arith.constant 0 : index
    %443 = vector.load %arg3[%c5_243, %c1_244, %c0_245, %c0_246] : memref<6x5x32x32xbf16, #tpu.memory_space<vmem>>, vector<1x1x32x32xbf16>
    %444 = vector.shape_cast %443 : vector<1x1x32x32xbf16> to vector<32x32xbf16>
    %445 = vector.extract_strided_slice %439 {offsets = [0, 0], sizes = [32, 128], strides = [1, 1]} : vector<32x256xbf16> to vector<32x128xbf16>
    %cst_247 = arith.constant dense<0.000000e+00> : vector<32x128xf32>
    %446 = tpu.matmul %444, %445, %cst_247 {dimension_numbers = #tpu.dot_dimension_numbers<[1], [0], [0], [1], [0, 0, 1, 1], [], []>} : vector<32x32xbf16>, vector<32x128xbf16>, vector<32x128xf32> -> vector<32x128xf32>
    %447 = arith.addf %442, %446 : vector<32x128xf32>
    %c5_248 = arith.constant 5 : index
    %c2_249 = arith.constant 2 : index
    %c0_250 = arith.constant 0 : index
    %c0_251 = arith.constant 0 : index
    %448 = vector.load %arg3[%c5_248, %c2_249, %c0_250, %c0_251] : memref<6x5x32x32xbf16, #tpu.memory_space<vmem>>, vector<1x1x32x32xbf16>
    %449 = vector.shape_cast %448 : vector<1x1x32x32xbf16> to vector<32x32xbf16>
    %450 = vector.extract_strided_slice %439 {offsets = [0, 128], sizes = [32, 128], strides = [1, 1]} : vector<32x256xbf16> to vector<32x128xbf16>
    %cst_252 = arith.constant dense<0.000000e+00> : vector<32x128xf32>
    %451 = tpu.matmul %449, %450, %cst_252 {dimension_numbers = #tpu.dot_dimension_numbers<[1], [0], [0], [1], [0, 0, 1, 1], [], []>} : vector<32x32xbf16>, vector<32x128xbf16>, vector<32x128xf32> -> vector<32x128xf32>
    %452 = arith.addf %447, %451 : vector<32x128xf32>
    %c5_253 = arith.constant 5 : index
    %c0_254 = arith.constant 0 : index
    %c0_255 = arith.constant 0 : index
    %453 = vector.load %arg2[%c5_253, %c0_254, %c0_255] : memref<6x32x128xf32, #tpu.memory_space<vmem>>, vector<1x32x128xf32>
    %454 = vector.shape_cast %453 : vector<1x32x128xf32> to vector<32x128xf32>
    %455 = arith.addf %452, %454 : vector<32x128xf32>
    %cst_256 = arith.constant dense<0.000000e+00> : vector<32xf32>
    %456 = vector.multi_reduction <add>, %455, %cst_256 [1] : vector<32x128xf32> to vector<32xf32>
    %457 = vector.shape_cast %456 : vector<32xf32> to vector<32x1xf32>
    %458 = arith.mulf %455, %455 : vector<32x128xf32>
    %cst_257 = arith.constant dense<0.000000e+00> : vector<32xf32>
    %459 = vector.multi_reduction <add>, %458, %cst_257 [1] : vector<32x128xf32> to vector<32xf32>
    %460 = vector.shape_cast %459 : vector<32xf32> to vector<32x1xf32>
    %cst_258 = arith.constant 7.812500e-03 : f32
    %461 = vector.broadcast %cst_258 : f32 to vector<32x1xf32>
    %462 = arith.mulf %457, %461 : vector<32x1xf32>
    %cst_259 = arith.constant 7.812500e-03 : f32
    %463 = vector.broadcast %cst_259 : f32 to vector<32x1xf32>
    %464 = arith.mulf %460, %463 : vector<32x1xf32>
    %465 = arith.mulf %462, %462 : vector<32x1xf32>
    %466 = arith.subf %464, %465 : vector<32x1xf32>
    %467 = vector.broadcast %462 : vector<32x1xf32> to vector<32x128xf32>
    %468 = arith.subf %455, %467 : vector<32x128xf32>
    %cst_260 = arith.constant 9.99999974E-6 : f32
    %469 = vector.broadcast %cst_260 : f32 to vector<32x1xf32>
    %470 = arith.addf %466, %469 : vector<32x1xf32>
    %471 = math.rsqrt %470 : vector<32x1xf32>
    %472 = vector.broadcast %471 : vector<32x1xf32> to vector<32x128xf32>
    %473 = arith.mulf %468, %472 : vector<32x128xf32>
    %c5_261 = arith.constant 5 : index
    %c3_262 = arith.constant 3 : index
    %c0_263 = arith.constant 0 : index
    %c0_264 = arith.constant 0 : index
    %474 = vector.load %arg3[%c5_261, %c3_262, %c0_263, %c0_264] : memref<6x5x32x32xbf16, #tpu.memory_space<vmem>>, vector<1x1x32x32xbf16>
    %475 = vector.shape_cast %474 : vector<1x1x32x32xbf16> to vector<32x32xbf16>
    %476 = arith.truncf %473 : vector<32x128xf32> to vector<32x128xbf16>
    %cst_265 = arith.constant dense<0.000000e+00> : vector<32x128xf32>
    %477 = tpu.matmul %475, %476, %cst_265 {dimension_numbers = #tpu.dot_dimension_numbers<[1], [0], [0], [1], [0, 0, 1, 1], [], []>} : vector<32x32xbf16>, vector<32x128xbf16>, vector<32x128xf32> -> vector<32x128xf32>
    %cst_266 = arith.constant dense<0.000000e+00> : vector<32xf32>
    %478 = vector.multi_reduction <add>, %477, %cst_266 [1] : vector<32x128xf32> to vector<32xf32>
    %479 = vector.shape_cast %478 : vector<32xf32> to vector<32x1xf32>
    %480 = arith.mulf %477, %477 : vector<32x128xf32>
    %cst_267 = arith.constant dense<0.000000e+00> : vector<32xf32>
    %481 = vector.multi_reduction <add>, %480, %cst_267 [1] : vector<32x128xf32> to vector<32xf32>
    %482 = vector.shape_cast %481 : vector<32xf32> to vector<32x1xf32>
    %cst_268 = arith.constant 7.812500e-03 : f32
    %483 = vector.broadcast %cst_268 : f32 to vector<32x1xf32>
    %484 = arith.mulf %479, %483 : vector<32x1xf32>
    %cst_269 = arith.constant 7.812500e-03 : f32
    %485 = vector.broadcast %cst_269 : f32 to vector<32x1xf32>
    %486 = arith.mulf %482, %485 : vector<32x1xf32>
    %487 = arith.mulf %484, %484 : vector<32x1xf32>
    %488 = arith.subf %486, %487 : vector<32x1xf32>
    %489 = vector.broadcast %484 : vector<32x1xf32> to vector<32x128xf32>
    %490 = arith.subf %477, %489 : vector<32x128xf32>
    %cst_270 = arith.constant 9.99999974E-6 : f32
    %491 = vector.broadcast %cst_270 : f32 to vector<32x1xf32>
    %492 = arith.addf %488, %491 : vector<32x1xf32>
    %493 = math.rsqrt %492 : vector<32x1xf32>
    %494 = vector.broadcast %493 : vector<32x1xf32> to vector<32x128xf32>
    %495 = arith.mulf %490, %494 : vector<32x128xf32>
    %cst_271 = arith.constant 0.000000e+00 : f32
    %496 = vector.broadcast %cst_271 : f32 to vector<32x128xf32>
    %497 = arith.maximumf %495, %496 : vector<32x128xf32>
    %c5_272 = arith.constant 5 : index
    %c4_273 = arith.constant 4 : index
    %c0_274 = arith.constant 0 : index
    %c0_275 = arith.constant 0 : index
    %498 = vector.load %arg3[%c5_272, %c4_273, %c0_274, %c0_275] : memref<6x5x32x32xbf16, #tpu.memory_space<vmem>>, vector<1x1x32x32xbf16>
    %499 = vector.shape_cast %498 : vector<1x1x32x32xbf16> to vector<32x32xbf16>
    %500 = arith.truncf %497 : vector<32x128xf32> to vector<32x128xbf16>
    %cst_276 = arith.constant dense<0.000000e+00> : vector<32x128xf32>
    %501 = tpu.matmul %499, %500, %cst_276 {dimension_numbers = #tpu.dot_dimension_numbers<[1], [0], [0], [1], [0, 0, 1, 1], [], []>} : vector<32x32xbf16>, vector<32x128xbf16>, vector<32x128xf32> -> vector<32x128xf32>
    %cst_277 = arith.constant dense<0.000000e+00> : vector<32xf32>
    %502 = vector.multi_reduction <add>, %501, %cst_277 [1] : vector<32x128xf32> to vector<32xf32>
    %503 = vector.shape_cast %502 : vector<32xf32> to vector<32x1xf32>
    %504 = arith.mulf %501, %501 : vector<32x128xf32>
    %cst_278 = arith.constant dense<0.000000e+00> : vector<32xf32>
    %505 = vector.multi_reduction <add>, %504, %cst_278 [1] : vector<32x128xf32> to vector<32xf32>
    %506 = vector.shape_cast %505 : vector<32xf32> to vector<32x1xf32>
    %cst_279 = arith.constant 7.812500e-03 : f32
    %507 = vector.broadcast %cst_279 : f32 to vector<32x1xf32>
    %508 = arith.mulf %503, %507 : vector<32x1xf32>
    %cst_280 = arith.constant 7.812500e-03 : f32
    %509 = vector.broadcast %cst_280 : f32 to vector<32x1xf32>
    %510 = arith.mulf %506, %509 : vector<32x1xf32>
    %511 = arith.mulf %508, %508 : vector<32x1xf32>
    %512 = arith.subf %510, %511 : vector<32x1xf32>
    %513 = vector.broadcast %508 : vector<32x1xf32> to vector<32x128xf32>
    %514 = arith.subf %501, %513 : vector<32x128xf32>
    %cst_281 = arith.constant 9.99999974E-6 : f32
    %515 = vector.broadcast %cst_281 : f32 to vector<32x1xf32>
    %516 = arith.addf %512, %515 : vector<32x1xf32>
    %517 = math.rsqrt %516 : vector<32x1xf32>
    %518 = vector.broadcast %517 : vector<32x1xf32> to vector<32x128xf32>
    %519 = arith.mulf %514, %518 : vector<32x128xf32>
    %cst_282 = arith.constant 0.000000e+00 : f32
    %520 = vector.broadcast %cst_282 : f32 to vector<32x128xf32>
    %521 = arith.maximumf %519, %520 : vector<32x128xf32>
    %522 = arith.addf %473, %521 : vector<32x128xf32>
    %c0_283 = arith.constant 0 : index
    %c0_284 = arith.constant 0 : index
    %523 = vector.load %arg4[%c0_283, %c0_284] : memref<32x128xf32, #tpu.memory_space<vmem>>, vector<32x128xf32>
    tpu.vector_store %arg4[%c0_283, %c0_284], %522 {strides = array<i32>} : memref<32x128xf32, #tpu.memory_space<vmem>>, vector<32x128xf32>,
    return
  }
}

</mosaic_0001>

<llo_original>
// kernel: hic_encoder_forward.1
$region0: #{hic_encoder_forward.1}
  #allocation0 [shape = 'u32[]', space=smem, size = 0x4, offset = 0x4, fixed_abs, tag = 'smem constant byte address 0x4 - core index']
  #allocation1 [shape = 'u32[144,128]{1,0:T(1,128)}', space=vmem, size = 0x12000, scoped, tag = 'internal scratch']
  %s0 = inlined_call_operand.vmem [shape: f32[32,128], index: 0, kind: input, shape index: {}]
  %s1 = inlined_call_operand.vmem [shape: bf16[128,256], index: 1, kind: input, shape index: {}]
  %s2 = inlined_call_operand.vmem [shape: f32[6,32,128], index: 2, kind: input, shape index: {}]
  %s3 = inlined_call_operand.vmem [shape: bf16[6,5,32,32], index: 3, kind: input, shape index: {}]
  %s4 = inlined_call_operand.hbm [shape: f32[32,128], index: 4, kind: output, shape index: {}]
  %s5 = sld [smem:[#allocation0]]
  $region26: #{hic_encoder_forward.1} parent=0
    _
  %s7 = ssub.s32 1, %s5
  %s8 = scalar_select 0, %s7, %s5
  $region1: #{hic_encoder_forward.1} parent=0
    #allocation2 [shape = 'u8[16384]{0}', space=vmem, size = 0x4000, scoped, tag = 'output window, operand 0, single buffered']
    #allocation3 [shape = 's32[1]{0}', space=sflag, size = 0x4, scoped, tag = 'scoped memory for hic_encoder_forward.1']
    %9 = vsyncpa [#allocation3], 0
    // Predicated region
    $region2: #{hic_encoder_forward.1} parent=1 // pred_check
      _
    $region3: #{hic_encoder_forward.1} parent=1 // pred_check_branch
      %11 = sbr.rel (0) target = $region5
    $region4: #{hic_encoder_forward.1} parent=1 // pred_region
      _
    $region5: #{hic_encoder_forward.1} parent=1 // pred_fallthru
      _
    // Predicated region
    $region6: #{hic_encoder_forward.1} parent=1 // pred_check
      _
    $region7: #{hic_encoder_forward.1} parent=1 // pred_check_branch
      %13 = sbr.rel (0) target = $region9
    $region8: #{hic_encoder_forward.1} parent=1 // pred_region
      _
    $region9: #{hic_encoder_forward.1} parent=1 // pred_fallthru
      _
    // Predicated region
    $region10: #{hic_encoder_forward.1} parent=1 // pred_check
      _
    $region11: #{hic_encoder_forward.1} parent=1 // pred_check_branch
      %15 = sbr.rel (0) target = $region13
    $region12: #{hic_encoder_forward.1} parent=1 // pred_region
      _
    $region13: #{hic_encoder_forward.1} parent=1 // pred_fallthru
      _
    // Predicated region
    $region14: #{hic_encoder_forward.1} parent=1 // pred_check
      _
    $region15: #{hic_encoder_forward.1} parent=1 // pred_check_branch
      %17 = sbr.rel (0) target = $region17
    $region16: #{hic_encoder_forward.1} parent=1 // pred_region
      _
    $region17: #{hic_encoder_forward.1} parent=1 // pred_fallthru
      _
    %v19 = vld [vmem:[%s0] sm:$0xff]
    %v20 = vld [vmem:[%s0 + $0x8] sm:$0xff]
    %v21 = vld [vmem:[%s0 + $0x10] sm:$0xff]
    %v22 = vld [vmem:[%s0 + $0x18] sm:$0xff]
    %v23 = vpack.c.bf16 %v20, %v19
    %v24 = vpack.c.bf16 %v22, %v21
    %v25 = vld [vmem:[%s1] sm:$0xff]
    %v26 = vld [vmem:[%s1 + $0x8] sm:$0xff]
    %v27 = vld [vmem:[%s1 + $0x10] sm:$0xff]
    %v28 = vld [vmem:[%s1 + $0x18] sm:$0xff]
    %v29 = vld [vmem:[%s1 + $0x20] sm:$0xff]
    %v30 = vld [vmem:[%s1 + $0x28] sm:$0xff]
    %v31 = vld [vmem:[%s1 + $0x30] sm:$0xff]
    %v32 = vld [vmem:[%s1 + $0x38] sm:$0xff]
    %v33 = vld [vmem:[%s1 + $0x40] sm:$0xff]
    %v34 = vld [vmem:[%s1 + $0x48] sm:$0xff]
    %v35 = vld [vmem:[%s1 + $0x50] sm:$0xff]
    %v36 = vld [vmem:[%s1 + $0x58] sm:$0xff]
    %v37 = vld [vmem:[%s1 + $0x60] sm:$0xff]
    %v38 = vld [vmem:[%s1 + $0x68] sm:$0xff]
    %v39 = vld [vmem:[%s1 + $0x70] sm:$0xff]
    %v40 = vld [vmem:[%s1 + $0x78] sm:$0xff]
    %v57 = vunpack.c.l.b16 %v25
    %v58 = vunpack.c.h.b16 %v25
    %v59 = vunpack.c.l.b16 %v26
    %v60 = vunpack.c.h.b16 %v26
    %v61 = vunpack.c.l.b16 %v27
    %v62 = vunpack.c.h.b16 %v27
    %v63 = vunpack.c.l.b16 %v28
    %v64 = vunpack.c.h.b16 %v28
    %v65 = vunpack.c.l.b16 %v29
    %v66 = vunpack.c.h.b16 %v29
    %v67 = vunpack.c.l.b16 %v30
    %v68 = vunpack.c.h.b16 %v30
    %v69 = vunpack.c.l.b16 %v31
    %v70 = vunpack.c.h.b16 %v31
    %v71 = vunpack.c.l.b16 %v32
    %v72 = vunpack.c.h.b16 %v32
    %v73 = vunpack.c.l.b16 %v33
    %v74 = vunpack.c.h.b16 %v33
    %v75 = vunpack.c.l.b16 %v34
    %v76 = vunpack.c.h.b16 %v34
    %v77 = vunpack.c.l.b16 %v35
    %v78 = vunpack.c.h.b16 %v35
    %v79 = vunpack.c.l.b16 %v36
    %v80 = vunpack.c.h.b16 %v36
    %v81 = vunpack.c.l.b16 %v37
    %v82 = vunpack.c.h.b16 %v37
    %v83 = vunpack.c.l.b16 %v38
    %v84 = vunpack.c.h.b16 %v38
    %v85 = vunpack.c.l.b16 %v39
    %v86 = vunpack.c.h.b16 %v39
    %v87 = vunpack.c.l.b16 %v40
    %v88 = vunpack.c.h.b16 %v40
    %v89 = vpack.c.b16 %v59, %v57
    %v90 = vpack.c.b16 %v60, %v58
    %v91 = vpack.c.b16 %v63, %v61
    %v92 = vpack.c.b16 %v64, %v62
    %v93 = vpack.c.b16 %v67, %v65
    %v94 = vpack.c.b16 %v68, %v66
    %v95 = vpack.c.b16 %v71, %v69
    %v96 = vpack.c.b16 %v72, %v70
    %v97 = vpack.c.b16 %v75, %v73
    %v98 = vpack.c.b16 %v76, %v74
    %v99 = vpack.c.b16 %v79, %v77
    %v100 = vpack.c.b16 %v80, %v78
    %v101 = vpack.c.b16 %v83, %v81
    %v102 = vpack.c.b16 %v84, %v82
    %v103 = vpack.c.b16 %v87, %v85
    %v104 = vpack.c.b16 %v88, %v86
    %121 = vmatprep.subr.bf16.mxu0 %v104
    %122 = vmatpush1.bf16.msra.mxu0 %v103
    %123 = vmatprep.subr.bf16.mxu0 %v102
    %124 = vmatpush1.bf16.msra.mxu0 %v101
    %125 = vmatprep.subr.bf16.mxu0 %v100
    %126 = vmatpush1.bf16.msra.mxu0 %v99
    %127 = vmatprep.subr.bf16.mxu0 %v98
    %128 = vmatpush1.bf16.msra.mxu0 %v97
    %129 = vmatprep.subr.bf16.mxu0 %v96
    %130 = vmatpush1.bf16.msra.mxu0 %v95
    %131 = vmatprep.subr.bf16.mxu0 %v94
    %132 = vmatpush1.bf16.msra.mxu0 %v93
    %133 = vmatprep.subr.bf16.mxu0 %v92
    %134 = vmatpush1.bf16.msra.mxu0 %v91
    %135 = vmatprep.subr.bf16.mxu0 %v90
    %136 = vmatpush1.bf16.msra.mxu0 %v89
    %137 = vmatprep.subr.bf16.mxu0 0
    %138 = vmatpush2.bf16.msra.mxu0 0
    %139 = vmatprep.subr.bf16.mxu0 0
    %140 = vmatpush2.bf16.msra.mxu0 0
    %141 = vmatprep.subr.bf16.mxu0 0
    %142 = vmatpush2.bf16.msra.mxu0 0
    %143 = vmatprep.subr.bf16.mxu0 0
    %144 = vmatpush2.bf16.msra.mxu0 0
    %145 = vmatprep.subr.bf16.mxu0 0
    %146 = vmatpush2.bf16.msra.mxu0 0
    %147 = vmatprep.subr.bf16.mxu0 0
    %148 = vmatpush2.bf16.msra.mxu0 0
    %149 = vmatprep.subr.bf16.mxu0 0
    %150 = vmatpush2.bf16.msra.mxu0 0
    %151 = vmatprep.subr.bf16.mxu0 0
    %152 = vmatpush2.bf16.msra.mxu0 0
    %153 = vmatprep.mubr.bf16.mxu0 0
    %154 = vmatmul.mubr.bf16.gmra.mxu0 %v23
    %v155 = vpop.f32.mrf.mxu0
    %v156 = vadd.f32 0.0, %v155
    %v157 = vpop.f32.mrf.mxu0
    %v158 = vadd.f32 0.0, %v157
    %v159 = vpop.f32.mrf.mxu0
    %v160 = vadd.f32 0.0, %v159
    %v161 = vpop.f32.mrf.mxu0
    %v162 = vadd.f32 0.0, %v161
    %163 = vmatprep.mubr.bf16.mxu0 0
    %164 = vmatmul.mubr.bf16.gmra.mxu0 %v24
    %v165 = vpop.f32.mrf.mxu0
    %v166 = vadd.f32 0.0, %v165
    %v167 = vpop.f32.mrf.mxu0
    %v168 = vadd.f32 0.0, %v167
    %v169 = vpop.f32.mrf.mxu0
    %v170 = vadd.f32 0.0, %v169
    %v171 = vpop.f32.mrf.mxu0
    %v172 = vadd.f32 0.0, %v171
    %173 = vdwg.mxu0
    %v174 = vpack.c.bf16 %v160, %v156
    %v175 = vpack.c.bf16 %v162, %v158
    %v176 = vpack.c.bf16 %v170, %v166
    %v177 = vpack.c.bf16 %v172, %v168
    %v178 = vld [vmem:[%s3] sm:$0xf]
    %v179 = vld [vmem:[%s3 + $0x4] sm:$0xf]
    %v180 = vld [vmem:[%s3 + $0x8] sm:$0xf]
    %v181 = vld [vmem:[%s3 + $0xc] sm:$0xf]
    %s182 = scalar_lea.vmem %s3, 16
    %v183 = vld [vmem:[%s182] sm:$0xf]
    %v184 = vld [vmem:[%s182 + $0x4] sm:$0xf]
    %v185 = vld [vmem:[%s182 + $0x8] sm:$0xf]
    %v186 = vld [vmem:[%s182 + $0xc] sm:$0xf]
    %v191 = vunpack.c.l.b16 %v183
    %v192 = vunpack.c.l.b16 %v184
    %v193 = vunpack.c.l.b16 %v185
    %v194 = vunpack.c.l.b16 %v186
    %v195 = vpack.c.b16 %v192, %v191
    %v196 = vpack.c.b16 %v194, %v193
    %vm197 = vcmask 261120
    %v199 = vsel %vm197, %v195, 0
    %v202 = vsel %vm197, %v196, 0
    %204 = vmatprep.subr.bf16.mxu0 0
    %205 = vmatpush1.bf16.msra.mxu0 0
    %206 = vmatprep.subr.bf16.mxu0 0
    %207 = vmatpush1.bf16.msra.mxu0 0
    %208 = vmatprep.subr.bf16.mxu0 0
    %209 = vmatpush1.bf16.msra.mxu0 0
    %210 = vmatprep.subr.bf16.mxu0 0
    %211 = vmatpush1.bf16.msra.mxu0 0
    %212 = vmatprep.subr.bf16.mxu0 0
    %213 = vmatpush1.bf16.msra.mxu0 0
    %214 = vmatprep.subr.bf16.mxu0 0
    %215 = vmatpush1.bf16.msra.mxu0 0
    %216 = vmatprep.subr.bf16.mxu0 0
    %217 = vmatpush1.bf16.msra.mxu0 %v176
    %218 = vmatprep.subr.bf16.mxu0 0
    %219 = vmatpush1.bf16.msra.mxu0 %v174
    %220 = vmatprep.subr.bf16.mxu0 0
    %221 = vmatpush2.bf16.msra.mxu0 0
    %222 = vmatprep.subr.bf16.mxu0 0
    %223 = vmatpush2.bf16.msra.mxu0 0
    %224 = vmatprep.subr.bf16.mxu0 0
    %225 = vmatpush2.bf16.msra.mxu0 0
    %226 = vmatprep.subr.bf16.mxu0 0
    %227 = vmatpush2.bf16.msra.mxu0 0
    %228 = vmatprep.subr.bf16.mxu0 0
    %229 = vmatpush2.bf16.msra.mxu0 0
    %230 = vmatprep.subr.bf16.mxu0 0
    %231 = vmatpush2.bf16.msra.mxu0 0
    %232 = vmatprep.subr.bf16.mxu0 0
    %233 = vmatpush2.bf16.msra.mxu0 0
    %234 = vmatprep.subr.bf16.mxu0 0
    %235 = vmatpush2.bf16.msra.mxu0 0
    %236 = vmatprep.mubr.bf16.mxu0 0
    %237 = vmatmul.mubr.bf16.gmra.mxu0 %v199
    %v238 = vpop.f32.mrf.mxu0
    %v239 = vadd.f32 0.0, %v238
    %v240 = vpop.f32.mrf.mxu0
    %v241 = vpop.f32.mrf.mxu0
    %v242 = vadd.f32 0.0, %v241
    %v243 = vpop.f32.mrf.mxu0
    %244 = vmatprep.mubr.bf16.mxu0 0
    %245 = vmatmul.mubr.bf16.gmra.mxu0 %v202
    %v246 = vpop.f32.mrf.mxu0
    %v247 = vadd.f32 0.0, %v246
    %v248 = vpop.f32.mrf.mxu0
    %v249 = vpop.f32.mrf.mxu0
    %v250 = vadd.f32 0.0, %v249
    %v251 = vpop.f32.mrf.mxu0
    %252 = vdwg.mxu0
    %v257 = vunpack.c.l.b16 %v178
    %v258 = vunpack.c.l.b16 %v179
    %v259 = vunpack.c.l.b16 %v180
    %v260 = vunpack.c.l.b16 %v181
    %v261 = vpack.c.b16 %v258, %v257
    %v262 = vpack.c.b16 %v260, %v259
    %v264 = vsel %vm197, %v261, 0
    %v267 = vsel %vm197, %v262, 0
    %269 = vmatprep.subr.bf16.mxu0 0
    %270 = vmatpush1.bf16.msra.mxu0 0
    %271 = vmatprep.subr.bf16.mxu0 0
    %272 = vmatpush1.bf16.msra.mxu0 0
    %273 = vmatprep.subr.bf16.mxu0 0
    %274 = vmatpush1.bf16.msra.mxu0 0
    %275 = vmatprep.subr.bf16.mxu0 0
    %276 = vmatpush1.bf16.msra.mxu0 0
    %277 = vmatprep.subr.bf16.mxu0 0
    %278 = vmatpush1.bf16.msra.mxu0 0
    %279 = vmatprep.subr.bf16.mxu0 0
    %280 = vmatpush1.bf16.msra.mxu0 0
    %281 = vmatprep.subr.bf16.mxu0 0
    %282 = vmatpush1.bf16.msra.mxu0 %v24
    %283 = vmatprep.subr.bf16.mxu0 0
    %284 = vmatpush1.bf16.msra.mxu0 %v23
    %285 = vmatprep.subr.bf16.mxu0 0
    %286 = vmatpush2.bf16.msra.mxu0 0
    %287 = vmatprep.subr.bf16.mxu0 0
    %288 = vmatpush2.bf16.msra.mxu0 0
    %289 = vmatprep.subr.bf16.mxu0 0
    %290 = vmatpush2.bf16.msra.mxu0 0
    %291 = vmatprep.subr.bf16.mxu0 0
    %292 = vmatpush2.bf16.msra.mxu0 0
    %293 = vmatprep.subr.bf16.mxu0 0
    %294 = vmatpush2.bf16.msra.mxu0 0
    %295 = vmatprep.subr.bf16.mxu0 0
    %296 = vmatpush2.bf16.msra.mxu0 0
    %297 = vmatprep.subr.bf16.mxu0 0
    %298 = vmatpush2.bf16.msra.mxu0 0
    %299 = vmatprep.subr.bf16.mxu0 0
    %300 = vmatpush2.bf16.msra.mxu0 0
    %301 = vmatprep.mubr.bf16.mxu0 0
    %302 = vmatmul.mubr.bf16.gmra.mxu0 %v264
    %v303 = vpop.f32.mrf.mxu0
    %v304 = vadd.f32 %v239, %v303
    %v305 = vpop.f32.mrf.mxu0
    %v306 = vpop.f32.mrf.mxu0
    %v307 = vadd.f32 %v242, %v306
    %v308 = vpop.f32.mrf.mxu0
    %309 = vmatprep.mubr.bf16.mxu0 0
    %310 = vmatmul.mubr.bf16.gmra.mxu0 %v267
    %v311 = vpop.f32.mrf.mxu0
    %v312 = vadd.f32 %v247, %v311
    %v313 = vpop.f32.mrf.mxu0
    %v314 = vpop.f32.mrf.mxu0
    %v315 = vadd.f32 %v250, %v314
    %v316 = vpop.f32.mrf.mxu0
    %317 = vdwg.mxu0
    %s318 = scalar_lea.vmem %s3, 32
    %v319 = vld [vmem:[%s318] sm:$0xf]
    %v320 = vld [vmem:[%s318 + $0x4] sm:$0xf]
    %v321 = vld [vmem:[%s318 + $0x8] sm:$0xf]
    %v322 = vld [vmem:[%s318 + $0xc] sm:$0xf]
    %v327 = vunpack.c.l.b16 %v319
    %v328 = vunpack.c.l.b16 %v320
    %v329 = vunpack.c.l.b16 %v321
    %v330 = vunpack.c.l.b16 %v322
    %v331 = vpack.c.b16 %v328, %v327
    %v332 = vpack.c.b16 %v330, %v329
    %v334 = vsel %vm197, %v331, 0
    %v337 = vsel %vm197, %v332, 0
    %339 = vmatprep.subr.bf16.mxu0 0
    %340 = vmatpush1.bf16.msra.mxu0 0
    %341 = vmatprep.subr.bf16.mxu0 0
    %342 = vmatpush1.bf16.msra.mxu0 0
    %343 = vmatprep.subr.bf16.mxu0 0
    %344 = vmatpush1.bf16.msra.mxu0 0
    %345 = vmatprep.subr.bf16.mxu0 0
    %346 = vmatpush1.bf16.msra.mxu0 0
    %347 = vmatprep.subr.bf16.mxu0 0
    %348 = vmatpush1.bf16.msra.mxu0 0
    %349 = vmatprep.subr.bf16.mxu0 0
    %350 = vmatpush1.bf16.msra.mxu0 0
    %351 = vmatprep.subr.bf16.mxu0 0
    %352 = vmatpush1.bf16.msra.mxu0 %v177
    %353 = vmatprep.subr.bf16.mxu0 0
    %354 = vmatpush1.bf16.msra.mxu0 %v175
    %355 = vmatprep.subr.bf16.mxu0 0
    %356 = vmatpush2.bf16.msra.mxu0 0
    %357 = vmatprep.subr.bf16.mxu0 0
    %358 = vmatpush2.bf16.msra.mxu0 0
    %359 = vmatprep.subr.bf16.mxu0 0
    %360 = vmatpush2.bf16.msra.mxu0 0
    %361 = vmatprep.subr.bf16.mxu0 0
    %362 = vmatpush2.bf16.msra.mxu0 0
    %363 = vmatprep.subr.bf16.mxu0 0
    %364 = vmatpush2.bf16.msra.mxu0 0
    %365 = vmatprep.subr.bf16.mxu0 0
    %366 = vmatpush2.bf16.msra.mxu0 0
    %367 = vmatprep.subr.bf16.mxu0 0
    %368 = vmatpush2.bf16.msra.mxu0 0
    %369 = vmatprep.subr.bf16.mxu0 0
    %370 = vmatpush2.bf16.msra.mxu0 0
    %371 = vmatprep.mubr.bf16.mxu0 0
    %372 = vmatmul.mubr.bf16.gmra.mxu0 %v334
    %v373 = vpop.f32.mrf.mxu0
    %v374 = vadd.f32 0.0, %v373
    %v375 = vpop.f32.mrf.mxu0
    %v376 = vpop.f32.mrf.mxu0
    %v377 = vadd.f32 0.0, %v376
    %v378 = vpop.f32.mrf.mxu0
    %379 = vmatprep.mubr.bf16.mxu0 0
    %380 = vmatmul.mubr.bf16.gmra.mxu0 %v337
    %v381 = vpop.f32.mrf.mxu0
    %v382 = vadd.f32 0.0, %v381
    %v383 = vpop.f32.mrf.mxu0
    %v384 = vpop.f32.mrf.mxu0
    %v385 = vadd.f32 0.0, %v384
    %v386 = vpop.f32.mrf.mxu0
    %387 = vdwg.mxu0
    %v388 = vadd.f32 %v304, %v374
    %v389 = vadd.f32 %v307, %v377
    %v390 = vadd.f32 %v312, %v382
    %v391 = vadd.f32 %v315, %v385
    %v392 = vld [vmem:[%s2] sm:$0xff]
    %v393 = vld [vmem:[%s2 + $0x8] sm:$0xff]
    %v394 = vld [vmem:[%s2 + $0x10] sm:$0xff]
    %v395 = vld [vmem:[%s2 + $0x18] sm:$0xff]
    %v396 = vadd.f32 %v388, %v392
    %v397 = vadd.f32 %v389, %v393
    %v398 = vadd.f32 %v390, %v394
    %v399 = vadd.f32 %v391, %v395
    %400 = vadd.xlane.f32.xlu0 %v396
    %v401 = vpop.xlane.xlu0 %400
    %402 = vadd.xlane.f32.xlu0 %v397
    %v403 = vpop.xlane.xlu0 %402
    %404 = vadd.xlane.f32.xlu0 %v398
    %v405 = vpop.xlane.xlu0 %404
    %406 = vadd.xlane.f32.xlu0 %v399
    %v407 = vpop.xlane.xlu0 %406
    %v408 = vmul.f32 %v396, %v396
    %v409 = vmul.f32 %v397, %v397
    %v410 = vmul.f32 %v398, %v398
    %v411 = vmul.f32 %v399, %v399
    %412 = vadd.xlane.f32.xlu0 %v408
    %v413 = vpop.xlane.xlu0 %412
    %414 = vadd.xlane.f32.xlu0 %v409
    %v415 = vpop.xlane.xlu0 %414
    %416 = vadd.xlane.f32.xlu0 %v410
    %v417 = vpop.xlane.xlu0 %416
    %418 = vadd.xlane.f32.xlu0 %v411
    %v419 = vpop.xlane.xlu0 %418
    %v420 = vmul.f32 %v401, 0.0078125
    %v421 = vmul.f32 %v403, 0.0078125
    %v422 = vmul.f32 %v405, 0.0078125
    %v423 = vmul.f32 %v407, 0.0078125
    %v424 = vmul.f32 %v413, 0.0078125
    %v425 = vmul.f32 %v415, 0.0078125
    %v426 = vmul.f32 %v417, 0.0078125
    %v427 = vmul.f32 %v419, 0.0078125
    %v428 = vmul.f32 %v420, %v420
    %v429 = vmul.f32 %v421, %v421
    %v430 = vmul.f32 %v422, %v422
    %v431 = vmul.f32 %v423, %v423
    %v432 = vsub.f32 %v424, %v428
    %v433 = vsub.f32 %v425, %v429
    %v434 = vsub.f32 %v426, %v430
    %v435 = vsub.f32 %v427, %v431
    %v436 = vsub.f32 %v396, %v420
    %v437 = vsub.f32 %v397, %v421
    %v438 = vsub.f32 %v398, %v422
    %v439 = vsub.f32 %v399, %v423
    %v440 = vadd.f32 %v432, 1e-05
    %v441 = vadd.f32 %v433, 1e-05
    %v442 = vadd.f32 %v434, 1e-05
    %v443 = vadd.f32 %v435, 1e-05
    %v444 = vrsqrt.pop %v440
    %v445 = vrsqrt.pop %v441
    %v446 = vrsqrt.pop %v442
    %v447 = vrsqrt.pop %v443
    %v448 = vmul.f32 %v436, %v444
    %v449 = vmul.f32 %v437, %v445
    %v450 = vmul.f32 %v438, %v446
    %v451 = vmul.f32 %v439, %v447
    %s452 = scalar_lea.vmem %s3, 48
    %v453 = vld [vmem:[%s452] sm:$0xf]
    %v454 = vld [vmem:[%s452 + $0x4] sm:$0xf]
    %v455 = vld [vmem:[%s452 + $0x8] sm:$0xf]
    %v456 = vld [vmem:[%s452 + $0xc] sm:$0xf]
    %v457 = vpack.c.bf16 %v449, %v448
    %v458 = vpack.c.bf16 %v451, %v450
    %v463 = vunpack.c.l.b16 %v453
    %v464 = vunpack.c.l.b16 %v454
    %v465 = vunpack.c.l.b16 %v455
    %v466 = vunpack.c.l.b16 %v456
    %v467 = vpack.c.b16 %v464, %v463
    %v468 = vpack.c.b16 %v466, %v465
    %v470 = vsel %vm197, %v467, 0
    %v473 = vsel %vm197, %v468, 0
    %475 = vmatprep.subr.bf16.mxu0 0
    %476 = vmatpush1.bf16.msra.mxu0 0
    %477 = vmatprep.subr.bf16.mxu0 0
    %478 = vmatpush1.bf16.msra.mxu0 0
    %479 = vmatprep.subr.bf16.mxu0 0
    %480 = vmatpush1.bf16.msra.mxu0 0
    %481 = vmatprep.subr.bf16.mxu0 0
    %482 = vmatpush1.bf16.msra.mxu0 0
    %483 = vmatprep.subr.bf16.mxu0 0
    %484 = vmatpush1.bf16.msra.mxu0 0
    %485 = vmatprep.subr.bf16.mxu0 0
    %486 = vmatpush1.bf16.msra.mxu0 0
    %487 = vmatprep.subr.bf16.mxu0 0
    %488 = vmatpush1.bf16.msra.mxu0 %v458
    %489 = vmatprep.subr.bf16.mxu0 0
    %490 = vmatpush1.bf16.msra.mxu0 %v457
    %491 = vmatprep.subr.bf16.mxu0 0
    %492 = vmatpush2.bf16.msra.mxu0 0
    %493 = vmatprep.subr.bf16.mxu0 0
    %494 = vmatpush2.bf16.msra.mxu0 0
    %495 = vmatprep.subr.bf16.mxu0 0
    %496 = vmatpush2.bf16.msra.mxu0 0
    %497 = vmatprep.subr.bf16.mxu0 0
    %498 = vmatpush2.bf16.msra.mxu0 0
    %499 = vmatprep.subr.bf16.mxu0 0
    %500 = vmatpush2.bf16.msra.mxu0 0
    %501 = vmatprep.subr.bf16.mxu0 0
    %502 = vmatpush2.bf16.msra.mxu0 0
    %503 = vmatprep.subr.bf16.mxu0 0
    %504 = vmatpush2.bf16.msra.mxu0 0
    %505 = vmatprep.subr.bf16.mxu0 0
    %506 = vmatpush2.bf16.msra.mxu0 0
    %507 = vmatprep.mubr.bf16.mxu0 0
    %508 = vmatmul.mubr.bf16.gmra.mxu0 %v470
    %v509 = vpop.f32.mrf.mxu0
    %v510 = vadd.f32 0.0, %v509
    %v511 = vpop.f32.mrf.mxu0
    %v512 = vpop.f32.mrf.mxu0
    %v513 = vadd.f32 0.0, %v512
    %v514 = vpop.f32.mrf.mxu0
    %515 = vmatprep.mubr.bf16.mxu0 0
    %516 = vmatmul.mubr.bf16.gmra.mxu0 %v473
    %v517 = vpop.f32.mrf.mxu0
    %v518 = vadd.f32 0.0, %v517
    %v519 = vpop.f32.mrf.mxu0
    %v520 = vpop.f32.mrf.mxu0
    %v521 = vadd.f32 0.0, %v520
    %v522 = vpop.f32.mrf.mxu0
    %523 = vdwg.mxu0
    %524 = vadd.xlane.f32.xlu0 %v510
    %v525 = vpop.xlane.xlu0 %524
    %526 = vadd.xlane.f32.xlu0 %v513
    %v527 = vpop.xlane.xlu0 %526
    %528 = vadd.xlane.f32.xlu0 %v518
    %v529 = vpop.xlane.xlu0 %528
    %530 = vadd.xlane.f32.xlu0 %v521
    %v531 = vpop.xlane.xlu0 %530
    %v532 = vmul.f32 %v510, %v510
    %v533 = vmul.f32 %v513, %v513
    %v534 = vmul.f32 %v518, %v518
    %v535 = vmul.f32 %v521, %v521
    %536 = vadd.xlane.f32.xlu0 %v532
    %v537 = vpop.xlane.xlu0 %536
    %538 = vadd.xlane.f32.xlu0 %v533
    %v539 = vpop.xlane.xlu0 %538
    %540 = vadd.xlane.f32.xlu0 %v534
    %v541 = vpop.xlane.xlu0 %540
    %542 = vadd.xlane.f32.xlu0 %v535
    %v543 = vpop.xlane.xlu0 %542
    %v544 = vmul.f32 %v525, 0.0078125
    %v545 = vmul.f32 %v527, 0.0078125
    %v546 = vmul.f32 %v529, 0.0078125
    %v547 = vmul.f32 %v531, 0.0078125
    %v548 = vmul.f32 %v537, 0.0078125
    %v549 = vmul.f32 %v539, 0.0078125
    %v550 = vmul.f32 %v541, 0.0078125
    %v551 = vmul.f32 %v543, 0.0078125
    %v552 = vmul.f32 %v544, %v544
    %v553 = vmul.f32 %v545, %v545
    %v554 = vmul.f32 %v546, %v546
    %v555 = vmul.f32 %v547, %v547
    %v556 = vsub.f32 %v548, %v552
    %v557 = vsub.f32 %v549, %v553
    %v558 = vsub.f32 %v550, %v554
    %v559 = vsub.f32 %v551, %v555
    %v560 = vsub.f32 %v510, %v544
    %v561 = vsub.f32 %v513, %v545
    %v562 = vsub.f32 %v518, %v546
    %v563 = vsub.f32 %v521, %v547
    %v564 = vadd.f32 %v556, 1e-05
    %v565 = vadd.f32 %v557, 1e-05
    %v566 = vadd.f32 %v558, 1e-05
    %v567 = vadd.f32 %v559, 1e-05
    %v568 = vrsqrt.pop %v564
    %v569 = vrsqrt.pop %v565
    %v570 = vrsqrt.pop %v566
    %v571 = vrsqrt.pop %v567
    %v572 = vmul.f32 %v560, %v568
    %v573 = vmul.f32 %v561, %v569
    %v574 = vmul.f32 %v562, %v570
    %v575 = vmul.f32 %v563, %v571
    %v576 = vmax.f32 %v572, 0.0
    %v577 = vmax.f32 %v573, 0.0
    %v578 = vmax.f32 %v574, 0.0
    %v579 = vmax.f32 %v575, 0.0
    %s580 = scalar_lea.vmem %s3, 64
    %v581 = vld [vmem:[%s580] sm:$0xf]
    %v582 = vld [vmem:[%s580 + $0x4] sm:$0xf]
    %v583 = vld [vmem:[%s580 + $0x8] sm:$0xf]
    %v584 = vld [vmem:[%s580 + $0xc] sm:$0xf]
    %v585 = vpack.c.bf16 %v577, %v576
    %v586 = vpack.c.bf16 %v579, %v578
    %v591 = vunpack.c.l.b16 %v581
    %v592 = vunpack.c.l.b16 %v582
    %v593 = vunpack.c.l.b16 %v583
    %v594 = vunpack.c.l.b16 %v584
    %v595 = vpack.c.b16 %v592, %v591
    %v596 = vpack.c.b16 %v594, %v593
    %v598 = vsel %vm197, %v595, 0
    %v601 = vsel %vm197, %v596, 0
    %603 = vmatprep.subr.bf16.mxu0 0
    %604 = vmatpush1.bf16.msra.mxu0 0
    %605 = vmatprep.subr.bf16.mxu0 0
    %606 = vmatpush1.bf16.msra.mxu0 0
    %607 = vmatprep.subr.bf16.mxu0 0
    %608 = vmatpush1.bf16.msra.mxu0 0
    %609 = vmatprep.subr.bf16.mxu0 0
    %610 = vmatpush1.bf16.msra.mxu0 0
    %611 = vmatprep.subr.bf16.mxu0 0
    %612 = vmatpush1.bf16.msra.mxu0 0
    %613 = vmatprep.subr.bf16.mxu0 0
    %614 = vmatpush1.bf16.msra.mxu0 0
    %615 = vmatprep.subr.bf16.mxu0 0
    %616 = vmatpush1.bf16.msra.mxu0 %v586
    %617 = vmatprep.subr.bf16.mxu0 0
    %618 = vmatpush1.bf16.msra.mxu0 %v585
    %619 = vmatprep.subr.bf16.mxu0 0
    %620 = vmatpush2.bf16.msra.mxu0 0
    %621 = vmatprep.subr.bf16.mxu0 0
    %622 = vmatpush2.bf16.msra.mxu0 0
    %623 = vmatprep.subr.bf16.mxu0 0
    %624 = vmatpush2.bf16.msra.mxu0 0
    %625 = vmatprep.subr.bf16.mxu0 0
    %626 = vmatpush2.bf16.msra.mxu0 0
    %627 = vmatprep.subr.bf16.mxu0 0
    %628 = vmatpush2.bf16.msra.mxu0 0
    %629 = vmatprep.subr.bf16.mxu0 0
    %630 = vmatpush2.bf16.msra.mxu0 0
    %631 = vmatprep.subr.bf16.mxu0 0
    %632 = vmatpush2.bf16.msra.mxu0 0
    %633 = vmatprep.subr.bf16.mxu0 0
    %634 = vmatpush2.bf16.msra.mxu0 0
    %635 = vmatprep.mubr.bf16.mxu0 0
    %636 = vmatmul.mubr.bf16.gmra.mxu0 %v598
    %v637 = vpop.f32.mrf.mxu0
    %v638 = vadd.f32 0.0, %v637
    %v639 = vpop.f32.mrf.mxu0
    %v640 = vpop.f32.mrf.mxu0
    %v641 = vadd.f32 0.0, %v640
    %v642 = vpop.f32.mrf.mxu0
    %643 = vmatprep.mubr.bf16.mxu0 0
    %644 = vmatmul.mubr.bf16.gmra.mxu0 %v601
    %v645 = vpop.f32.mrf.mxu0
    %v646 = vadd.f32 0.0, %v645
    %v647 = vpop.f32.mrf.mxu0
    %v648 = vpop.f32.mrf.mxu0
    %v649 = vadd.f32 0.0, %v648
    %v650 = vpop.f32.mrf.mxu0
    %651 = vdwg.mxu0
    %652 = vadd.xlane.f32.xlu0 %v638
    %v653 = vpop.xlane.xlu0 %652
    %654 = vadd.xlane.f32.xlu0 %v641
    %v655 = vpop.xlane.xlu0 %654
    %656 = vadd.xlane.f32.xlu0 %v646
    %v657 = vpop.xlane.xlu0 %656
    %658 = vadd.xlane.f32.xlu0 %v649
    %v659 = vpop.xlane.xlu0 %658
    %v660 = vmul.f32 %v638, %v638
    %v661 = vmul.f32 %v641, %v641
    %v662 = vmul.f32 %v646, %v646
    %v663 = vmul.f32 %v649, %v649
    %664 = vadd.xlane.f32.xlu0 %v660
    %v665 = vpop.xlane.xlu0 %664
    %666 = vadd.xlane.f32.xlu0 %v661
    %v667 = vpop.xlane.xlu0 %666
    %668 = vadd.xlane.f32.xlu0 %v662
    %v669 = vpop.xlane.xlu0 %668
    %670 = vadd.xlane.f32.xlu0 %v663
    %v671 = vpop.xlane.xlu0 %670
    %v672 = vmul.f32 %v653, 0.0078125
    %v673 = vmul.f32 %v655, 0.0078125
    %v674 = vmul.f32 %v657, 0.0078125
    %v675 = vmul.f32 %v659, 0.0078125
    %v676 = vmul.f32 %v665, 0.0078125
    %v677 = vmul.f32 %v667, 0.0078125
    %v678 = vmul.f32 %v669, 0.0078125
    %v679 = vmul.f32 %v671, 0.0078125
    %v680 = vmul.f32 %v672, %v672
    %v681 = vmul.f32 %v673, %v673
    %v682 = vmul.f32 %v674, %v674
    %v683 = vmul.f32 %v675, %v675
    %v684 = vsub.f32 %v676, %v680
    %v685 = vsub.f32 %v677, %v681
    %v686 = vsub.f32 %v678, %v682
    %v687 = vsub.f32 %v679, %v683
    %v688 = vsub.f32 %v638, %v672
    %v689 = vsub.f32 %v641, %v673
    %v690 = vsub.f32 %v646, %v674
    %v691 = vsub.f32 %v649, %v675
    %v692 = vadd.f32 %v684, 1e-05
    %v693 = vadd.f32 %v685, 1e-05
    %v694 = vadd.f32 %v686, 1e-05
    %v695 = vadd.f32 %v687, 1e-05
    %v696 = vrsqrt.pop %v692
    %v697 = vrsqrt.pop %v693
    %v698 = vrsqrt.pop %v694
    %v699 = vrsqrt.pop %v695
    %v700 = vmul.f32 %v688, %v696
    %v701 = vmul.f32 %v689, %v697
    %v702 = vmul.f32 %v690, %v698
    %v703 = vmul.f32 %v691, %v699
    %v704 = vmax.f32 %v700, 0.0
    %v705 = vmax.f32 %v701, 0.0
    %v706 = vmax.f32 %v702, 0.0
    %v707 = vmax.f32 %v703, 0.0
    %v708 = vadd.f32 %v448, %v704
    %v709 = vadd.f32 %v449, %v705
    %v710 = vadd.f32 %v450, %v706
    %v711 = vadd.f32 %v451, %v707
    %v712 = vpack.c.bf16 %v709, %v708
    %v713 = vpack.c.bf16 %v711, %v710
    %714 = vmatprep.subr.bf16.mxu0 %v104
    %715 = vmatpush1.bf16.msra.mxu0 %v103
    %716 = vmatprep.subr.bf16.mxu0 %v102
    %717 = vmatpush1.bf16.msra.mxu0 %v101
    %718 = vmatprep.subr.bf16.mxu0 %v100
    %719 = vmatpush1.bf16.msra.mxu0 %v99
    %720 = vmatprep.subr.bf16.mxu0 %v98
    %721 = vmatpush1.bf16.msra.mxu0 %v97
    %722 = vmatprep.subr.bf16.mxu0 %v96
    %723 = vmatpush1.bf16.msra.mxu0 %v95
    %724 = vmatprep.subr.bf16.mxu0 %v94
    %725 = vmatpush1.bf16.msra.mxu0 %v93
    %726 = vmatprep.subr.bf16.mxu0 %v92
    %727 = vmatpush1.bf16.msra.mxu0 %v91
    %728 = vmatprep.subr.bf16.mxu0 %v90
    %729 = vmatpush1.bf16.msra.mxu0 %v89
    %730 = vmatprep.subr.bf16.mxu0 0
    %731 = vmatpush2.bf16.msra.mxu0 0
    %732 = vmatprep.subr.bf16.mxu0 0
    %733 = vmatpush2.bf16.msra.mxu0 0
    %734 = vmatprep.subr.bf16.mxu0 0
    %735 = vmatpush2.bf16.msra.mxu0 0
    %736 = vmatprep.subr.bf16.mxu0 0
    %737 = vmatpush2.bf16.msra.mxu0 0
    %738 = vmatprep.subr.bf16.mxu0 0
    %739 = vmatpush2.bf16.msra.mxu0 0
    %740 = vmatprep.subr.bf16.mxu0 0
    %741 = vmatpush2.bf16.msra.mxu0 0
    %742 = vmatprep.subr.bf16.mxu0 0
    %743 = vmatpush2.bf16.msra.mxu0 0
    %744 = vmatprep.subr.bf16.mxu0 0
    %745 = vmatpush2.bf16.msra.mxu0 0
    %746 = vmatprep.mubr.bf16.mxu0 0
    %747 = vmatmul.mubr.bf16.gmra.mxu0 %v712
    %v748 = vpop.f32.mrf.mxu0
    %v749 = vadd.f32 0.0, %v748
    %v750 = vpop.f32.mrf.mxu0
    %v751 = vadd.f32 0.0, %v750
    %v752 = vpop.f32.mrf.mxu0
    %v753 = vadd.f32 0.0, %v752
    %v754 = vpop.f32.mrf.mxu0
    %v755 = vadd.f32 0.0, %v754
    %756 = vmatprep.mubr.bf16.mxu0 0
    %757 = vmatmul.mubr.bf16.gmra.mxu0 %v713
    %v758 = vpop.f32.mrf.mxu0
    %v759 = vadd.f32 0.0, %v758
    %v760 = vpop.f32.mrf.mxu0
    %v761 = vadd.f32 0.0, %v760
    %v762 = vpop.f32.mrf.mxu0
    %v763 = vadd.f32 0.0, %v762
    %v764 = vpop.f32.mrf.mxu0
    %v765 = vadd.f32 0.0, %v764
    %766 = vdwg.mxu0
    %v767 = vpack.c.bf16 %v753, %v749
    %v768 = vpack.c.bf16 %v755, %v751
    %v769 = vpack.c.bf16 %v763, %v759
    %v770 = vpack.c.bf16 %v765, %v761
    %s771 = scalar_lea.vmem %s3, 80
    %v772 = vld [vmem:[%s771] sm:$0xf]
    %v773 = vld [vmem:[%s771 + $0x4] sm:$0xf]
    %v774 = vld [vmem:[%s771 + $0x8] sm:$0xf]
    %v775 = vld [vmem:[%s771 + $0xc] sm:$0xf]
    %s776 = scalar_lea.vmem %s3, 96
    %v777 = vld [vmem:[%s776] sm:$0xf]
    %v778 = vld [vmem:[%s776 + $0x4] sm:$0xf]
    %v779 = vld [vmem:[%s776 + $0x8] sm:$0xf]
    %v780 = vld [vmem:[%s776 + $0xc] sm:$0xf]
    %v785 = vunpack.c.l.b16 %v777
    %v786 = vunpack.c.l.b16 %v778
    %v787 = vunpack.c.l.b16 %v779
    %v788 = vunpack.c.l.b16 %v780
    %v789 = vpack.c.b16 %v786, %v785
    %v790 = vpack.c.b16 %v788, %v787
    %v792 = vsel %vm197, %v789, 0
    %v795 = vsel %vm197, %v790, 0
    %797 = vmatprep.subr.bf16.mxu0 0
    %798 = vmatpush1.bf16.msra.mxu0 0
    %799 = vmatprep.subr.bf16.mxu0 0
    %800 = vmatpush1.bf16.msra.mxu0 0
    %801 = vmatprep.subr.bf16.mxu0 0
    %802 = vmatpush1.bf16.msra.mxu0 0
    %803 = vmatprep.subr.bf16.mxu0 0
    %804 = vmatpush1.bf16.msra.mxu0 0
    %805 = vmatprep.subr.bf16.mxu0 0
    %806 = vmatpush1.bf16.msra.mxu0 0
    %807 = vmatprep.subr.bf16.mxu0 0
    %808 = vmatpush1.bf16.msra.mxu0 0
    %809 = vmatprep.subr.bf16.mxu0 0
    %810 = vmatpush1.bf16.msra.mxu0 %v769
    %811 = vmatprep.subr.bf16.mxu0 0
    %812 = vmatpush1.bf16.msra.mxu0 %v767
    %813 = vmatprep.subr.bf16.mxu0 0
    %814 = vmatpush2.bf16.msra.mxu0 0
    %815 = vmatprep.subr.bf16.mxu0 0
    %816 = vmatpush2.bf16.msra.mxu0 0
    %817 = vmatprep.subr.bf16.mxu0 0
    %818 = vmatpush2.bf16.msra.mxu0 0
    %819 = vmatprep.subr.bf16.mxu0 0
    %820 = vmatpush2.bf16.msra.mxu0 0
    %821 = vmatprep.subr.bf16.mxu0 0
    %822 = vmatpush2.bf16.msra.mxu0 0
    %823 = vmatprep.subr.bf16.mxu0 0
    %824 = vmatpush2.bf16.msra.mxu0 0
    %825 = vmatprep.subr.bf16.mxu0 0
    %826 = vmatpush2.bf16.msra.mxu0 0
    %827 = vmatprep.subr.bf16.mxu0 0
    %828 = vmatpush2.bf16.msra.mxu0 0
    %829 = vmatprep.mubr.bf16.mxu0 0
    %830 = vmatmul.mubr.bf16.gmra.mxu0 %v792
    %v831 = vpop.f32.mrf.mxu0
    %v832 = vadd.f32 0.0, %v831
    %v833 = vpop.f32.mrf.mxu0
    %v834 = vpop.f32.mrf.mxu0
    %v835 = vadd.f32 0.0, %v834
    %v836 = vpop.f32.mrf.mxu0
    %837 = vmatprep.mubr.bf16.mxu0 0
    %838 = vmatmul.mubr.bf16.gmra.mxu0 %v795
    %v839 = vpop.f32.mrf.mxu0
    %v840 = vadd.f32 0.0, %v839
    %v841 = vpop.f32.mrf.mxu0
    %v842 = vpop.f32.mrf.mxu0
    %v843 = vadd.f32 0.0, %v842
    %v844 = vpop.f32.mrf.mxu0
    %845 = vdwg.mxu0
    %v850 = vunpack.c.l.b16 %v772
    %v851 = vunpack.c.l.b16 %v773
    %v852 = vunpack.c.l.b16 %v774
    %v853 = vunpack.c.l.b16 %v775
    %v854 = vpack.c.b16 %v851, %v850
    %v855 = vpack.c.b16 %v853, %v852
    %v857 = vsel %vm197, %v854, 0
    %v860 = vsel %vm197, %v855, 0
    %862 = vmatprep.subr.bf16.mxu0 0
    %863 = vmatpush1.bf16.msra.mxu0 0
    %864 = vmatprep.subr.bf16.mxu0 0
    %865 = vmatpush1.bf16.msra.mxu0 0
    %866 = vmatprep.subr.bf16.mxu0 0
    %867 = vmatpush1.bf16.msra.mxu0 0
    %868 = vmatprep.subr.bf16.mxu0 0
    %869 = vmatpush1.bf16.msra.mxu0 0
    %870 = vmatprep.subr.bf16.mxu0 0
    %871 = vmatpush1.bf16.msra.mxu0 0
    %872 = vmatprep.subr.bf16.mxu0 0
    %873 = vmatpush1.bf16.msra.mxu0 0
    %874 = vmatprep.subr.bf16.mxu0 0
    %875 = vmatpush1.bf16.msra.mxu0 %v713
    %876 = vmatprep.subr.bf16.mxu0 0
    %877 = vmatpush1.bf16.msra.mxu0 %v712
    %878 = vmatprep.subr.bf16.mxu0 0
    %879 = vmatpush2.bf16.msra.mxu0 0
    %880 = vmatprep.subr.bf16.mxu0 0
    %881 = vmatpush2.bf16.msra.mxu0 0
    %882 = vmatprep.subr.bf16.mxu0 0
    %883 = vmatpush2.bf16.msra.mxu0 0
    %884 = vmatprep.subr.bf16.mxu0 0
    %885 = vmatpush2.bf16.msra.mxu0 0
    %886 = vmatprep.subr.bf16.mxu0 0
    %887 = vmatpush2.bf16.msra.mxu0 0
    %888 = vmatprep.subr.bf16.mxu0 0
    %889 = vmatpush2.bf16.msra.mxu0 0
    %890 = vmatprep.subr.bf16.mxu0 0
    %891 = vmatpush2.bf16.msra.mxu0 0
    %892 = vmatprep.subr.bf16.mxu0 0
    %893 = vmatpush2.bf16.msra.mxu0 0
    %894 = vmatprep.mubr.bf16.mxu0 0
    %895 = vmatmul.mubr.bf16.gmra.mxu0 %v857
    %v896 = vpop.f32.mrf.mxu0
    %v897 = vadd.f32 %v832, %v896
    %v898 = vpop.f32.mrf.mxu0
    %v899 = vpop.f32.mrf.mxu0
    %v900 = vadd.f32 %v835, %v899
    %v901 = vpop.f32.mrf.mxu0
    %902 = vmatprep.mubr.bf16.mxu0 0
    %903 = vmatmul.mubr.bf16.gmra.mxu0 %v860
    %v904 = vpop.f32.mrf.mxu0
    %v905 = vadd.f32 %v840, %v904
    %v906 = vpop.f32.mrf.mxu0
    %v907 = vpop.f32.mrf.mxu0
    %v908 = vadd.f32 %v843, %v907
    %v909 = vpop.f32.mrf.mxu0
    %910 = vdwg.mxu0
    %s911 = scalar_lea.vmem %s3, 112
    %v912 = vld [vmem:[%s911] sm:$0xf]
    %v913 = vld [vmem:[%s911 + $0x4] sm:$0xf]
    %v914 = vld [vmem:[%s911 + $0x8] sm:$0xf]
    %v915 = vld [vmem:[%s911 + $0xc] sm:$0xf]
    %v920 = vunpack.c.l.b16 %v912
    %v921 = vunpack.c.l.b16 %v913
    %v922 = vunpack.c.l.b16 %v914
    %v923 = vunpack.c.l.b16 %v915
    %v924 = vpack.c.b16 %v921, %v920
    %v925 = vpack.c.b16 %v923, %v922
    %v927 = vsel %vm197, %v924, 0
    %v930 = vsel %vm197, %v925, 0
    %932 = vmatprep.subr.bf16.mxu0 0
    %933 = vmatpush1.bf16.msra.mxu0 0
    %934 = vmatprep.subr.bf16.mxu0 0
    %935 = vmatpush1.bf16.msra.mxu0 0
    %936 = vmatprep.subr.bf16.mxu0 0
    %937 = vmatpush1.bf16.msra.mxu0 0
    %938 = vmatprep.subr.bf16.mxu0 0
    %939 = vmatpush1.bf16.msra.mxu0 0
    %940 = vmatprep.subr.bf16.mxu0 0
    %941 = vmatpush1.bf16.msra.mxu0 0
    %942 = vmatprep.subr.bf16.mxu0 0
    %943 = vmatpush1.bf16.msra.mxu0 0
    %944 = vmatprep.subr.bf16.mxu0 0
    %945 = vmatpush1.bf16.msra.mxu0 %v770
    %946 = vmatprep.subr.bf16.mxu0 0
    %947 = vmatpush1.bf16.msra.mxu0 %v768
    %948 = vmatprep.subr.bf16.mxu0 0
    %949 = vmatpush2.bf16.msra.mxu0 0
    %950 = vmatprep.subr.bf16.mxu0 0
    %951 = vmatpush2.bf16.msra.mxu0 0
    %952 = vmatprep.subr.bf16.mxu0 0
    %953 = vmatpush2.bf16.msra.mxu0 0
    %954 = vmatprep.subr.bf16.mxu0 0
    %955 = vmatpush2.bf16.msra.mxu0 0
    %956 = vmatprep.subr.bf16.mxu0 0
    %957 = vmatpush2.bf16.msra.mxu0 0
    %958 = vmatprep.subr.bf16.mxu0 0
    %959 = vmatpush2.bf16.msra.mxu0 0
    %960 = vmatprep.subr.bf16.mxu0 0
    %961 = vmatpush2.bf16.msra.mxu0 0
    %962 = vmatprep.subr.bf16.mxu0 0
    %963 = vmatpush2.bf16.msra.mxu0 0
    %964 = vmatprep.mubr.bf16.mxu0 0
    %965 = vmatmul.mubr.bf16.gmra.mxu0 %v927
    %v966 = vpop.f32.mrf.mxu0
    %v967 = vadd.f32 0.0, %v966
    %v968 = vpop.f32.mrf.mxu0
    %v969 = vpop.f32.mrf.mxu0
    %v970 = vadd.f32 0.0, %v969
    %v971 = vpop.f32.mrf.mxu0
    %972 = vmatprep.mubr.bf16.mxu0 0
    %973 = vmatmul.mubr.bf16.gmra.mxu0 %v930
    %v974 = vpop.f32.mrf.mxu0
    %v975 = vadd.f32 0.0, %v974
    %v976 = vpop.f32.mrf.mxu0
    %v977 = vpop.f32.mrf.mxu0
    %v978 = vadd.f32 0.0, %v977
    %v979 = vpop.f32.mrf.mxu0
    %980 = vdwg.mxu0
    %v981 = vadd.f32 %v897, %v967
    %v982 = vadd.f32 %v900, %v970
    %v983 = vadd.f32 %v905, %v975
    %v984 = vadd.f32 %v908, %v978
    %s985 = scalar_lea.vmem %s2, 32
    %v986 = vld [vmem:[%s985] sm:$0xff]
    %v987 = vld [vmem:[%s985 + $0x8] sm:$0xff]
    %v988 = vld [vmem:[%s985 + $0x10] sm:$0xff]
    %v989 = vld [vmem:[%s985 + $0x18] sm:$0xff]
    %v990 = vadd.f32 %v981, %v986
    %v991 = vadd.f32 %v982, %v987
    %v992 = vadd.f32 %v983, %v988
    %v993 = vadd.f32 %v984, %v989
    %994 = vadd.xlane.f32.xlu0 %v990
    %v995 = vpop.xlane.xlu0 %994
    %996 = vadd.xlane.f32.xlu0 %v991
    %v997 = vpop.xlane.xlu0 %996
    %998 = vadd.xlane.f32.xlu0 %v992
    %v999 = vpop.xlane.xlu0 %998
    %1000 = vadd.xlane.f32.xlu0 %v993
    %v1001 = vpop.xlane.xlu0 %1000
    %v1002 = vmul.f32 %v990, %v990
    %v1003 = vmul.f32 %v991, %v991
    %v1004 = vmul.f32 %v992, %v992
    %v1005 = vmul.f32 %v993, %v993
    %1006 = vadd.xlane.f32.xlu0 %v1002
    %v1007 = vpop.xlane.xlu0 %1006
    %1008 = vadd.xlane.f32.xlu0 %v1003
    %v1009 = vpop.xlane.xlu0 %1008
    %1010 = vadd.xlane.f32.xlu0 %v1004
    %v1011 = vpop.xlane.xlu0 %1010
    %1012 = vadd.xlane.f32.xlu0 %v1005
    %v1013 = vpop.xlane.xlu0 %1012
    %v1014 = vmul.f32 %v995, 0.0078125
    %v1015 = vmul.f32 %v997, 0.0078125
    %v1016 = vmul.f32 %v999, 0.0078125
    %v1017 = vmul.f32 %v1001, 0.0078125
    %v1018 = vmul.f32 %v1007, 0.0078125
    %v1019 = vmul.f32 %v1009, 0.0078125
    %v1020 = vmul.f32 %v1011, 0.0078125
    %v1021 = vmul.f32 %v1013, 0.0078125
    %v1022 = vmul.f32 %v1014, %v1014
    %v1023 = vmul.f32 %v1015, %v1015
    %v1024 = vmul.f32 %v1016, %v1016
    %v1025 = vmul.f32 %v1017, %v1017
    %v1026 = vsub.f32 %v1018, %v1022
    %v1027 = vsub.f32 %v1019, %v1023
    %v1028 = vsub.f32 %v1020, %v1024
    %v1029 = vsub.f32 %v1021, %v1025
    %v1030 = vsub.f32 %v990, %v1014
    %v1031 = vsub.f32 %v991, %v1015
    %v1032 = vsub.f32 %v992, %v1016
    %v1033 = vsub.f32 %v993, %v1017
    %v1034 = vadd.f32 %v1026, 1e-05
    %v1035 = vadd.f32 %v1027, 1e-05
    %v1036 = vadd.f32 %v1028, 1e-05
    %v1037 = vadd.f32 %v1029, 1e-05
    %v1038 = vrsqrt.pop %v1034
    %v1039 = vrsqrt.pop %v1035
    %v1040 = vrsqrt.pop %v1036
    %v1041 = vrsqrt.pop %v1037
    %v1042 = vmul.f32 %v1030, %v1038
    %v1043 = vmul.f32 %v1031, %v1039
    %v1044 = vmul.f32 %v1032, %v1040
    %v1045 = vmul.f32 %v1033, %v1041
    %s1046 = scalar_lea.vmem %s3, 128
    %v1047 = vld [vmem:[%s1046] sm:$0xf]
    %v1048 = vld [vmem:[%s1046 + $0x4] sm:$0xf]
    %v1049 = vld [vmem:[%s1046 + $0x8] sm:$0xf]
    %v1050 = vld [vmem:[%s1046 + $0xc] sm:$0xf]
    %v1051 = vpack.c.bf16 %v1043, %v1042
    %v1052 = vpack.c.bf16 %v1045, %v1044
    %v1057 = vunpack.c.l.b16 %v1047
    %v1058 = vunpack.c.l.b16 %v1048
    %v1059 = vunpack.c.l.b16 %v1049
    %v1060 = vunpack.c.l.b16 %v1050
    %v1061 = vpack.c.b16 %v1058, %v1057
    %v1062 = vpack.c.b16 %v1060, %v1059
    %v1064 = vsel %vm197, %v1061, 0
    %v1067 = vsel %vm197, %v1062, 0
    %1069 = vmatprep.subr.bf16.mxu0 0
    %1070 = vmatpush1.bf16.msra.mxu0 0
    %1071 = vmatprep.subr.bf16.mxu0 0
    %1072 = vmatpush1.bf16.msra.mxu0 0
    %1073 = vmatprep.subr.bf16.mxu0 0
    %1074 = vmatpush1.bf16.msra.mxu0 0
    %1075 = vmatprep.subr.bf16.mxu0 0
    %1076 = vmatpush1.bf16.msra.mxu0 0
    %1077 = vmatprep.subr.bf16.mxu0 0
    %1078 = vmatpush1.bf16.msra.mxu0 0
    %1079 = vmatprep.subr.bf16.mxu0 0
    %1080 = vmatpush1.bf16.msra.mxu0 0
    %1081 = vmatprep.subr.bf16.mxu0 0
    %1082 = vmatpush1.bf16.msra.mxu0 %v1052
    %1083 = vmatprep.subr.bf16.mxu0 0
    %1084 = vmatpush1.bf16.msra.mxu0 %v1051
    %1085 = vmatprep.subr.bf16.mxu0 0
    %1086 = vmatpush2.bf16.msra.mxu0 0
    %1087 = vmatprep.subr.bf16.mxu0 0
    %1088 = vmatpush2.bf16.msra.mxu0 0
    %1089 = vmatprep.subr.bf16.mxu0 0
    %1090 = vmatpush2.bf16.msra.mxu0 0
    %1091 = vmatprep.subr.bf16.mxu0 0
    %1092 = vmatpush2.bf16.msra.mxu0 0
    %1093 = vmatprep.subr.bf16.mxu0 0
    %1094 = vmatpush2.bf16.msra.mxu0 0
    %1095 = vmatprep.subr.bf16.mxu0 0
    %1096 = vmatpush2.bf16.msra.mxu0 0
    %1097 = vmatprep.subr.bf16.mxu0 0
    %1098 = vmatpush2.bf16.msra.mxu0 0
    %1099 = vmatprep.subr.bf16.mxu0 0
    %1100 = vmatpush2.bf16.msra.mxu0 0
    %1101 = vmatprep.mubr.bf16.mxu0 0
    %1102 = vmatmul.mubr.bf16.gmra.mxu0 %v1064
    %v1103 = vpop.f32.mrf.mxu0
    %v1104 = vadd.f32 0.0, %v1103
    %v1105 = vpop.f32.mrf.mxu0
    %v1106 = vpop.f32.mrf.mxu0
    %v1107 = vadd.f32 0.0, %v1106
    %v1108 = vpop.f32.mrf.mxu0
    %1109 = vmatprep.mubr.bf16.mxu0 0
    %1110 = vmatmul.mubr.bf16.gmra.mxu0 %v1067
    %v1111 = vpop.f32.mrf.mxu0
    %v1112 = vadd.f32 0.0, %v1111
    %v1113 = vpop.f32.mrf.mxu0
    %v1114 = vpop.f32.mrf.mxu0
    %v1115 = vadd.f32 0.0, %v1114
    %v1116 = vpop.f32.mrf.mxu0
    %1117 = vdwg.mxu0
    %1118 = vadd.xlane.f32.xlu0 %v1104
    %v1119 = vpop.xlane.xlu0 %1118
    %1120 = vadd.xlane.f32.xlu0 %v1107
    %v1121 = vpop.xlane.xlu0 %1120
    %1122 = vadd.xlane.f32.xlu0 %v1112
    %v1123 = vpop.xlane.xlu0 %1122
    %1124 = vadd.xlane.f32.xlu0 %v1115
    %v1125 = vpop.xlane.xlu0 %1124
    %v1126 = vmul.f32 %v1104, %v1104
    %v1127 = vmul.f32 %v1107, %v1107
    %v1128 = vmul.f32 %v1112, %v1112
    %v1129 = vmul.f32 %v1115, %v1115
    %1130 = vadd.xlane.f32.xlu0 %v1126
    %v1131 = vpop.xlane.xlu0 %1130
    %1132 = vadd.xlane.f32.xlu0 %v1127
    %v1133 = vpop.xlane.xlu0 %1132
    %1134 = vadd.xlane.f32.xlu0 %v1128
    %v1135 = vpop.xlane.xlu0 %1134
    %1136 = vadd.xlane.f32.xlu0 %v1129
    %v1137 = vpop.xlane.xlu0 %1136
    %v1138 = vmul.f32 %v1119, 0.0078125
    %v1139 = vmul.f32 %v1121, 0.0078125
    %v1140 = vmul.f32 %v1123, 0.0078125
    %v1141 = vmul.f32 %v1125, 0.0078125
    %v1142 = vmul.f32 %v1131, 0.0078125
    %v1143 = vmul.f32 %v1133, 0.0078125
    %v1144 = vmul.f32 %v1135, 0.0078125
    %v1145 = vmul.f32 %v1137, 0.0078125
    %v1146 = vmul.f32 %v1138, %v1138
    %v1147 = vmul.f32 %v1139, %v1139
    %v1148 = vmul.f32 %v1140, %v1140
    %v1149 = vmul.f32 %v1141, %v1141
    %v1150 = vsub.f32 %v1142, %v1146
    %v1151 = vsub.f32 %v1143, %v1147
    %v1152 = vsub.f32 %v1144, %v1148
    %v1153 = vsub.f32 %v1145, %v1149
    %v1154 = vsub.f32 %v1104, %v1138
    %v1155 = vsub.f32 %v1107, %v1139
    %v1156 = vsub.f32 %v1112, %v1140
    %v1157 = vsub.f32 %v1115, %v1141
    %v1158 = vadd.f32 %v1150, 1e-05
    %v1159 = vadd.f32 %v1151, 1e-05
    %v1160 = vadd.f32 %v1152, 1e-05
    %v1161 = vadd.f32 %v1153, 1e-05
    %v1162 = vrsqrt.pop %v1158
    %v1163 = vrsqrt.pop %v1159
    %v1164 = vrsqrt.pop %v1160
    %v1165 = vrsqrt.pop %v1161
    %v1166 = vmul.f32 %v1154, %v1162
    %v1167 = vmul.f32 %v1155, %v1163
    %v1168 = vmul.f32 %v1156, %v1164
    %v1169 = vmul.f32 %v1157, %v1165
    %v1170 = vmax.f32 %v1166, 0.0
    %v1171 = vmax.f32 %v1167, 0.0
    %v1172 = vmax.f32 %v1168, 0.0
    %v1173 = vmax.f32 %v1169, 0.0
    %s1174 = scalar_lea.vmem %s3, 144
    %v1175 = vld [vmem:[%s1174] sm:$0xf]
    %v1176 = vld [vmem:[%s1174 + $0x4] sm:$0xf]
    %v1177 = vld [vmem:[%s1174 + $0x8] sm:$0xf]
    %v1178 = vld [vmem:[%s1174 + $0xc] sm:$0xf]
    %v1179 = vpack.c.bf16 %v1171, %v1170
    %v1180 = vpack.c.bf16 %v1173, %v1172
    %v1185 = vunpack.c.l.b16 %v1175
    %v1186 = vunpack.c.l.b16 %v1176
    %v1187 = vunpack.c.l.b16 %v1177
    %v1188 = vunpack.c.l.b16 %v1178
    %v1189 = vpack.c.b16 %v1186, %v1185
    %v1190 = vpack.c.b16 %v1188, %v1187
    %v1192 = vsel %vm197, %v1189, 0
    %v1195 = vsel %vm197, %v1190, 0
    %1197 = vmatprep.subr.bf16.mxu0 0
    %1198 = vmatpush1.bf16.msra.mxu0 0
    %1199 = vmatprep.subr.bf16.mxu0 0
    %1200 = vmatpush1.bf16.msra.mxu0 0
    %1201 = vmatprep.subr.bf16.mxu0 0
    %1202 = vmatpush1.bf16.msra.mxu0 0
    %1203 = vmatprep.subr.bf16.mxu0 0
    %1204 = vmatpush1.bf16.msra.mxu0 0
    %1205 = vmatprep.subr.bf16.mxu0 0
    %1206 = vmatpush1.bf16.msra.mxu0 0
    %1207 = vmatprep.subr.bf16.mxu0 0
    %1208 = vmatpush1.bf16.msra.mxu0 0
    %1209 = vmatprep.subr.bf16.mxu0 0
    %1210 = vmatpush1.bf16.msra.mxu0 %v1180
    %1211 = vmatprep.subr.bf16.mxu0 0
    %1212 = vmatpush1.bf16.msra.mxu0 %v1179
    %1213 = vmatprep.subr.bf16.mxu0 0
    %1214 = vmatpush2.bf16.msra.mxu0 0
    %1215 = vmatprep.subr.bf16.mxu0 0
    %1216 = vmatpush2.bf16.msra.mxu0 0
    %1217 = vmatprep.subr.bf16.mxu0 0
    %1218 = vmatpush2.bf16.msra.mxu0 0
    %1219 = vmatprep.subr.bf16.mxu0 0
    %1220 = vmatpush2.bf16.msra.mxu0 0
    %1221 = vmatprep.subr.bf16.mxu0 0
    %1222 = vmatpush2.bf16.msra.mxu0 0
    %1223 = vmatprep.subr.bf16.mxu0 0
    %1224 = vmatpush2.bf16.msra.mxu0 0
    %1225 = vmatprep.subr.bf16.mxu0 0
    %1226 = vmatpush2.bf16.msra.mxu0 0
    %1227 = vmatprep.subr.bf16.mxu0 0
    %1228 = vmatpush2.bf16.msra.mxu0 0
    %1229 = vmatprep.mubr.bf16.mxu0 0
    %1230 = vmatmul.mubr.bf16.gmra.mxu0 %v1192
    %v1231 = vpop.f32.mrf.mxu0
    %v1232 = vadd.f32 0.0, %v1231
    %v1233 = vpop.f32.mrf.mxu0
    %v1234 = vpop.f32.mrf.mxu0
    %v1235 = vadd.f32 0.0, %v1234
    %v1236 = vpop.f32.mrf.mxu0
    %1237 = vmatprep.mubr.bf16.mxu0 0
    %1238 = vmatmul.mubr.bf16.gmra.mxu0 %v1195
    %v1239 = vpop.f32.mrf.mxu0
    %v1240 = vadd.f32 0.0, %v1239
    %v1241 = vpop.f32.mrf.mxu0
    %v1242 = vpop.f32.mrf.mxu0
    %v1243 = vadd.f32 0.0, %v1242
    %v1244 = vpop.f32.mrf.mxu0
    %1245 = vdwg.mxu0
    %1246 = vadd.xlane.f32.xlu0 %v1232
    %v1247 = vpop.xlane.xlu0 %1246
    %1248 = vadd.xlane.f32.xlu0 %v1235
    %v1249 = vpop.xlane.xlu0 %1248
    %1250 = vadd.xlane.f32.xlu0 %v1240
    %v1251 = vpop.xlane.xlu0 %1250
    %1252 = vadd.xlane.f32.xlu0 %v1243
    %v1253 = vpop.xlane.xlu0 %1252
    %v1254 = vmul.f32 %v1232, %v1232
    %v1255 = vmul.f32 %v1235, %v1235
    %v1256 = vmul.f32 %v1240, %v1240
    %v1257 = vmul.f32 %v1243, %v1243
    %1258 = vadd.xlane.f32.xlu0 %v1254
    %v1259 = vpop.xlane.xlu0 %1258
    %1260 = vadd.xlane.f32.xlu0 %v1255
    %v1261 = vpop.xlane.xlu0 %1260
    %1262 = vadd.xlane.f32.xlu0 %v1256
    %v1263 = vpop.xlane.xlu0 %1262
    %1264 = vadd.xlane.f32.xlu0 %v1257
    %v1265 = vpop.xlane.xlu0 %1264
    %v1266 = vmul.f32 %v1247, 0.0078125
    %v1267 = vmul.f32 %v1249, 0.0078125
    %v1268 = vmul.f32 %v1251, 0.0078125
    %v1269 = vmul.f32 %v1253, 0.0078125
    %v1270 = vmul.f32 %v1259, 0.0078125
    %v1271 = vmul.f32 %v1261, 0.0078125
    %v1272 = vmul.f32 %v1263, 0.0078125
    %v1273 = vmul.f32 %v1265, 0.0078125
    %v1274 = vmul.f32 %v1266, %v1266
    %v1275 = vmul.f32 %v1267, %v1267
    %v1276 = vmul.f32 %v1268, %v1268
    %v1277 = vmul.f32 %v1269, %v1269
    %v1278 = vsub.f32 %v1270, %v1274
    %v1279 = vsub.f32 %v1271, %v1275
    %v1280 = vsub.f32 %v1272, %v1276
    %v1281 = vsub.f32 %v1273, %v1277
    %v1282 = vsub.f32 %v1232, %v1266
    %v1283 = vsub.f32 %v1235, %v1267
    %v1284 = vsub.f32 %v1240, %v1268
    %v1285 = vsub.f32 %v1243, %v1269
    %v1286 = vadd.f32 %v1278, 1e-05
    %v1287 = vadd.f32 %v1279, 1e-05
    %v1288 = vadd.f32 %v1280, 1e-05
    %v1289 = vadd.f32 %v1281, 1e-05
    %v1290 = vrsqrt.pop %v1286
    %v1291 = vrsqrt.pop %v1287
    %v1292 = vrsqrt.pop %v1288
    %v1293 = vrsqrt.pop %v1289
    %v1294 = vmul.f32 %v1282, %v1290
    %v1295 = vmul.f32 %v1283, %v1291
    %v1296 = vmul.f32 %v1284, %v1292
    %v1297 = vmul.f32 %v1285, %v1293
    %v1298 = vmax.f32 %v1294, 0.0
    %v1299 = vmax.f32 %v1295, 0.0
    %v1300 = vmax.f32 %v1296, 0.0
    %v1301 = vmax.f32 %v1297, 0.0
    %v1302 = vadd.f32 %v1042, %v1298
    %v1303 = vadd.f32 %v1043, %v1299
    %v1304 = vadd.f32 %v1044, %v1300
    %v1305 = vadd.f32 %v1045, %v1301
    %v1306 = vpack.c.bf16 %v1303, %v1302
    %v1307 = vpack.c.bf16 %v1305, %v1304
    %1308 = vmatprep.subr.bf16.mxu0 %v104
    %1309 = vmatpush1.bf16.msra.mxu0 %v103
    %1310 = vmatprep.subr.bf16.mxu0 %v102
    %1311 = vmatpush1.bf16.msra.mxu0 %v101
    %1312 = vmatprep.subr.bf16.mxu0 %v100
    %1313 = vmatpush1.bf16.msra.mxu0 %v99
    %1314 = vmatprep.subr.bf16.mxu0 %v98
    %1315 = vmatpush1.bf16.msra.mxu0 %v97
    %1316 = vmatprep.subr.bf16.mxu0 %v96
    %1317 = vmatpush1.bf16.msra.mxu0 %v95
    %1318 = vmatprep.subr.bf16.mxu0 %v94
    %1319 = vmatpush1.bf16.msra.mxu0 %v93
    %1320 = vmatprep.subr.bf16.mxu0 %v92
    %1321 = vmatpush1.bf16.msra.mxu0 %v91
    %1322 = vmatprep.subr.bf16.mxu0 %v90
    %1323 = vmatpush1.bf16.msra.mxu0 %v89
    %1324 = vmatprep.subr.bf16.mxu0 0
    %1325 = vmatpush2.bf16.msra.mxu0 0
    %1326 = vmatprep.subr.bf16.mxu0 0
    %1327 = vmatpush2.bf16.msra.mxu0 0
    %1328 = vmatprep.subr.bf16.mxu0 0
    %1329 = vmatpush2.bf16.msra.mxu0 0
    %1330 = vmatprep.subr.bf16.mxu0 0
    %1331 = vmatpush2.bf16.msra.mxu0 0
    %1332 = vmatprep.subr.bf16.mxu0 0
    %1333 = vmatpush2.bf16.msra.mxu0 0
    %1334 = vmatprep.subr.bf16.mxu0 0
    %1335 = vmatpush2.bf16.msra.mxu0 0
    %1336 = vmatprep.subr.bf16.mxu0 0
    %1337 = vmatpush2.bf16.msra.mxu0 0
    %1338 = vmatprep.subr.bf16.mxu0 0
    %1339 = vmatpush2.bf16.msra.mxu0 0
    %1340 = vmatprep.mubr.bf16.mxu0 0
    %1341 = vmatmul.mubr.bf16.gmra.mxu0 %v1306
    %v1342 = vpop.f32.mrf.mxu0
    %v1343 = vadd.f32 0.0, %v1342
    %v1344 = vpop.f32.mrf.mxu0
    %v1345 = vadd.f32 0.0, %v1344
    %v1346 = vpop.f32.mrf.mxu0
    %v1347 = vadd.f32 0.0, %v1346
    %v1348 = vpop.f32.mrf.mxu0
    %v1349 = vadd.f32 0.0, %v1348
    %1350 = vmatprep.mubr.bf16.mxu0 0
    %1351 = vmatmul.mubr.bf16.gmra.mxu0 %v1307
    %v1352 = vpop.f32.mrf.mxu0
    %v1353 = vadd.f32 0.0, %v1352
    %v1354 = vpop.f32.mrf.mxu0
    %v1355 = vadd.f32 0.0, %v1354
    %v1356 = vpop.f32.mrf.mxu0
    %v1357 = vadd.f32 0.0, %v1356
    %v1358 = vpop.f32.mrf.mxu0
    %v1359 = vadd.f32 0.0, %v1358
    %1360 = vdwg.mxu0
    %v1361 = vpack.c.bf16 %v1347, %v1343
    %v1362 = vpack.c.bf16 %v1349, %v1345
    %v1363 = vpack.c.bf16 %v1357, %v1353
    %v1364 = vpack.c.bf16 %v1359, %v1355
    %s1365 = scalar_lea.vmem %s3, 160
    %v1366 = vld [vmem:[%s1365] sm:$0xf]
    %v1367 = vld [vmem:[%s1365 + $0x4] sm:$0xf]
    %v1368 = vld [vmem:[%s1365 + $0x8] sm:$0xf]
    %v1369 = vld [vmem:[%s1365 + $0xc] sm:$0xf]
    %s1370 = scalar_lea.vmem %s3, 176
    %v1371 = vld [vmem:[%s1370] sm:$0xf]
    %v1372 = vld [vmem:[%s1370 + $0x4] sm:$0xf]
    %v1373 = vld [vmem:[%s1370 + $0x8] sm:$0xf]
    %v1374 = vld [vmem:[%s1370 + $0xc] sm:$0xf]
    %v1379 = vunpack.c.l.b16 %v1371
    %v1380 = vunpack.c.l.b16 %v1372
    %v1381 = vunpack.c.l.b16 %v1373
    %v1382 = vunpack.c.l.b16 %v1374
    %v1383 = vpack.c.b16 %v1380, %v1379
    %v1384 = vpack.c.b16 %v1382, %v1381
    %v1386 = vsel %vm197, %v1383, 0
    %v1389 = vsel %vm197, %v1384, 0
    %1391 = vmatprep.subr.bf16.mxu0 0
    %1392 = vmatpush1.bf16.msra.mxu0 0
    %1393 = vmatprep.subr.bf16.mxu0 0
    %1394 = vmatpush1.bf16.msra.mxu0 0
    %1395 = vmatprep.subr.bf16.mxu0 0
    %1396 = vmatpush1.bf16.msra.mxu0 0
    %1397 = vmatprep.subr.bf16.mxu0 0
    %1398 = vmatpush1.bf16.msra.mxu0 0
    %1399 = vmatprep.subr.bf16.mxu0 0
    %1400 = vmatpush1.bf16.msra.mxu0 0
    %1401 = vmatprep.subr.bf16.mxu0 0
    %1402 = vmatpush1.bf16.msra.mxu0 0
    %1403 = vmatprep.subr.bf16.mxu0 0
    %1404 = vmatpush1.bf16.msra.mxu0 %v1363
    %1405 = vmatprep.subr.bf16.mxu0 0
    %1406 = vmatpush1.bf16.msra.mxu0 %v1361
    %1407 = vmatprep.subr.bf16.mxu0 0
    %1408 = vmatpush2.bf16.msra.mxu0 0
    %1409 = vmatprep.subr.bf16.mxu0 0
    %1410 = vmatpush2.bf16.msra.mxu0 0
    %1411 = vmatprep.subr.bf16.mxu0 0
    %1412 = vmatpush2.bf16.msra.mxu0 0
    %1413 = vmatprep.subr.bf16.mxu0 0
    %1414 = vmatpush2.bf16.msra.mxu0 0
    %1415 = vmatprep.subr.bf16.mxu0 0
    %1416 = vmatpush2.bf16.msra.mxu0 0
    %1417 = vmatprep.subr.bf16.mxu0 0
    %1418 = vmatpush2.bf16.msra.mxu0 0
    %1419 = vmatprep.subr.bf16.mxu0 0
    %1420 = vmatpush2.bf16.msra.mxu0 0
    %1421 = vmatprep.subr.bf16.mxu0 0
    %1422 = vmatpush2.bf16.msra.mxu0 0
    %1423 = vmatprep.mubr.bf16.mxu0 0
    %1424 = vmatmul.mubr.bf16.gmra.mxu0 %v1386
    %v1425 = vpop.f32.mrf.mxu0
    %v1426 = vadd.f32 0.0, %v1425
    %v1427 = vpop.f32.mrf.mxu0
    %v1428 = vpop.f32.mrf.mxu0
    %v1429 = vadd.f32 0.0, %v1428
    %v1430 = vpop.f32.mrf.mxu0
    %1431 = vmatprep.mubr.bf16.mxu0 0
    %1432 = vmatmul.mubr.bf16.gmra.mxu0 %v1389
    %v1433 = vpop.f32.mrf.mxu0
    %v1434 = vadd.f32 0.0, %v1433
    %v1435 = vpop.f32.mrf.mxu0
    %v1436 = vpop.f32.mrf.mxu0
    %v1437 = vadd.f32 0.0, %v1436
    %v1438 = vpop.f32.mrf.mxu0
    %1439 = vdwg.mxu0
    %v1444 = vunpack.c.l.b16 %v1366
    %v1445 = vunpack.c.l.b16 %v1367
    %v1446 = vunpack.c.l.b16 %v1368
    %v1447 = vunpack.c.l.b16 %v1369
    %v1448 = vpack.c.b16 %v1445, %v1444
    %v1449 = vpack.c.b16 %v1447, %v1446
    %v1451 = vsel %vm197, %v1448, 0
    %v1454 = vsel %vm197, %v1449, 0
    %1456 = vmatprep.subr.bf16.mxu0 0
    %1457 = vmatpush1.bf16.msra.mxu0 0
    %1458 = vmatprep.subr.bf16.mxu0 0
    %1459 = vmatpush1.bf16.msra.mxu0 0
    %1460 = vmatprep.subr.bf16.mxu0 0
    %1461 = vmatpush1.bf16.msra.mxu0 0
    %1462 = vmatprep.subr.bf16.mxu0 0
    %1463 = vmatpush1.bf16.msra.mxu0 0
    %1464 = vmatprep.subr.bf16.mxu0 0
    %1465 = vmatpush1.bf16.msra.mxu0 0
    %1466 = vmatprep.subr.bf16.mxu0 0
    %1467 = vmatpush1.bf16.msra.mxu0 0
    %1468 = vmatprep.subr.bf16.mxu0 0
    %1469 = vmatpush1.bf16.msra.mxu0 %v1307
    %1470 = vmatprep.subr.bf16.mxu0 0
    %1471 = vmatpush1.bf16.msra.mxu0 %v1306
    %1472 = vmatprep.subr.bf16.mxu0 0
    %1473 = vmatpush2.bf16.msra.mxu0 0
    %1474 = vmatprep.subr.bf16.mxu0 0
    %1475 = vmatpush2.bf16.msra.mxu0 0
    %1476 = vmatprep.subr.bf16.mxu0 0
    %1477 = vmatpush2.bf16.msra.mxu0 0
    %1478 = vmatprep.subr.bf16.mxu0 0
    %1479 = vmatpush2.bf16.msra.mxu0 0
    %1480 = vmatprep.subr.bf16.mxu0 0
    %1481 = vmatpush2.bf16.msra.mxu0 0
    %1482 = vmatprep.subr.bf16.mxu0 0
    %1483 = vmatpush2.bf16.msra.mxu0 0
    %1484 = vmatprep.subr.bf16.mxu0 0
    %1485 = vmatpush2.bf16.msra.mxu0 0
    %1486 = vmatprep.subr.bf16.mxu0 0
    %1487 = vmatpush2.bf16.msra.mxu0 0
    %1488 = vmatprep.mubr.bf16.mxu0 0
    %1489 = vmatmul.mubr.bf16.gmra.mxu0 %v1451
    %v1490 = vpop.f32.mrf.mxu0
    %v1491 = vadd.f32 %v1426, %v1490
    %v1492 = vpop.f32.mrf.mxu0
    %v1493 = vpop.f32.mrf.mxu0
    %v1494 = vadd.f32 %v1429, %v1493
    %v1495 = vpop.f32.mrf.mxu0
    %1496 = vmatprep.mubr.bf16.mxu0 0
    %1497 = vmatmul.mubr.bf16.gmra.mxu0 %v1454
    %v1498 = vpop.f32.mrf.mxu0
    %v1499 = vadd.f32 %v1434, %v1498
    %v1500 = vpop.f32.mrf.mxu0
    %v1501 = vpop.f32.mrf.mxu0
    %v1502 = vadd.f32 %v1437, %v1501
    %v1503 = vpop.f32.mrf.mxu0
    %1504 = vdwg.mxu0
    %s1505 = scalar_lea.vmem %s3, 192
    %v1506 = vld [vmem:[%s1505] sm:$0xf]
    %v1507 = vld [vmem:[%s1505 + $0x4] sm:$0xf]
    %v1508 = vld [vmem:[%s1505 + $0x8] sm:$0xf]
    %v1509 = vld [vmem:[%s1505 + $0xc] sm:$0xf]
    %v1514 = vunpack.c.l.b16 %v1506
    %v1515 = vunpack.c.l.b16 %v1507
    %v1516 = vunpack.c.l.b16 %v1508
    %v1517 = vunpack.c.l.b16 %v1509
    %v1518 = vpack.c.b16 %v1515, %v1514
    %v1519 = vpack.c.b16 %v1517, %v1516
    %v1521 = vsel %vm197, %v1518, 0
    %v1524 = vsel %vm197, %v1519, 0
    %1526 = vmatprep.subr.bf16.mxu0 0
    %1527 = vmatpush1.bf16.msra.mxu0 0
    %1528 = vmatprep.subr.bf16.mxu0 0
    %1529 = vmatpush1.bf16.msra.mxu0 0
    %1530 = vmatprep.subr.bf16.mxu0 0
    %1531 = vmatpush1.bf16.msra.mxu0 0
    %1532 = vmatprep.subr.bf16.mxu0 0
    %1533 = vmatpush1.bf16.msra.mxu0 0
    %1534 = vmatprep.subr.bf16.mxu0 0
    %1535 = vmatpush1.bf16.msra.mxu0 0
    %1536 = vmatprep.subr.bf16.mxu0 0
    %1537 = vmatpush1.bf16.msra.mxu0 0
    %1538 = vmatprep.subr.bf16.mxu0 0
    %1539 = vmatpush1.bf16.msra.mxu0 %v1364
    %1540 = vmatprep.subr.bf16.mxu0 0
    %1541 = vmatpush1.bf16.msra.mxu0 %v1362
    %1542 = vmatprep.subr.bf16.mxu0 0
    %1543 = vmatpush2.bf16.msra.mxu0 0
    %1544 = vmatprep.subr.bf16.mxu0 0
    %1545 = vmatpush2.bf16.msra.mxu0 0
    %1546 = vmatprep.subr.bf16.mxu0 0
    %1547 = vmatpush2.bf16.msra.mxu0 0
    %1548 = vmatprep.subr.bf16.mxu0 0
    %1549 = vmatpush2.bf16.msra.mxu0 0
    %1550 = vmatprep.subr.bf16.mxu0 0
    %1551 = vmatpush2.bf16.msra.mxu0 0
    %1552 = vmatprep.subr.bf16.mxu0 0
    %1553 = vmatpush2.bf16.msra.mxu0 0
    %1554 = vmatprep.subr.bf16.mxu0 0
    %1555 = vmatpush2.bf16.msra.mxu0 0
    %1556 = vmatprep.subr.bf16.mxu0 0
    %1557 = vmatpush2.bf16.msra.mxu0 0
    %1558 = vmatprep.mubr.bf16.mxu0 0
    %1559 = vmatmul.mubr.bf16.gmra.mxu0 %v1521
    %v1560 = vpop.f32.mrf.mxu0
    %v1561 = vadd.f32 0.0, %v1560
    %v1562 = vpop.f32.mrf.mxu0
    %v1563 = vpop.f32.mrf.mxu0
    %v1564 = vadd.f32 0.0, %v1563
    %v1565 = vpop.f32.mrf.mxu0
    %1566 = vmatprep.mubr.bf16.mxu0 0
    %1567 = vmatmul.mubr.bf16.gmra.mxu0 %v1524
    %v1568 = vpop.f32.mrf.mxu0
    %v1569 = vadd.f32 0.0, %v1568
    %v1570 = vpop.f32.mrf.mxu0
    %v1571 = vpop.f32.mrf.mxu0
    %v1572 = vadd.f32 0.0, %v1571
    %v1573 = vpop.f32.mrf.mxu0
    %1574 = vdwg.mxu0
    %v1575 = vadd.f32 %v1491, %v1561
    %v1576 = vadd.f32 %v1494, %v1564
    %v1577 = vadd.f32 %v1499, %v1569
    %v1578 = vadd.f32 %v1502, %v1572
    %s1579 = scalar_lea.vmem %s2, 64
    %v1580 = vld [vmem:[%s1579] sm:$0xff]
    %v1581 = vld [vmem:[%s1579 + $0x8] sm:$0xff]
    %v1582 = vld [vmem:[%s1579 + $0x10] sm:$0xff]
    %v1583 = vld [vmem:[%s1579 + $0x18] sm:$0xff]
    %v1584 = vadd.f32 %v1575, %v1580
    %v1585 = vadd.f32 %v1576, %v1581
    %v1586 = vadd.f32 %v1577, %v1582
    %v1587 = vadd.f32 %v1578, %v1583
    %1588 = vadd.xlane.f32.xlu0 %v1584
    %v1589 = vpop.xlane.xlu0 %1588
    %1590 = vadd.xlane.f32.xlu0 %v1585
    %v1591 = vpop.xlane.xlu0 %1590
    %1592 = vadd.xlane.f32.xlu0 %v1586
    %v1593 = vpop.xlane.xlu0 %1592
    %1594 = vadd.xlane.f32.xlu0 %v1587
    %v1595 = vpop.xlane.xlu0 %1594
    %v1596 = vmul.f32 %v1584, %v1584
    %v1597 = vmul.f32 %v1585, %v1585
    %v1598 = vmul.f32 %v1586, %v1586
    %v1599 = vmul.f32 %v1587, %v1587
    %1600 = vadd.xlane.f32.xlu0 %v1596
    %v1601 = vpop.xlane.xlu0 %1600
    %1602 = vadd.xlane.f32.xlu0 %v1597
    %v1603 = vpop.xlane.xlu0 %1602
    %1604 = vadd.xlane.f32.xlu0 %v1598
    %v1605 = vpop.xlane.xlu0 %1604
    %1606 = vadd.xlane.f32.xlu0 %v1599
    %v1607 = vpop.xlane.xlu0 %1606
    %v1608 = vmul.f32 %v1589, 0.0078125
    %v1609 = vmul.f32 %v1591, 0.0078125
    %v1610 = vmul.f32 %v1593, 0.0078125
    %v1611 = vmul.f32 %v1595, 0.0078125
    %v1612 = vmul.f32 %v1601, 0.0078125
    %v1613 = vmul.f32 %v1603, 0.0078125
    %v1614 = vmul.f32 %v1605, 0.0078125
    %v1615 = vmul.f32 %v1607, 0.0078125
    %v1616 = vmul.f32 %v1608, %v1608
    %v1617 = vmul.f32 %v1609, %v1609
    %v1618 = vmul.f32 %v1610, %v1610
    %v1619 = vmul.f32 %v1611, %v1611
    %v1620 = vsub.f32 %v1612, %v1616
    %v1621 = vsub.f32 %v1613, %v1617
    %v1622 = vsub.f32 %v1614, %v1618
    %v1623 = vsub.f32 %v1615, %v1619
    %v1624 = vsub.f32 %v1584, %v1608
    %v1625 = vsub.f32 %v1585, %v1609
    %v1626 = vsub.f32 %v1586, %v1610
    %v1627 = vsub.f32 %v1587, %v1611
    %v1628 = vadd.f32 %v1620, 1e-05
    %v1629 = vadd.f32 %v1621, 1e-05
    %v1630 = vadd.f32 %v1622, 1e-05
    %v1631 = vadd.f32 %v1623, 1e-05
    %v1632 = vrsqrt.pop %v1628
    %v1633 = vrsqrt.pop %v1629
    %v1634 = vrsqrt.pop %v1630
    %v1635 = vrsqrt.pop %v1631
    %v1636 = vmul.f32 %v1624, %v1632
    %v1637 = vmul.f32 %v1625, %v1633
    %v1638 = vmul.f32 %v1626, %v1634
    %v1639 = vmul.f32 %v1627, %v1635
    %s1640 = scalar_lea.vmem %s3, 208
    %v1641 = vld [vmem:[%s1640] sm:$0xf]
    %v1642 = vld [vmem:[%s1640 + $0x4] sm:$0xf]
    %v1643 = vld [vmem:[%s1640 + $0x8] sm:$0xf]
    %v1644 = vld [vmem:[%s1640 + $0xc] sm:$0xf]
    %v1645 = vpack.c.bf16 %v1637, %v1636
    %v1646 = vpack.c.bf16 %v1639, %v1638
    %v1651 = vunpack.c.l.b16 %v1641
    %v1652 = vunpack.c.l.b16 %v1642
    %v1653 = vunpack.c.l.b16 %v1643
    %v1654 = vunpack.c.l.b16 %v1644
    %v1655 = vpack.c.b16 %v1652, %v1651
    %v1656 = vpack.c.b16 %v1654, %v1653
    %v1658 = vsel %vm197, %v1655, 0
    %v1661 = vsel %vm197, %v1656, 0
    %1663 = vmatprep.subr.bf16.mxu0 0
    %1664 = vmatpush1.bf16.msra.mxu0 0
    %1665 = vmatprep.subr.bf16.mxu0 0
    %1666 = vmatpush1.bf16.msra.mxu0 0
    %1667 = vmatprep.subr.bf16.mxu0 0
    %1668 = vmatpush1.bf16.msra.mxu0 0
    %1669 = vmatprep.subr.bf16.mxu0 0
    %1670 = vmatpush1.bf16.msra.mxu0 0
    %1671 = vmatprep.subr.bf16.mxu0 0
    %1672 = vmatpush1.bf16.msra.mxu0 0
    %1673 = vmatprep.subr.bf16.mxu0 0
    %1674 = vmatpush1.bf16.msra.mxu0 0
    %1675 = vmatprep.subr.bf16.mxu0 0
    %1676 = vmatpush1.bf16.msra.mxu0 %v1646
    %1677 = vmatprep.subr.bf16.mxu0 0
    %1678 = vmatpush1.bf16.msra.mxu0 %v1645
    %1679 = vmatprep.subr.bf16.mxu0 0
    %1680 = vmatpush2.bf16.msra.mxu0 0
    %1681 = vmatprep.subr.bf16.mxu0 0
    %1682 = vmatpush2.bf16.msra.mxu0 0
    %1683 = vmatprep.subr.bf16.mxu0 0
    %1684 = vmatpush2.bf16.msra.mxu0 0
    %1685 = vmatprep.subr.bf16.mxu0 0
    %1686 = vmatpush2.bf16.msra.mxu0 0
    %1687 = vmatprep.subr.bf16.mxu0 0
    %1688 = vmatpush2.bf16.msra.mxu0 0
    %1689 = vmatprep.subr.bf16.mxu0 0
    %1690 = vmatpush2.bf16.msra.mxu0 0
    %1691 = vmatprep.subr.bf16.mxu0 0
    %1692 = vmatpush2.bf16.msra.mxu0 0
    %1693 = vmatprep.subr.bf16.mxu0 0
    %1694 = vmatpush2.bf16.msra.mxu0 0
    %1695 = vmatprep.mubr.bf16.mxu0 0
    %1696 = vmatmul.mubr.bf16.gmra.mxu0 %v1658
    %v1697 = vpop.f32.mrf.mxu0
    %v1698 = vadd.f32 0.0, %v1697
    %v1699 = vpop.f32.mrf.mxu0
    %v1700 = vpop.f32.mrf.mxu0
    %v1701 = vadd.f32 0.0, %v1700
    %v1702 = vpop.f32.mrf.mxu0
    %1703 = vmatprep.mubr.bf16.mxu0 0
    %1704 = vmatmul.mubr.bf16.gmra.mxu0 %v1661
    %v1705 = vpop.f32.mrf.mxu0
    %v1706 = vadd.f32 0.0, %v1705
    %v1707 = vpop.f32.mrf.mxu0
    %v1708 = vpop.f32.mrf.mxu0
    %v1709 = vadd.f32 0.0, %v1708
    %v1710 = vpop.f32.mrf.mxu0
    %1711 = vdwg.mxu0
    %1712 = vadd.xlane.f32.xlu0 %v1698
    %v1713 = vpop.xlane.xlu0 %1712
    %1714 = vadd.xlane.f32.xlu0 %v1701
    %v1715 = vpop.xlane.xlu0 %1714
    %1716 = vadd.xlane.f32.xlu0 %v1706
    %v1717 = vpop.xlane.xlu0 %1716
    %1718 = vadd.xlane.f32.xlu0 %v1709
    %v1719 = vpop.xlane.xlu0 %1718
    %v1720 = vmul.f32 %v1698, %v1698
    %v1721 = vmul.f32 %v1701, %v1701
    %v1722 = vmul.f32 %v1706, %v1706
    %v1723 = vmul.f32 %v1709, %v1709
    %1724 = vadd.xlane.f32.xlu0 %v1720
    %v1725 = vpop.xlane.xlu0 %1724
    %1726 = vadd.xlane.f32.xlu0 %v1721
    %v1727 = vpop.xlane.xlu0 %1726
    %1728 = vadd.xlane.f32.xlu0 %v1722
    %v1729 = vpop.xlane.xlu0 %1728
    %1730 = vadd.xlane.f32.xlu0 %v1723
    %v1731 = vpop.xlane.xlu0 %1730
    %v1732 = vmul.f32 %v1713, 0.0078125
    %v1733 = vmul.f32 %v1715, 0.0078125
    %v1734 = vmul.f32 %v1717, 0.0078125
    %v1735 = vmul.f32 %v1719, 0.0078125
    %v1736 = vmul.f32 %v1725, 0.0078125
    %v1737 = vmul.f32 %v1727, 0.0078125
    %v1738 = vmul.f32 %v1729, 0.0078125
    %v1739 = vmul.f32 %v1731, 0.0078125
    %v1740 = vmul.f32 %v1732, %v1732
    %v1741 = vmul.f32 %v1733, %v1733
    %v1742 = vmul.f32 %v1734, %v1734
    %v1743 = vmul.f32 %v1735, %v1735
    %v1744 = vsub.f32 %v1736, %v1740
    %v1745 = vsub.f32 %v1737, %v1741
    %v1746 = vsub.f32 %v1738, %v1742
    %v1747 = vsub.f32 %v1739, %v1743
    %v1748 = vsub.f32 %v1698, %v1732
    %v1749 = vsub.f32 %v1701, %v1733
    %v1750 = vsub.f32 %v1706, %v1734
    %v1751 = vsub.f32 %v1709, %v1735
    %v1752 = vadd.f32 %v1744, 1e-05
    %v1753 = vadd.f32 %v1745, 1e-05
    %v1754 = vadd.f32 %v1746, 1e-05
    %v1755 = vadd.f32 %v1747, 1e-05
    %v1756 = vrsqrt.pop %v1752
    %v1757 = vrsqrt.pop %v1753
    %v1758 = vrsqrt.pop %v1754
    %v1759 = vrsqrt.pop %v1755
    %v1760 = vmul.f32 %v1748, %v1756
    %v1761 = vmul.f32 %v1749, %v1757
    %v1762 = vmul.f32 %v1750, %v1758
    %v1763 = vmul.f32 %v1751, %v1759
    %v1764 = vmax.f32 %v1760, 0.0
    %v1765 = vmax.f32 %v1761, 0.0
    %v1766 = vmax.f32 %v1762, 0.0
    %v1767 = vmax.f32 %v1763, 0.0
    %s1768 = scalar_lea.vmem %s3, 224
    %v1769 = vld [vmem:[%s1768] sm:$0xf]
    %v1770 = vld [vmem:[%s1768 + $0x4] sm:$0xf]
    %v1771 = vld [vmem:[%s1768 + $0x8] sm:$0xf]
    %v1772 = vld [vmem:[%s1768 + $0xc] sm:$0xf]
    %v1773 = vpack.c.bf16 %v1765, %v1764
    %v1774 = vpack.c.bf16 %v1767, %v1766
    %v1779 = vunpack.c.l.b16 %v1769
    %v1780 = vunpack.c.l.b16 %v1770
    %v1781 = vunpack.c.l.b16 %v1771
    %v1782 = vunpack.c.l.b16 %v1772
    %v1783 = vpack.c.b16 %v1780, %v1779
    %v1784 = vpack.c.b16 %v1782, %v1781
    %v1786 = vsel %vm197, %v1783, 0
    %v1789 = vsel %vm197, %v1784, 0
    %1791 = vmatprep.subr.bf16.mxu0 0
    %1792 = vmatpush1.bf16.msra.mxu0 0
    %1793 = vmatprep.subr.bf16.mxu0 0
    %1794 = vmatpush1.bf16.msra.mxu0 0
    %1795 = vmatprep.subr.bf16.mxu0 0
    %1796 = vmatpush1.bf16.msra.mxu0 0
    %1797 = vmatprep.subr.bf16.mxu0 0
    %1798 = vmatpush1.bf16.msra.mxu0 0
    %1799 = vmatprep.subr.bf16.mxu0 0
    %1800 = vmatpush1.bf16.msra.mxu0 0
    %1801 = vmatprep.subr.bf16.mxu0 0
    %1802 = vmatpush1.bf16.msra.mxu0 0
    %1803 = vmatprep.subr.bf16.mxu0 0
    %1804 = vmatpush1.bf16.msra.mxu0 %v1774
    %1805 = vmatprep.subr.bf16.mxu0 0
    %1806 = vmatpush1.bf16.msra.mxu0 %v1773
    %1807 = vmatprep.subr.bf16.mxu0 0
    %1808 = vmatpush2.bf16.msra.mxu0 0
    %1809 = vmatprep.subr.bf16.mxu0 0
    %1810 = vmatpush2.bf16.msra.mxu0 0
    %1811 = vmatprep.subr.bf16.mxu0 0
    %1812 = vmatpush2.bf16.msra.mxu0 0
    %1813 = vmatprep.subr.bf16.mxu0 0
    %1814 = vmatpush2.bf16.msra.mxu0 0
    %1815 = vmatprep.subr.bf16.mxu0 0
    %1816 = vmatpush2.bf16.msra.mxu0 0
    %1817 = vmatprep.subr.bf16.mxu0 0
    %1818 = vmatpush2.bf16.msra.mxu0 0
    %1819 = vmatprep.subr.bf16.mxu0 0
    %1820 = vmatpush2.bf16.msra.mxu0 0
    %1821 = vmatprep.subr.bf16.mxu0 0
    %1822 = vmatpush2.bf16.msra.mxu0 0
    %1823 = vmatprep.mubr.bf16.mxu0 0
    %1824 = vmatmul.mubr.bf16.gmra.mxu0 %v1786
    %v1825 = vpop.f32.mrf.mxu0
    %v1826 = vadd.f32 0.0, %v1825
    %v1827 = vpop.f32.mrf.mxu0
    %v1828 = vpop.f32.mrf.mxu0
    %v1829 = vadd.f32 0.0, %v1828
    %v1830 = vpop.f32.mrf.mxu0
    %1831 = vmatprep.mubr.bf16.mxu0 0
    %1832 = vmatmul.mubr.bf16.gmra.mxu0 %v1789
    %v1833 = vpop.f32.mrf.mxu0
    %v1834 = vadd.f32 0.0, %v1833
    %v1835 = vpop.f32.mrf.mxu0
    %v1836 = vpop.f32.mrf.mxu0
    %v1837 = vadd.f32 0.0, %v1836
    %v1838 = vpop.f32.mrf.mxu0
    %1839 = vdwg.mxu0
    %1840 = vadd.xlane.f32.xlu0 %v1826
    %v1841 = vpop.xlane.xlu0 %1840
    %1842 = vadd.xlane.f32.xlu0 %v1829
    %v1843 = vpop.xlane.xlu0 %1842
    %1844 = vadd.xlane.f32.xlu0 %v1834
    %v1845 = vpop.xlane.xlu0 %1844
    %1846 = vadd.xlane.f32.xlu0 %v1837
    %v1847 = vpop.xlane.xlu0 %1846
    %v1848 = vmul.f32 %v1826, %v1826
    %v1849 = vmul.f32 %v1829, %v1829
    %v1850 = vmul.f32 %v1834, %v1834
    %v1851 = vmul.f32 %v1837, %v1837
    %1852 = vadd.xlane.f32.xlu0 %v1848
    %v1853 = vpop.xlane.xlu0 %1852
    %1854 = vadd.xlane.f32.xlu0 %v1849
    %v1855 = vpop.xlane.xlu0 %1854
    %1856 = vadd.xlane.f32.xlu0 %v1850
    %v1857 = vpop.xlane.xlu0 %1856
    %1858 = vadd.xlane.f32.xlu0 %v1851
    %v1859 = vpop.xlane.xlu0 %1858
    %v1860 = vmul.f32 %v1841, 0.0078125
    %v1861 = vmul.f32 %v1843, 0.0078125
    %v1862 = vmul.f32 %v1845, 0.0078125
    %v1863 = vmul.f32 %v1847, 0.0078125
    %v1864 = vmul.f32 %v1853, 0.0078125
    %v1865 = vmul.f32 %v1855, 0.0078125
    %v1866 = vmul.f32 %v1857, 0.0078125
    %v1867 = vmul.f32 %v1859, 0.0078125
    %v1868 = vmul.f32 %v1860, %v1860
    %v1869 = vmul.f32 %v1861, %v1861
    %v1870 = vmul.f32 %v1862, %v1862
    %v1871 = vmul.f32 %v1863, %v1863
    %v1872 = vsub.f32 %v1864, %v1868
    %v1873 = vsub.f32 %v1865, %v1869
    %v1874 = vsub.f32 %v1866, %v1870
    %v1875 = vsub.f32 %v1867, %v1871
    %v1876 = vsub.f32 %v1826, %v1860
    %v1877 = vsub.f32 %v1829, %v1861
    %v1878 = vsub.f32 %v1834, %v1862
    %v1879 = vsub.f32 %v1837, %v1863
    %v1880 = vadd.f32 %v1872, 1e-05
    %v1881 = vadd.f32 %v1873, 1e-05
    %v1882 = vadd.f32 %v1874, 1e-05
    %v1883 = vadd.f32 %v1875, 1e-05
    %v1884 = vrsqrt.pop %v1880
    %v1885 = vrsqrt.pop %v1881
    %v1886 = vrsqrt.pop %v1882
    %v1887 = vrsqrt.pop %v1883
    %v1888 = vmul.f32 %v1876, %v1884
    %v1889 = vmul.f32 %v1877, %v1885
    %v1890 = vmul.f32 %v1878, %v1886
    %v1891 = vmul.f32 %v1879, %v1887
    %v1892 = vmax.f32 %v1888, 0.0
    %v1893 = vmax.f32 %v1889, 0.0
    %v1894 = vmax.f32 %v1890, 0.0
    %v1895 = vmax.f32 %v1891, 0.0
    %v1896 = vadd.f32 %v1636, %v1892
    %v1897 = vadd.f32 %v1637, %v1893
    %v1898 = vadd.f32 %v1638, %v1894
    %v1899 = vadd.f32 %v1639, %v1895
    %v1900 = vpack.c.bf16 %v1897, %v1896
    %v1901 = vpack.c.bf16 %v1899, %v1898
    %1902 = vmatprep.subr.bf16.mxu0 %v104
    %1903 = vmatpush1.bf16.msra.mxu0 %v103
    %1904 = vmatprep.subr.bf16.mxu0 %v102
    %1905 = vmatpush1.bf16.msra.mxu0 %v101
    %1906 = vmatprep.subr.bf16.mxu0 %v100
    %1907 = vmatpush1.bf16.msra.mxu0 %v99
    %1908 = vmatprep.subr.bf16.mxu0 %v98
    %1909 = vmatpush1.bf16.msra.mxu0 %v97
    %1910 = vmatprep.subr.bf16.mxu0 %v96
    %1911 = vmatpush1.bf16.msra.mxu0 %v95
    %1912 = vmatprep.subr.bf16.mxu0 %v94
    %1913 = vmatpush1.bf16.msra.mxu0 %v93
    %1914 = vmatprep.subr.bf16.mxu0 %v92
    %1915 = vmatpush1.bf16.msra.mxu0 %v91
    %1916 = vmatprep.subr.bf16.mxu0 %v90
    %1917 = vmatpush1.bf16.msra.mxu0 %v89
    %1918 = vmatprep.subr.bf16.mxu0 0
    %1919 = vmatpush2.bf16.msra.mxu0 0
    %1920 = vmatprep.subr.bf16.mxu0 0
    %1921 = vmatpush2.bf16.msra.mxu0 0
    %1922 = vmatprep.subr.bf16.mxu0 0
    %1923 = vmatpush2.bf16.msra.mxu0 0
    %1924 = vmatprep.subr.bf16.mxu0 0
    %1925 = vmatpush2.bf16.msra.mxu0 0
    %1926 = vmatprep.subr.bf16.mxu0 0
    %1927 = vmatpush2.bf16.msra.mxu0 0
    %1928 = vmatprep.subr.bf16.mxu0 0
    %1929 = vmatpush2.bf16.msra.mxu0 0
    %1930 = vmatprep.subr.bf16.mxu0 0
    %1931 = vmatpush2.bf16.msra.mxu0 0
    %1932 = vmatprep.subr.bf16.mxu0 0
    %1933 = vmatpush2.bf16.msra.mxu0 0
    %1934 = vmatprep.mubr.bf16.mxu0 0
    %1935 = vmatmul.mubr.bf16.gmra.mxu0 %v1900
    %v1936 = vpop.f32.mrf.mxu0
    %v1937 = vadd.f32 0.0, %v1936
    %v1938 = vpop.f32.mrf.mxu0
    %v1939 = vadd.f32 0.0, %v1938
    %v1940 = vpop.f32.mrf.mxu0
    %v1941 = vadd.f32 0.0, %v1940
    %v1942 = vpop.f32.mrf.mxu0
    %v1943 = vadd.f32 0.0, %v1942
    %1944 = vmatprep.mubr.bf16.mxu0 0
    %1945 = vmatmul.mubr.bf16.gmra.mxu0 %v1901
    %v1946 = vpop.f32.mrf.mxu0
    %v1947 = vadd.f32 0.0, %v1946
    %v1948 = vpop.f32.mrf.mxu0
    %v1949 = vadd.f32 0.0, %v1948
    %v1950 = vpop.f32.mrf.mxu0
    %v1951 = vadd.f32 0.0, %v1950
    %v1952 = vpop.f32.mrf.mxu0
    %v1953 = vadd.f32 0.0, %v1952
    %1954 = vdwg.mxu0
    %v1955 = vpack.c.bf16 %v1941, %v1937
    %v1956 = vpack.c.bf16 %v1943, %v1939
    %v1957 = vpack.c.bf16 %v1951, %v1947
    %v1958 = vpack.c.bf16 %v1953, %v1949
    %s1959 = scalar_lea.vmem %s3, 240
    %v1960 = vld [vmem:[%s1959] sm:$0xf]
    %v1961 = vld [vmem:[%s1959 + $0x4] sm:$0xf]
    %v1962 = vld [vmem:[%s1959 + $0x8] sm:$0xf]
    %v1963 = vld [vmem:[%s1959 + $0xc] sm:$0xf]
    %s1964 = scalar_lea.vmem %s3, 256
    %v1965 = vld [vmem:[%s1964] sm:$0xf]
    %v1966 = vld [vmem:[%s1964 + $0x4] sm:$0xf]
    %v1967 = vld [vmem:[%s1964 + $0x8] sm:$0xf]
    %v1968 = vld [vmem:[%s1964 + $0xc] sm:$0xf]
    %v1973 = vunpack.c.l.b16 %v1965
    %v1974 = vunpack.c.l.b16 %v1966
    %v1975 = vunpack.c.l.b16 %v1967
    %v1976 = vunpack.c.l.b16 %v1968
    %v1977 = vpack.c.b16 %v1974, %v1973
    %v1978 = vpack.c.b16 %v1976, %v1975
    %v1980 = vsel %vm197, %v1977, 0
    %v1983 = vsel %vm197, %v1978, 0
    %1985 = vmatprep.subr.bf16.mxu0 0
    %1986 = vmatpush1.bf16.msra.mxu0 0
    %1987 = vmatprep.subr.bf16.mxu0 0
    %1988 = vmatpush1.bf16.msra.mxu0 0
    %1989 = vmatprep.subr.bf16.mxu0 0
    %1990 = vmatpush1.bf16.msra.mxu0 0
    %1991 = vmatprep.subr.bf16.mxu0 0
    %1992 = vmatpush1.bf16.msra.mxu0 0
    %1993 = vmatprep.subr.bf16.mxu0 0
    %1994 = vmatpush1.bf16.msra.mxu0 0
    %1995 = vmatprep.subr.bf16.mxu0 0
    %1996 = vmatpush1.bf16.msra.mxu0 0
    %1997 = vmatprep.subr.bf16.mxu0 0
    %1998 = vmatpush1.bf16.msra.mxu0 %v1957
    %1999 = vmatprep.subr.bf16.mxu0 0
    %2000 = vmatpush1.bf16.msra.mxu0 %v1955
    %2001 = vmatprep.subr.bf16.mxu0 0
    %2002 = vmatpush2.bf16.msra.mxu0 0
    %2003 = vmatprep.subr.bf16.mxu0 0
    %2004 = vmatpush2.bf16.msra.mxu0 0
    %2005 = vmatprep.subr.bf16.mxu0 0
    %2006 = vmatpush2.bf16.msra.mxu0 0
    %2007 = vmatprep.subr.bf16.mxu0 0
    %2008 = vmatpush2.bf16.msra.mxu0 0
    %2009 = vmatprep.subr.bf16.mxu0 0
    %2010 = vmatpush2.bf16.msra.mxu0 0
    %2011 = vmatprep.subr.bf16.mxu0 0
    %2012 = vmatpush2.bf16.msra.mxu0 0
    %2013 = vmatprep.subr.bf16.mxu0 0
    %2014 = vmatpush2.bf16.msra.mxu0 0
    %2015 = vmatprep.subr.bf16.mxu0 0
    %2016 = vmatpush2.bf16.msra.mxu0 0
    %2017 = vmatprep.mubr.bf16.mxu0 0
    %2018 = vmatmul.mubr.bf16.gmra.mxu0 %v1980
    %v2019 = vpop.f32.mrf.mxu0
    %v2020 = vadd.f32 0.0, %v2019
    %v2021 = vpop.f32.mrf.mxu0
    %v2022 = vpop.f32.mrf.mxu0
    %v2023 = vadd.f32 0.0, %v2022
    %v2024 = vpop.f32.mrf.mxu0
    %2025 = vmatprep.mubr.bf16.mxu0 0
    %2026 = vmatmul.mubr.bf16.gmra.mxu0 %v1983
    %v2027 = vpop.f32.mrf.mxu0
    %v2028 = vadd.f32 0.0, %v2027
    %v2029 = vpop.f32.mrf.mxu0
    %v2030 = vpop.f32.mrf.mxu0
    %v2031 = vadd.f32 0.0, %v2030
    %v2032 = vpop.f32.mrf.mxu0
    %2033 = vdwg.mxu0
    %v2038 = vunpack.c.l.b16 %v1960
    %v2039 = vunpack.c.l.b16 %v1961
    %v2040 = vunpack.c.l.b16 %v1962
    %v2041 = vunpack.c.l.b16 %v1963
    %v2042 = vpack.c.b16 %v2039, %v2038
    %v2043 = vpack.c.b16 %v2041, %v2040
    %v2045 = vsel %vm197, %v2042, 0
    %v2048 = vsel %vm197, %v2043, 0
    %2050 = vmatprep.subr.bf16.mxu0 0
    %2051 = vmatpush1.bf16.msra.mxu0 0
    %2052 = vmatprep.subr.bf16.mxu0 0
    %2053 = vmatpush1.bf16.msra.mxu0 0
    %2054 = vmatprep.subr.bf16.mxu0 0
    %2055 = vmatpush1.bf16.msra.mxu0 0
    %2056 = vmatprep.subr.bf16.mxu0 0
    %2057 = vmatpush1.bf16.msra.mxu0 0
    %2058 = vmatprep.subr.bf16.mxu0 0
    %2059 = vmatpush1.bf16.msra.mxu0 0
    %2060 = vmatprep.subr.bf16.mxu0 0
    %2061 = vmatpush1.bf16.msra.mxu0 0
    %2062 = vmatprep.subr.bf16.mxu0 0
    %2063 = vmatpush1.bf16.msra.mxu0 %v1901
    %2064 = vmatprep.subr.bf16.mxu0 0
    %2065 = vmatpush1.bf16.msra.mxu0 %v1900
    %2066 = vmatprep.subr.bf16.mxu0 0
    %2067 = vmatpush2.bf16.msra.mxu0 0
    %2068 = vmatprep.subr.bf16.mxu0 0
    %2069 = vmatpush2.bf16.msra.mxu0 0
    %2070 = vmatprep.subr.bf16.mxu0 0
    %2071 = vmatpush2.bf16.msra.mxu0 0
    %2072 = vmatprep.subr.bf16.mxu0 0
    %2073 = vmatpush2.bf16.msra.mxu0 0
    %2074 = vmatprep.subr.bf16.mxu0 0
    %2075 = vmatpush2.bf16.msra.mxu0 0
    %2076 = vmatprep.subr.bf16.mxu0 0
    %2077 = vmatpush2.bf16.msra.mxu0 0
    %2078 = vmatprep.subr.bf16.mxu0 0
    %2079 = vmatpush2.bf16.msra.mxu0 0
    %2080 = vmatprep.subr.bf16.mxu0 0
    %2081 = vmatpush2.bf16.msra.mxu0 0
    %2082 = vmatprep.mubr.bf16.mxu0 0
    %2083 = vmatmul.mubr.bf16.gmra.mxu0 %v2045
    %v2084 = vpop.f32.mrf.mxu0
    %v2085 = vadd.f32 %v2020, %v2084
    %v2086 = vpop.f32.mrf.mxu0
    %v2087 = vpop.f32.mrf.mxu0
    %v2088 = vadd.f32 %v2023, %v2087
    %v2089 = vpop.f32.mrf.mxu0
    %2090 = vmatprep.mubr.bf16.mxu0 0
    %2091 = vmatmul.mubr.bf16.gmra.mxu0 %v2048
    %v2092 = vpop.f32.mrf.mxu0
    %v2093 = vadd.f32 %v2028, %v2092
    %v2094 = vpop.f32.mrf.mxu0
    %v2095 = vpop.f32.mrf.mxu0
    %v2096 = vadd.f32 %v2031, %v2095
    %v2097 = vpop.f32.mrf.mxu0
    %2098 = vdwg.mxu0
    %s2099 = scalar_lea.vmem %s3, 272
    %v2100 = vld [vmem:[%s2099] sm:$0xf]
    %v2101 = vld [vmem:[%s2099 + $0x4] sm:$0xf]
    %v2102 = vld [vmem:[%s2099 + $0x8] sm:$0xf]
    %v2103 = vld [vmem:[%s2099 + $0xc] sm:$0xf]
    %v2108 = vunpack.c.l.b16 %v2100
    %v2109 = vunpack.c.l.b16 %v2101
    %v2110 = vunpack.c.l.b16 %v2102
    %v2111 = vunpack.c.l.b16 %v2103
    %v2112 = vpack.c.b16 %v2109, %v2108
    %v2113 = vpack.c.b16 %v2111, %v2110
    %v2115 = vsel %vm197, %v2112, 0
    %v2118 = vsel %vm197, %v2113, 0
    %2120 = vmatprep.subr.bf16.mxu0 0
    %2121 = vmatpush1.bf16.msra.mxu0 0
    %2122 = vmatprep.subr.bf16.mxu0 0
    %2123 = vmatpush1.bf16.msra.mxu0 0
    %2124 = vmatprep.subr.bf16.mxu0 0
    %2125 = vmatpush1.bf16.msra.mxu0 0
    %2126 = vmatprep.subr.bf16.mxu0 0
    %2127 = vmatpush1.bf16.msra.mxu0 0
    %2128 = vmatprep.subr.bf16.mxu0 0
    %2129 = vmatpush1.bf16.msra.mxu0 0
    %2130 = vmatprep.subr.bf16.mxu0 0
    %2131 = vmatpush1.bf16.msra.mxu0 0
    %2132 = vmatprep.subr.bf16.mxu0 0
    %2133 = vmatpush1.bf16.msra.mxu0 %v1958
    %2134 = vmatprep.subr.bf16.mxu0 0
    %2135 = vmatpush1.bf16.msra.mxu0 %v1956
    %2136 = vmatprep.subr.bf16.mxu0 0
    %2137 = vmatpush2.bf16.msra.mxu0 0
    %2138 = vmatprep.subr.bf16.mxu0 0
    %2139 = vmatpush2.bf16.msra.mxu0 0
    %2140 = vmatprep.subr.bf16.mxu0 0
    %2141 = vmatpush2.bf16.msra.mxu0 0
    %2142 = vmatprep.subr.bf16.mxu0 0
    %2143 = vmatpush2.bf16.msra.mxu0 0
    %2144 = vmatprep.subr.bf16.mxu0 0
    %2145 = vmatpush2.bf16.msra.mxu0 0
    %2146 = vmatprep.subr.bf16.mxu0 0
    %2147 = vmatpush2.bf16.msra.mxu0 0
    %2148 = vmatprep.subr.bf16.mxu0 0
    %2149 = vmatpush2.bf16.msra.mxu0 0
    %2150 = vmatprep.subr.bf16.mxu0 0
    %2151 = vmatpush2.bf16.msra.mxu0 0
    %2152 = vmatprep.mubr.bf16.mxu0 0
    %2153 = vmatmul.mubr.bf16.gmra.mxu0 %v2115
    %v2154 = vpop.f32.mrf.mxu0
    %v2155 = vadd.f32 0.0, %v2154
    %v2156 = vpop.f32.mrf.mxu0
    %v2157 = vpop.f32.mrf.mxu0
    %v2158 = vadd.f32 0.0, %v2157
    %v2159 = vpop.f32.mrf.mxu0
    %2160 = vmatprep.mubr.bf16.mxu0 0
    %2161 = vmatmul.mubr.bf16.gmra.mxu0 %v2118
    %v2162 = vpop.f32.mrf.mxu0
    %v2163 = vadd.f32 0.0, %v2162
    %v2164 = vpop.f32.mrf.mxu0
    %v2165 = vpop.f32.mrf.mxu0
    %v2166 = vadd.f32 0.0, %v2165
    %v2167 = vpop.f32.mrf.mxu0
    %2168 = vdwg.mxu0
    %v2169 = vadd.f32 %v2085, %v2155
    %v2170 = vadd.f32 %v2088, %v2158
    %v2171 = vadd.f32 %v2093, %v2163
    %v2172 = vadd.f32 %v2096, %v2166
    %s2173 = scalar_lea.vmem %s2, 96
    %v2174 = vld [vmem:[%s2173] sm:$0xff]
    %v2175 = vld [vmem:[%s2173 + $0x8] sm:$0xff]
    %v2176 = vld [vmem:[%s2173 + $0x10] sm:$0xff]
    %v2177 = vld [vmem:[%s2173 + $0x18] sm:$0xff]
    %v2178 = vadd.f32 %v2169, %v2174
    %v2179 = vadd.f32 %v2170, %v2175
    %v2180 = vadd.f32 %v2171, %v2176
    %v2181 = vadd.f32 %v2172, %v2177
    %2182 = vadd.xlane.f32.xlu0 %v2178
    %v2183 = vpop.xlane.xlu0 %2182
    %2184 = vadd.xlane.f32.xlu0 %v2179
    %v2185 = vpop.xlane.xlu0 %2184
    %2186 = vadd.xlane.f32.xlu0 %v2180
    %v2187 = vpop.xlane.xlu0 %2186
    %2188 = vadd.xlane.f32.xlu0 %v2181
    %v2189 = vpop.xlane.xlu0 %2188
    %v2190 = vmul.f32 %v2178, %v2178
    %v2191 = vmul.f32 %v2179, %v2179
    %v2192 = vmul.f32 %v2180, %v2180
    %v2193 = vmul.f32 %v2181, %v2181
    %2194 = vadd.xlane.f32.xlu0 %v2190
    %v2195 = vpop.xlane.xlu0 %2194
    %2196 = vadd.xlane.f32.xlu0 %v2191
    %v2197 = vpop.xlane.xlu0 %2196
    %2198 = vadd.xlane.f32.xlu0 %v2192
    %v2199 = vpop.xlane.xlu0 %2198
    %2200 = vadd.xlane.f32.xlu0 %v2193
    %v2201 = vpop.xlane.xlu0 %2200
    %v2202 = vmul.f32 %v2183, 0.0078125
    %v2203 = vmul.f32 %v2185, 0.0078125
    %v2204 = vmul.f32 %v2187, 0.0078125
    %v2205 = vmul.f32 %v2189, 0.0078125
    %v2206 = vmul.f32 %v2195, 0.0078125
    %v2207 = vmul.f32 %v2197, 0.0078125
    %v2208 = vmul.f32 %v2199, 0.0078125
    %v2209 = vmul.f32 %v2201, 0.0078125
    %v2210 = vmul.f32 %v2202, %v2202
    %v2211 = vmul.f32 %v2203, %v2203
    %v2212 = vmul.f32 %v2204, %v2204
    %v2213 = vmul.f32 %v2205, %v2205
    %v2214 = vsub.f32 %v2206, %v2210
    %v2215 = vsub.f32 %v2207, %v2211
    %v2216 = vsub.f32 %v2208, %v2212
    %v2217 = vsub.f32 %v2209, %v2213
    %v2218 = vsub.f32 %v2178, %v2202
    %v2219 = vsub.f32 %v2179, %v2203
    %v2220 = vsub.f32 %v2180, %v2204
    %v2221 = vsub.f32 %v2181, %v2205
    %v2222 = vadd.f32 %v2214, 1e-05
    %v2223 = vadd.f32 %v2215, 1e-05
    %v2224 = vadd.f32 %v2216, 1e-05
    %v2225 = vadd.f32 %v2217, 1e-05
    %v2226 = vrsqrt.pop %v2222
    %v2227 = vrsqrt.pop %v2223
    %v2228 = vrsqrt.pop %v2224
    %v2229 = vrsqrt.pop %v2225
    %v2230 = vmul.f32 %v2218, %v2226
    %v2231 = vmul.f32 %v2219, %v2227
    %v2232 = vmul.f32 %v2220, %v2228
    %v2233 = vmul.f32 %v2221, %v2229
    %s2234 = scalar_lea.vmem %s3, 288
    %v2235 = vld [vmem:[%s2234] sm:$0xf]
    %v2236 = vld [vmem:[%s2234 + $0x4] sm:$0xf]
    %v2237 = vld [vmem:[%s2234 + $0x8] sm:$0xf]
    %v2238 = vld [vmem:[%s2234 + $0xc] sm:$0xf]
    %v2239 = vpack.c.bf16 %v2231, %v2230
    %v2240 = vpack.c.bf16 %v2233, %v2232
    %v2245 = vunpack.c.l.b16 %v2235
    %v2246 = vunpack.c.l.b16 %v2236
    %v2247 = vunpack.c.l.b16 %v2237
    %v2248 = vunpack.c.l.b16 %v2238
    %v2249 = vpack.c.b16 %v2246, %v2245
    %v2250 = vpack.c.b16 %v2248, %v2247
    %v2252 = vsel %vm197, %v2249, 0
    %v2255 = vsel %vm197, %v2250, 0
    %2257 = vmatprep.subr.bf16.mxu0 0
    %2258 = vmatpush1.bf16.msra.mxu0 0
    %2259 = vmatprep.subr.bf16.mxu0 0
    %2260 = vmatpush1.bf16.msra.mxu0 0
    %2261 = vmatprep.subr.bf16.mxu0 0
    %2262 = vmatpush1.bf16.msra.mxu0 0
    %2263 = vmatprep.subr.bf16.mxu0 0
    %2264 = vmatpush1.bf16.msra.mxu0 0
    %2265 = vmatprep.subr.bf16.mxu0 0
    %2266 = vmatpush1.bf16.msra.mxu0 0
    %2267 = vmatprep.subr.bf16.mxu0 0
    %2268 = vmatpush1.bf16.msra.mxu0 0
    %2269 = vmatprep.subr.bf16.mxu0 0
    %2270 = vmatpush1.bf16.msra.mxu0 %v2240
    %2271 = vmatprep.subr.bf16.mxu0 0
    %2272 = vmatpush1.bf16.msra.mxu0 %v2239
    %2273 = vmatprep.subr.bf16.mxu0 0
    %2274 = vmatpush2.bf16.msra.mxu0 0
    %2275 = vmatprep.subr.bf16.mxu0 0
    %2276 = vmatpush2.bf16.msra.mxu0 0
    %2277 = vmatprep.subr.bf16.mxu0 0
    %2278 = vmatpush2.bf16.msra.mxu0 0
    %2279 = vmatprep.subr.bf16.mxu0 0
    %2280 = vmatpush2.bf16.msra.mxu0 0
    %2281 = vmatprep.subr.bf16.mxu0 0
    %2282 = vmatpush2.bf16.msra.mxu0 0
    %2283 = vmatprep.subr.bf16.mxu0 0
    %2284 = vmatpush2.bf16.msra.mxu0 0
    %2285 = vmatprep.subr.bf16.mxu0 0
    %2286 = vmatpush2.bf16.msra.mxu0 0
    %2287 = vmatprep.subr.bf16.mxu0 0
    %2288 = vmatpush2.bf16.msra.mxu0 0
    %2289 = vmatprep.mubr.bf16.mxu0 0
    %2290 = vmatmul.mubr.bf16.gmra.mxu0 %v2252
    %v2291 = vpop.f32.mrf.mxu0
    %v2292 = vadd.f32 0.0, %v2291
    %v2293 = vpop.f32.mrf.mxu0
    %v2294 = vpop.f32.mrf.mxu0
    %v2295 = vadd.f32 0.0, %v2294
    %v2296 = vpop.f32.mrf.mxu0
    %2297 = vmatprep.mubr.bf16.mxu0 0
    %2298 = vmatmul.mubr.bf16.gmra.mxu0 %v2255
    %v2299 = vpop.f32.mrf.mxu0
    %v2300 = vadd.f32 0.0, %v2299
    %v2301 = vpop.f32.mrf.mxu0
    %v2302 = vpop.f32.mrf.mxu0
    %v2303 = vadd.f32 0.0, %v2302
    %v2304 = vpop.f32.mrf.mxu0
    %2305 = vdwg.mxu0
    %2306 = vadd.xlane.f32.xlu0 %v2292
    %v2307 = vpop.xlane.xlu0 %2306
    %2308 = vadd.xlane.f32.xlu0 %v2295
    %v2309 = vpop.xlane.xlu0 %2308
    %2310 = vadd.xlane.f32.xlu0 %v2300
    %v2311 = vpop.xlane.xlu0 %2310
    %2312 = vadd.xlane.f32.xlu0 %v2303
    %v2313 = vpop.xlane.xlu0 %2312
    %v2314 = vmul.f32 %v2292, %v2292
    %v2315 = vmul.f32 %v2295, %v2295
    %v2316 = vmul.f32 %v2300, %v2300
    %v2317 = vmul.f32 %v2303, %v2303
    %2318 = vadd.xlane.f32.xlu0 %v2314
    %v2319 = vpop.xlane.xlu0 %2318
    %2320 = vadd.xlane.f32.xlu0 %v2315
    %v2321 = vpop.xlane.xlu0 %2320
    %2322 = vadd.xlane.f32.xlu0 %v2316
    %v2323 = vpop.xlane.xlu0 %2322
    %2324 = vadd.xlane.f32.xlu0 %v2317
    %v2325 = vpop.xlane.xlu0 %2324
    %v2326 = vmul.f32 %v2307, 0.0078125
    %v2327 = vmul.f32 %v2309, 0.0078125
    %v2328 = vmul.f32 %v2311, 0.0078125
    %v2329 = vmul.f32 %v2313, 0.0078125
    %v2330 = vmul.f32 %v2319, 0.0078125
    %v2331 = vmul.f32 %v2321, 0.0078125
    %v2332 = vmul.f32 %v2323, 0.0078125
    %v2333 = vmul.f32 %v2325, 0.0078125
    %v2334 = vmul.f32 %v2326, %v2326
    %v2335 = vmul.f32 %v2327, %v2327
    %v2336 = vmul.f32 %v2328, %v2328
    %v2337 = vmul.f32 %v2329, %v2329
    %v2338 = vsub.f32 %v2330, %v2334
    %v2339 = vsub.f32 %v2331, %v2335
    %v2340 = vsub.f32 %v2332, %v2336
    %v2341 = vsub.f32 %v2333, %v2337
    %v2342 = vsub.f32 %v2292, %v2326
    %v2343 = vsub.f32 %v2295, %v2327
    %v2344 = vsub.f32 %v2300, %v2328
    %v2345 = vsub.f32 %v2303, %v2329
    %v2346 = vadd.f32 %v2338, 1e-05
    %v2347 = vadd.f32 %v2339, 1e-05
    %v2348 = vadd.f32 %v2340, 1e-05
    %v2349 = vadd.f32 %v2341, 1e-05
    %v2350 = vrsqrt.pop %v2346
    %v2351 = vrsqrt.pop %v2347
    %v2352 = vrsqrt.pop %v2348
    %v2353 = vrsqrt.pop %v2349
    %v2354 = vmul.f32 %v2342, %v2350
    %v2355 = vmul.f32 %v2343, %v2351
    %v2356 = vmul.f32 %v2344, %v2352
    %v2357 = vmul.f32 %v2345, %v2353
    %v2358 = vmax.f32 %v2354, 0.0
    %v2359 = vmax.f32 %v2355, 0.0
    %v2360 = vmax.f32 %v2356, 0.0
    %v2361 = vmax.f32 %v2357, 0.0
    %s2362 = scalar_lea.vmem %s3, 304
    %v2363 = vld [vmem:[%s2362] sm:$0xf]
    %v2364 = vld [vmem:[%s2362 + $0x4] sm:$0xf]
    %v2365 = vld [vmem:[%s2362 + $0x8] sm:$0xf]
    %v2366 = vld [vmem:[%s2362 + $0xc] sm:$0xf]
    %v2367 = vpack.c.bf16 %v2359, %v2358
    %v2368 = vpack.c.bf16 %v2361, %v2360
    %v2373 = vunpack.c.l.b16 %v2363
    %v2374 = vunpack.c.l.b16 %v2364
    %v2375 = vunpack.c.l.b16 %v2365
    %v2376 = vunpack.c.l.b16 %v2366
    %v2377 = vpack.c.b16 %v2374, %v2373
    %v2378 = vpack.c.b16 %v2376, %v2375
    %v2380 = vsel %vm197, %v2377, 0
    %v2383 = vsel %vm197, %v2378, 0
    %2385 = vmatprep.subr.bf16.mxu0 0
    %2386 = vmatpush1.bf16.msra.mxu0 0
    %2387 = vmatprep.subr.bf16.mxu0 0
    %2388 = vmatpush1.bf16.msra.mxu0 0
    %2389 = vmatprep.subr.bf16.mxu0 0
    %2390 = vmatpush1.bf16.msra.mxu0 0
    %2391 = vmatprep.subr.bf16.mxu0 0
    %2392 = vmatpush1.bf16.msra.mxu0 0
    %2393 = vmatprep.subr.bf16.mxu0 0
    %2394 = vmatpush1.bf16.msra.mxu0 0
    %2395 = vmatprep.subr.bf16.mxu0 0
    %2396 = vmatpush1.bf16.msra.mxu0 0
    %2397 = vmatprep.subr.bf16.mxu0 0
    %2398 = vmatpush1.bf16.msra.mxu0 %v2368
    %2399 = vmatprep.subr.bf16.mxu0 0
    %2400 = vmatpush1.bf16.msra.mxu0 %v2367
    %2401 = vmatprep.subr.bf16.mxu0 0
    %2402 = vmatpush2.bf16.msra.mxu0 0
    %2403 = vmatprep.subr.bf16.mxu0 0
    %2404 = vmatpush2.bf16.msra.mxu0 0
    %2405 = vmatprep.subr.bf16.mxu0 0
    %2406 = vmatpush2.bf16.msra.mxu0 0
    %2407 = vmatprep.subr.bf16.mxu0 0
    %2408 = vmatpush2.bf16.msra.mxu0 0
    %2409 = vmatprep.subr.bf16.mxu0 0
    %2410 = vmatpush2.bf16.msra.mxu0 0
    %2411 = vmatprep.subr.bf16.mxu0 0
    %2412 = vmatpush2.bf16.msra.mxu0 0
    %2413 = vmatprep.subr.bf16.mxu0 0
    %2414 = vmatpush2.bf16.msra.mxu0 0
    %2415 = vmatprep.subr.bf16.mxu0 0
    %2416 = vmatpush2.bf16.msra.mxu0 0
    %2417 = vmatprep.mubr.bf16.mxu0 0
    %2418 = vmatmul.mubr.bf16.gmra.mxu0 %v2380
    %v2419 = vpop.f32.mrf.mxu0
    %v2420 = vadd.f32 0.0, %v2419
    %v2421 = vpop.f32.mrf.mxu0
    %v2422 = vpop.f32.mrf.mxu0
    %v2423 = vadd.f32 0.0, %v2422
    %v2424 = vpop.f32.mrf.mxu0
    %2425 = vmatprep.mubr.bf16.mxu0 0
    %2426 = vmatmul.mubr.bf16.gmra.mxu0 %v2383
    %v2427 = vpop.f32.mrf.mxu0
    %v2428 = vadd.f32 0.0, %v2427
    %v2429 = vpop.f32.mrf.mxu0
    %v2430 = vpop.f32.mrf.mxu0
    %v2431 = vadd.f32 0.0, %v2430
    %v2432 = vpop.f32.mrf.mxu0
    %2433 = vdwg.mxu0
    %2434 = vadd.xlane.f32.xlu0 %v2420
    %v2435 = vpop.xlane.xlu0 %2434
    %2436 = vadd.xlane.f32.xlu0 %v2423
    %v2437 = vpop.xlane.xlu0 %2436
    %2438 = vadd.xlane.f32.xlu0 %v2428
    %v2439 = vpop.xlane.xlu0 %2438
    %2440 = vadd.xlane.f32.xlu0 %v2431
    %v2441 = vpop.xlane.xlu0 %2440
    %v2442 = vmul.f32 %v2420, %v2420
    %v2443 = vmul.f32 %v2423, %v2423
    %v2444 = vmul.f32 %v2428, %v2428
    %v2445 = vmul.f32 %v2431, %v2431
    %2446 = vadd.xlane.f32.xlu0 %v2442
    %v2447 = vpop.xlane.xlu0 %2446
    %2448 = vadd.xlane.f32.xlu0 %v2443
    %v2449 = vpop.xlane.xlu0 %2448
    %2450 = vadd.xlane.f32.xlu0 %v2444
    %v2451 = vpop.xlane.xlu0 %2450
    %2452 = vadd.xlane.f32.xlu0 %v2445
    %v2453 = vpop.xlane.xlu0 %2452
    %v2454 = vmul.f32 %v2435, 0.0078125
    %v2455 = vmul.f32 %v2437, 0.0078125
    %v2456 = vmul.f32 %v2439, 0.0078125
    %v2457 = vmul.f32 %v2441, 0.0078125
    %v2458 = vmul.f32 %v2447, 0.0078125
    %v2459 = vmul.f32 %v2449, 0.0078125
    %v2460 = vmul.f32 %v2451, 0.0078125
    %v2461 = vmul.f32 %v2453, 0.0078125
    %v2462 = vmul.f32 %v2454, %v2454
    %v2463 = vmul.f32 %v2455, %v2455
    %v2464 = vmul.f32 %v2456, %v2456
    %v2465 = vmul.f32 %v2457, %v2457
    %v2466 = vsub.f32 %v2458, %v2462
    %v2467 = vsub.f32 %v2459, %v2463
    %v2468 = vsub.f32 %v2460, %v2464
    %v2469 = vsub.f32 %v2461, %v2465
    %v2470 = vsub.f32 %v2420, %v2454
    %v2471 = vsub.f32 %v2423, %v2455
    %v2472 = vsub.f32 %v2428, %v2456
    %v2473 = vsub.f32 %v2431, %v2457
    %v2474 = vadd.f32 %v2466, 1e-05
    %v2475 = vadd.f32 %v2467, 1e-05
    %v2476 = vadd.f32 %v2468, 1e-05
    %v2477 = vadd.f32 %v2469, 1e-05
    %v2478 = vrsqrt.pop %v2474
    %v2479 = vrsqrt.pop %v2475
    %v2480 = vrsqrt.pop %v2476
    %v2481 = vrsqrt.pop %v2477
    %v2482 = vmul.f32 %v2470, %v2478
    %v2483 = vmul.f32 %v2471, %v2479
    %v2484 = vmul.f32 %v2472, %v2480
    %v2485 = vmul.f32 %v2473, %v2481
    %v2486 = vmax.f32 %v2482, 0.0
    %v2487 = vmax.f32 %v2483, 0.0
    %v2488 = vmax.f32 %v2484, 0.0
    %v2489 = vmax.f32 %v2485, 0.0
    %v2490 = vadd.f32 %v2230, %v2486
    %v2491 = vadd.f32 %v2231, %v2487
    %v2492 = vadd.f32 %v2232, %v2488
    %v2493 = vadd.f32 %v2233, %v2489
    %v2494 = vpack.c.bf16 %v2491, %v2490
    %v2495 = vpack.c.bf16 %v2493, %v2492
    %2496 = vmatprep.subr.bf16.mxu0 %v104
    %2497 = vmatpush1.bf16.msra.mxu0 %v103
    %2498 = vmatprep.subr.bf16.mxu0 %v102
    %2499 = vmatpush1.bf16.msra.mxu0 %v101
    %2500 = vmatprep.subr.bf16.mxu0 %v100
    %2501 = vmatpush1.bf16.msra.mxu0 %v99
    %2502 = vmatprep.subr.bf16.mxu0 %v98
    %2503 = vmatpush1.bf16.msra.mxu0 %v97
    %2504 = vmatprep.subr.bf16.mxu0 %v96
    %2505 = vmatpush1.bf16.msra.mxu0 %v95
    %2506 = vmatprep.subr.bf16.mxu0 %v94
    %2507 = vmatpush1.bf16.msra.mxu0 %v93
    %2508 = vmatprep.subr.bf16.mxu0 %v92
    %2509 = vmatpush1.bf16.msra.mxu0 %v91
    %2510 = vmatprep.subr.bf16.mxu0 %v90
    %2511 = vmatpush1.bf16.msra.mxu0 %v89
    %2512 = vmatprep.subr.bf16.mxu0 0
    %2513 = vmatpush2.bf16.msra.mxu0 0
    %2514 = vmatprep.subr.bf16.mxu0 0
    %2515 = vmatpush2.bf16.msra.mxu0 0
    %2516 = vmatprep.subr.bf16.mxu0 0
    %2517 = vmatpush2.bf16.msra.mxu0 0
    %2518 = vmatprep.subr.bf16.mxu0 0
    %2519 = vmatpush2.bf16.msra.mxu0 0
    %2520 = vmatprep.subr.bf16.mxu0 0
    %2521 = vmatpush2.bf16.msra.mxu0 0
    %2522 = vmatprep.subr.bf16.mxu0 0
    %2523 = vmatpush2.bf16.msra.mxu0 0
    %2524 = vmatprep.subr.bf16.mxu0 0
    %2525 = vmatpush2.bf16.msra.mxu0 0
    %2526 = vmatprep.subr.bf16.mxu0 0
    %2527 = vmatpush2.bf16.msra.mxu0 0
    %2528 = vmatprep.mubr.bf16.mxu0 0
    %2529 = vmatmul.mubr.bf16.gmra.mxu0 %v2494
    %v2530 = vpop.f32.mrf.mxu0
    %v2531 = vadd.f32 0.0, %v2530
    %v2532 = vpop.f32.mrf.mxu0
    %v2533 = vadd.f32 0.0, %v2532
    %v2534 = vpop.f32.mrf.mxu0
    %v2535 = vadd.f32 0.0, %v2534
    %v2536 = vpop.f32.mrf.mxu0
    %v2537 = vadd.f32 0.0, %v2536
    %2538 = vmatprep.mubr.bf16.mxu0 0
    %2539 = vmatmul.mubr.bf16.gmra.mxu0 %v2495
    %v2540 = vpop.f32.mrf.mxu0
    %v2541 = vadd.f32 0.0, %v2540
    %v2542 = vpop.f32.mrf.mxu0
    %v2543 = vadd.f32 0.0, %v2542
    %v2544 = vpop.f32.mrf.mxu0
    %v2545 = vadd.f32 0.0, %v2544
    %v2546 = vpop.f32.mrf.mxu0
    %v2547 = vadd.f32 0.0, %v2546
    %2548 = vdwg.mxu0
    %v2549 = vpack.c.bf16 %v2535, %v2531
    %v2550 = vpack.c.bf16 %v2537, %v2533
    %v2551 = vpack.c.bf16 %v2545, %v2541
    %v2552 = vpack.c.bf16 %v2547, %v2543
    %s2553 = scalar_lea.vmem %s3, 320
    %v2554 = vld [vmem:[%s2553] sm:$0xf]
    %v2555 = vld [vmem:[%s2553 + $0x4] sm:$0xf]
    %v2556 = vld [vmem:[%s2553 + $0x8] sm:$0xf]
    %v2557 = vld [vmem:[%s2553 + $0xc] sm:$0xf]
    %s2558 = scalar_lea.vmem %s3, 336
    %v2559 = vld [vmem:[%s2558] sm:$0xf]
    %v2560 = vld [vmem:[%s2558 + $0x4] sm:$0xf]
    %v2561 = vld [vmem:[%s2558 + $0x8] sm:$0xf]
    %v2562 = vld [vmem:[%s2558 + $0xc] sm:$0xf]
    %v2567 = vunpack.c.l.b16 %v2559
    %v2568 = vunpack.c.l.b16 %v2560
    %v2569 = vunpack.c.l.b16 %v2561
    %v2570 = vunpack.c.l.b16 %v2562
    %v2571 = vpack.c.b16 %v2568, %v2567
    %v2572 = vpack.c.b16 %v2570, %v2569
    %v2574 = vsel %vm197, %v2571, 0
    %v2577 = vsel %vm197, %v2572, 0
    %2579 = vmatprep.subr.bf16.mxu0 0
    %2580 = vmatpush1.bf16.msra.mxu0 0
    %2581 = vmatprep.subr.bf16.mxu0 0
    %2582 = vmatpush1.bf16.msra.mxu0 0
    %2583 = vmatprep.subr.bf16.mxu0 0
    %2584 = vmatpush1.bf16.msra.mxu0 0
    %2585 = vmatprep.subr.bf16.mxu0 0
    %2586 = vmatpush1.bf16.msra.mxu0 0
    %2587 = vmatprep.subr.bf16.mxu0 0
    %2588 = vmatpush1.bf16.msra.mxu0 0
    %2589 = vmatprep.subr.bf16.mxu0 0
    %2590 = vmatpush1.bf16.msra.mxu0 0
    %2591 = vmatprep.subr.bf16.mxu0 0
    %2592 = vmatpush1.bf16.msra.mxu0 %v2551
    %2593 = vmatprep.subr.bf16.mxu0 0
    %2594 = vmatpush1.bf16.msra.mxu0 %v2549
    %2595 = vmatprep.subr.bf16.mxu0 0
    %2596 = vmatpush2.bf16.msra.mxu0 0
    %2597 = vmatprep.subr.bf16.mxu0 0
    %2598 = vmatpush2.bf16.msra.mxu0 0
    %2599 = vmatprep.subr.bf16.mxu0 0
    %2600 = vmatpush2.bf16.msra.mxu0 0
    %2601 = vmatprep.subr.bf16.mxu0 0
    %2602 = vmatpush2.bf16.msra.mxu0 0
    %2603 = vmatprep.subr.bf16.mxu0 0
    %2604 = vmatpush2.bf16.msra.mxu0 0
    %2605 = vmatprep.subr.bf16.mxu0 0
    %2606 = vmatpush2.bf16.msra.mxu0 0
    %2607 = vmatprep.subr.bf16.mxu0 0
    %2608 = vmatpush2.bf16.msra.mxu0 0
    %2609 = vmatprep.subr.bf16.mxu0 0
    %2610 = vmatpush2.bf16.msra.mxu0 0
    %2611 = vmatprep.mubr.bf16.mxu0 0
    %2612 = vmatmul.mubr.bf16.gmra.mxu0 %v2574
    %v2613 = vpop.f32.mrf.mxu0
    %v2614 = vadd.f32 0.0, %v2613
    %v2615 = vpop.f32.mrf.mxu0
    %v2616 = vpop.f32.mrf.mxu0
    %v2617 = vadd.f32 0.0, %v2616
    %v2618 = vpop.f32.mrf.mxu0
    %2619 = vmatprep.mubr.bf16.mxu0 0
    %2620 = vmatmul.mubr.bf16.gmra.mxu0 %v2577
    %v2621 = vpop.f32.mrf.mxu0
    %v2622 = vadd.f32 0.0, %v2621
    %v2623 = vpop.f32.mrf.mxu0
    %v2624 = vpop.f32.mrf.mxu0
    %v2625 = vadd.f32 0.0, %v2624
    %v2626 = vpop.f32.mrf.mxu0
    %2627 = vdwg.mxu0
    %v2632 = vunpack.c.l.b16 %v2554
    %v2633 = vunpack.c.l.b16 %v2555
    %v2634 = vunpack.c.l.b16 %v2556
    %v2635 = vunpack.c.l.b16 %v2557
    %v2636 = vpack.c.b16 %v2633, %v2632
    %v2637 = vpack.c.b16 %v2635, %v2634
    %v2639 = vsel %vm197, %v2636, 0
    %v2642 = vsel %vm197, %v2637, 0
    %2644 = vmatprep.subr.bf16.mxu0 0
    %2645 = vmatpush1.bf16.msra.mxu0 0
    %2646 = vmatprep.subr.bf16.mxu0 0
    %2647 = vmatpush1.bf16.msra.mxu0 0
    %2648 = vmatprep.subr.bf16.mxu0 0
    %2649 = vmatpush1.bf16.msra.mxu0 0
    %2650 = vmatprep.subr.bf16.mxu0 0
    %2651 = vmatpush1.bf16.msra.mxu0 0
    %2652 = vmatprep.subr.bf16.mxu0 0
    %2653 = vmatpush1.bf16.msra.mxu0 0
    %2654 = vmatprep.subr.bf16.mxu0 0
    %2655 = vmatpush1.bf16.msra.mxu0 0
    %2656 = vmatprep.subr.bf16.mxu0 0
    %2657 = vmatpush1.bf16.msra.mxu0 %v2495
    %2658 = vmatprep.subr.bf16.mxu0 0
    %2659 = vmatpush1.bf16.msra.mxu0 %v2494
    %2660 = vmatprep.subr.bf16.mxu0 0
    %2661 = vmatpush2.bf16.msra.mxu0 0
    %2662 = vmatprep.subr.bf16.mxu0 0
    %2663 = vmatpush2.bf16.msra.mxu0 0
    %2664 = vmatprep.subr.bf16.mxu0 0
    %2665 = vmatpush2.bf16.msra.mxu0 0
    %2666 = vmatprep.subr.bf16.mxu0 0
    %2667 = vmatpush2.bf16.msra.mxu0 0
    %2668 = vmatprep.subr.bf16.mxu0 0
    %2669 = vmatpush2.bf16.msra.mxu0 0
    %2670 = vmatprep.subr.bf16.mxu0 0
    %2671 = vmatpush2.bf16.msra.mxu0 0
    %2672 = vmatprep.subr.bf16.mxu0 0
    %2673 = vmatpush2.bf16.msra.mxu0 0
    %2674 = vmatprep.subr.bf16.mxu0 0
    %2675 = vmatpush2.bf16.msra.mxu0 0
    %2676 = vmatprep.mubr.bf16.mxu0 0
    %2677 = vmatmul.mubr.bf16.gmra.mxu0 %v2639
    %v2678 = vpop.f32.mrf.mxu0
    %v2679 = vadd.f32 %v2614, %v2678
    %v2680 = vpop.f32.mrf.mxu0
    %v2681 = vpop.f32.mrf.mxu0
    %v2682 = vadd.f32 %v2617, %v2681
    %v2683 = vpop.f32.mrf.mxu0
    %2684 = vmatprep.mubr.bf16.mxu0 0
    %2685 = vmatmul.mubr.bf16.gmra.mxu0 %v2642
    %v2686 = vpop.f32.mrf.mxu0
    %v2687 = vadd.f32 %v2622, %v2686
    %v2688 = vpop.f32.mrf.mxu0
    %v2689 = vpop.f32.mrf.mxu0
    %v2690 = vadd.f32 %v2625, %v2689
    %v2691 = vpop.f32.mrf.mxu0
    %2692 = vdwg.mxu0
    %s2693 = scalar_lea.vmem %s3, 352
    %v2694 = vld [vmem:[%s2693] sm:$0xf]
    %v2695 = vld [vmem:[%s2693 + $0x4] sm:$0xf]
    %v2696 = vld [vmem:[%s2693 + $0x8] sm:$0xf]
    %v2697 = vld [vmem:[%s2693 + $0xc] sm:$0xf]
    %v2702 = vunpack.c.l.b16 %v2694
    %v2703 = vunpack.c.l.b16 %v2695
    %v2704 = vunpack.c.l.b16 %v2696
    %v2705 = vunpack.c.l.b16 %v2697
    %v2706 = vpack.c.b16 %v2703, %v2702
    %v2707 = vpack.c.b16 %v2705, %v2704
    %v2709 = vsel %vm197, %v2706, 0
    %v2712 = vsel %vm197, %v2707, 0
    %2714 = vmatprep.subr.bf16.mxu0 0
    %2715 = vmatpush1.bf16.msra.mxu0 0
    %2716 = vmatprep.subr.bf16.mxu0 0
    %2717 = vmatpush1.bf16.msra.mxu0 0
    %2718 = vmatprep.subr.bf16.mxu0 0
    %2719 = vmatpush1.bf16.msra.mxu0 0
    %2720 = vmatprep.subr.bf16.mxu0 0
    %2721 = vmatpush1.bf16.msra.mxu0 0
    %2722 = vmatprep.subr.bf16.mxu0 0
    %2723 = vmatpush1.bf16.msra.mxu0 0
    %2724 = vmatprep.subr.bf16.mxu0 0
    %2725 = vmatpush1.bf16.msra.mxu0 0
    %2726 = vmatprep.subr.bf16.mxu0 0
    %2727 = vmatpush1.bf16.msra.mxu0 %v2552
    %2728 = vmatprep.subr.bf16.mxu0 0
    %2729 = vmatpush1.bf16.msra.mxu0 %v2550
    %2730 = vmatprep.subr.bf16.mxu0 0
    %2731 = vmatpush2.bf16.msra.mxu0 0
    %2732 = vmatprep.subr.bf16.mxu0 0
    %2733 = vmatpush2.bf16.msra.mxu0 0
    %2734 = vmatprep.subr.bf16.mxu0 0
    %2735 = vmatpush2.bf16.msra.mxu0 0
    %2736 = vmatprep.subr.bf16.mxu0 0
    %2737 = vmatpush2.bf16.msra.mxu0 0
    %2738 = vmatprep.subr.bf16.mxu0 0
    %2739 = vmatpush2.bf16.msra.mxu0 0
    %2740 = vmatprep.subr.bf16.mxu0 0
    %2741 = vmatpush2.bf16.msra.mxu0 0
    %2742 = vmatprep.subr.bf16.mxu0 0
    %2743 = vmatpush2.bf16.msra.mxu0 0
    %2744 = vmatprep.subr.bf16.mxu0 0
    %2745 = vmatpush2.bf16.msra.mxu0 0
    %2746 = vmatprep.mubr.bf16.mxu0 0
    %2747 = vmatmul.mubr.bf16.gmra.mxu0 %v2709
    %v2748 = vpop.f32.mrf.mxu0
    %v2749 = vadd.f32 0.0, %v2748
    %v2750 = vpop.f32.mrf.mxu0
    %v2751 = vpop.f32.mrf.mxu0
    %v2752 = vadd.f32 0.0, %v2751
    %v2753 = vpop.f32.mrf.mxu0
    %2754 = vmatprep.mubr.bf16.mxu0 0
    %2755 = vmatmul.mubr.bf16.gmra.mxu0 %v2712
    %v2756 = vpop.f32.mrf.mxu0
    %v2757 = vadd.f32 0.0, %v2756
    %v2758 = vpop.f32.mrf.mxu0
    %v2759 = vpop.f32.mrf.mxu0
    %v2760 = vadd.f32 0.0, %v2759
    %v2761 = vpop.f32.mrf.mxu0
    %2762 = vdwg.mxu0
    %v2763 = vadd.f32 %v2679, %v2749
    %v2764 = vadd.f32 %v2682, %v2752
    %v2765 = vadd.f32 %v2687, %v2757
    %v2766 = vadd.f32 %v2690, %v2760
    %s2767 = scalar_lea.vmem %s2, 128
    %v2768 = vld [vmem:[%s2767] sm:$0xff]
    %v2769 = vld [vmem:[%s2767 + $0x8] sm:$0xff]
    %v2770 = vld [vmem:[%s2767 + $0x10] sm:$0xff]
    %v2771 = vld [vmem:[%s2767 + $0x18] sm:$0xff]
    %v2772 = vadd.f32 %v2763, %v2768
    %v2773 = vadd.f32 %v2764, %v2769
    %v2774 = vadd.f32 %v2765, %v2770
    %v2775 = vadd.f32 %v2766, %v2771
    %2776 = vadd.xlane.f32.xlu0 %v2772
    %v2777 = vpop.xlane.xlu0 %2776
    %2778 = vadd.xlane.f32.xlu0 %v2773
    %v2779 = vpop.xlane.xlu0 %2778
    %2780 = vadd.xlane.f32.xlu0 %v2774
    %v2781 = vpop.xlane.xlu0 %2780
    %2782 = vadd.xlane.f32.xlu0 %v2775
    %v2783 = vpop.xlane.xlu0 %2782
    %v2784 = vmul.f32 %v2772, %v2772
    %v2785 = vmul.f32 %v2773, %v2773
    %v2786 = vmul.f32 %v2774, %v2774
    %v2787 = vmul.f32 %v2775, %v2775
    %2788 = vadd.xlane.f32.xlu0 %v2784
    %v2789 = vpop.xlane.xlu0 %2788
    %2790 = vadd.xlane.f32.xlu0 %v2785
    %v2791 = vpop.xlane.xlu0 %2790
    %2792 = vadd.xlane.f32.xlu0 %v2786
    %v2793 = vpop.xlane.xlu0 %2792
    %2794 = vadd.xlane.f32.xlu0 %v2787
    %v2795 = vpop.xlane.xlu0 %2794
    %v2796 = vmul.f32 %v2777, 0.0078125
    %v2797 = vmul.f32 %v2779, 0.0078125
    %v2798 = vmul.f32 %v2781, 0.0078125
    %v2799 = vmul.f32 %v2783, 0.0078125
    %v2800 = vmul.f32 %v2789, 0.0078125
    %v2801 = vmul.f32 %v2791, 0.0078125
    %v2802 = vmul.f32 %v2793, 0.0078125
    %v2803 = vmul.f32 %v2795, 0.0078125
    %v2804 = vmul.f32 %v2796, %v2796
    %v2805 = vmul.f32 %v2797, %v2797
    %v2806 = vmul.f32 %v2798, %v2798
    %v2807 = vmul.f32 %v2799, %v2799
    %v2808 = vsub.f32 %v2800, %v2804
    %v2809 = vsub.f32 %v2801, %v2805
    %v2810 = vsub.f32 %v2802, %v2806
    %v2811 = vsub.f32 %v2803, %v2807
    %v2812 = vsub.f32 %v2772, %v2796
    %v2813 = vsub.f32 %v2773, %v2797
    %v2814 = vsub.f32 %v2774, %v2798
    %v2815 = vsub.f32 %v2775, %v2799
    %v2816 = vadd.f32 %v2808, 1e-05
    %v2817 = vadd.f32 %v2809, 1e-05
    %v2818 = vadd.f32 %v2810, 1e-05
    %v2819 = vadd.f32 %v2811, 1e-05
    %v2820 = vrsqrt.pop %v2816
    %v2821 = vrsqrt.pop %v2817
    %v2822 = vrsqrt.pop %v2818
    %v2823 = vrsqrt.pop %v2819
    %v2824 = vmul.f32 %v2812, %v2820
    %v2825 = vmul.f32 %v2813, %v2821
    %v2826 = vmul.f32 %v2814, %v2822
    %v2827 = vmul.f32 %v2815, %v2823
    %s2828 = scalar_lea.vmem %s3, 368
    %v2829 = vld [vmem:[%s2828] sm:$0xf]
    %v2830 = vld [vmem:[%s2828 + $0x4] sm:$0xf]
    %v2831 = vld [vmem:[%s2828 + $0x8] sm:$0xf]
    %v2832 = vld [vmem:[%s2828 + $0xc] sm:$0xf]
    %v2833 = vpack.c.bf16 %v2825, %v2824
    %v2834 = vpack.c.bf16 %v2827, %v2826
    %v2839 = vunpack.c.l.b16 %v2829
    %v2840 = vunpack.c.l.b16 %v2830
    %v2841 = vunpack.c.l.b16 %v2831
    %v2842 = vunpack.c.l.b16 %v2832
    %v2843 = vpack.c.b16 %v2840, %v2839
    %v2844 = vpack.c.b16 %v2842, %v2841
    %v2846 = vsel %vm197, %v2843, 0
    %v2849 = vsel %vm197, %v2844, 0
    %2851 = vmatprep.subr.bf16.mxu0 0
    %2852 = vmatpush1.bf16.msra.mxu0 0
    %2853 = vmatprep.subr.bf16.mxu0 0
    %2854 = vmatpush1.bf16.msra.mxu0 0
    %2855 = vmatprep.subr.bf16.mxu0 0
    %2856 = vmatpush1.bf16.msra.mxu0 0
    %2857 = vmatprep.subr.bf16.mxu0 0
    %2858 = vmatpush1.bf16.msra.mxu0 0
    %2859 = vmatprep.subr.bf16.mxu0 0
    %2860 = vmatpush1.bf16.msra.mxu0 0
    %2861 = vmatprep.subr.bf16.mxu0 0
    %2862 = vmatpush1.bf16.msra.mxu0 0
    %2863 = vmatprep.subr.bf16.mxu0 0
    %2864 = vmatpush1.bf16.msra.mxu0 %v2834
    %2865 = vmatprep.subr.bf16.mxu0 0
    %2866 = vmatpush1.bf16.msra.mxu0 %v2833
    %2867 = vmatprep.subr.bf16.mxu0 0
    %2868 = vmatpush2.bf16.msra.mxu0 0
    %2869 = vmatprep.subr.bf16.mxu0 0
    %2870 = vmatpush2.bf16.msra.mxu0 0
    %2871 = vmatprep.subr.bf16.mxu0 0
    %2872 = vmatpush2.bf16.msra.mxu0 0
    %2873 = vmatprep.subr.bf16.mxu0 0
    %2874 = vmatpush2.bf16.msra.mxu0 0
    %2875 = vmatprep.subr.bf16.mxu0 0
    %2876 = vmatpush2.bf16.msra.mxu0 0
    %2877 = vmatprep.subr.bf16.mxu0 0
    %2878 = vmatpush2.bf16.msra.mxu0 0
    %2879 = vmatprep.subr.bf16.mxu0 0
    %2880 = vmatpush2.bf16.msra.mxu0 0
    %2881 = vmatprep.subr.bf16.mxu0 0
    %2882 = vmatpush2.bf16.msra.mxu0 0
    %2883 = vmatprep.mubr.bf16.mxu0 0
    %2884 = vmatmul.mubr.bf16.gmra.mxu0 %v2846
    %v2885 = vpop.f32.mrf.mxu0
    %v2886 = vadd.f32 0.0, %v2885
    %v2887 = vpop.f32.mrf.mxu0
    %v2888 = vpop.f32.mrf.mxu0
    %v2889 = vadd.f32 0.0, %v2888
    %v2890 = vpop.f32.mrf.mxu0
    %2891 = vmatprep.mubr.bf16.mxu0 0
    %2892 = vmatmul.mubr.bf16.gmra.mxu0 %v2849
    %v2893 = vpop.f32.mrf.mxu0
    %v2894 = vadd.f32 0.0, %v2893
    %v2895 = vpop.f32.mrf.mxu0
    %v2896 = vpop.f32.mrf.mxu0
    %v2897 = vadd.f32 0.0, %v2896
    %v2898 = vpop.f32.mrf.mxu0
    %2899 = vdwg.mxu0
    %2900 = vadd.xlane.f32.xlu0 %v2886
    %v2901 = vpop.xlane.xlu0 %2900
    %2902 = vadd.xlane.f32.xlu0 %v2889
    %v2903 = vpop.xlane.xlu0 %2902
    %2904 = vadd.xlane.f32.xlu0 %v2894
    %v2905 = vpop.xlane.xlu0 %2904
    %2906 = vadd.xlane.f32.xlu0 %v2897
    %v2907 = vpop.xlane.xlu0 %2906
    %v2908 = vmul.f32 %v2886, %v2886
    %v2909 = vmul.f32 %v2889, %v2889
    %v2910 = vmul.f32 %v2894, %v2894
    %v2911 = vmul.f32 %v2897, %v2897
    %2912 = vadd.xlane.f32.xlu0 %v2908
    %v2913 = vpop.xlane.xlu0 %2912
    %2914 = vadd.xlane.f32.xlu0 %v2909
    %v2915 = vpop.xlane.xlu0 %2914
    %2916 = vadd.xlane.f32.xlu0 %v2910
    %v2917 = vpop.xlane.xlu0 %2916
    %2918 = vadd.xlane.f32.xlu0 %v2911
    %v2919 = vpop.xlane.xlu0 %2918
    %v2920 = vmul.f32 %v2901, 0.0078125
    %v2921 = vmul.f32 %v2903, 0.0078125
    %v2922 = vmul.f32 %v2905, 0.0078125
    %v2923 = vmul.f32 %v2907, 0.0078125
    %v2924 = vmul.f32 %v2913, 0.0078125
    %v2925 = vmul.f32 %v2915, 0.0078125
    %v2926 = vmul.f32 %v2917, 0.0078125
    %v2927 = vmul.f32 %v2919, 0.0078125
    %v2928 = vmul.f32 %v2920, %v2920
    %v2929 = vmul.f32 %v2921, %v2921
    %v2930 = vmul.f32 %v2922, %v2922
    %v2931 = vmul.f32 %v2923, %v2923
    %v2932 = vsub.f32 %v2924, %v2928
    %v2933 = vsub.f32 %v2925, %v2929
    %v2934 = vsub.f32 %v2926, %v2930
    %v2935 = vsub.f32 %v2927, %v2931
    %v2936 = vsub.f32 %v2886, %v2920
    %v2937 = vsub.f32 %v2889, %v2921
    %v2938 = vsub.f32 %v2894, %v2922
    %v2939 = vsub.f32 %v2897, %v2923
    %v2940 = vadd.f32 %v2932, 1e-05
    %v2941 = vadd.f32 %v2933, 1e-05
    %v2942 = vadd.f32 %v2934, 1e-05
    %v2943 = vadd.f32 %v2935, 1e-05
    %v2944 = vrsqrt.pop %v2940
    %v2945 = vrsqrt.pop %v2941
    %v2946 = vrsqrt.pop %v2942
    %v2947 = vrsqrt.pop %v2943
    %v2948 = vmul.f32 %v2936, %v2944
    %v2949 = vmul.f32 %v2937, %v2945
    %v2950 = vmul.f32 %v2938, %v2946
    %v2951 = vmul.f32 %v2939, %v2947
    %v2952 = vmax.f32 %v2948, 0.0
    %v2953 = vmax.f32 %v2949, 0.0
    %v2954 = vmax.f32 %v2950, 0.0
    %v2955 = vmax.f32 %v2951, 0.0
    %s2956 = scalar_lea.vmem %s3, 384
    %v2957 = vld [vmem:[%s2956] sm:$0xf]
    %v2958 = vld [vmem:[%s2956 + $0x4] sm:$0xf]
    %v2959 = vld [vmem:[%s2956 + $0x8] sm:$0xf]
    %v2960 = vld [vmem:[%s2956 + $0xc] sm:$0xf]
    %v2961 = vpack.c.bf16 %v2953, %v2952
    %v2962 = vpack.c.bf16 %v2955, %v2954
    %v2967 = vunpack.c.l.b16 %v2957
    %v2968 = vunpack.c.l.b16 %v2958
    %v2969 = vunpack.c.l.b16 %v2959
    %v2970 = vunpack.c.l.b16 %v2960
    %v2971 = vpack.c.b16 %v2968, %v2967
    %v2972 = vpack.c.b16 %v2970, %v2969
    %v2974 = vsel %vm197, %v2971, 0
    %v2977 = vsel %vm197, %v2972, 0
    %2979 = vmatprep.subr.bf16.mxu0 0
    %2980 = vmatpush1.bf16.msra.mxu0 0
    %2981 = vmatprep.subr.bf16.mxu0 0
    %2982 = vmatpush1.bf16.msra.mxu0 0
    %2983 = vmatprep.subr.bf16.mxu0 0
    %2984 = vmatpush1.bf16.msra.mxu0 0
    %2985 = vmatprep.subr.bf16.mxu0 0
    %2986 = vmatpush1.bf16.msra.mxu0 0
    %2987 = vmatprep.subr.bf16.mxu0 0
    %2988 = vmatpush1.bf16.msra.mxu0 0
    %2989 = vmatprep.subr.bf16.mxu0 0
    %2990 = vmatpush1.bf16.msra.mxu0 0
    %2991 = vmatprep.subr.bf16.mxu0 0
    %2992 = vmatpush1.bf16.msra.mxu0 %v2962
    %2993 = vmatprep.subr.bf16.mxu0 0
    %2994 = vmatpush1.bf16.msra.mxu0 %v2961
    %2995 = vmatprep.subr.bf16.mxu0 0
    %2996 = vmatpush2.bf16.msra.mxu0 0
    %2997 = vmatprep.subr.bf16.mxu0 0
    %2998 = vmatpush2.bf16.msra.mxu0 0
    %2999 = vmatprep.subr.bf16.mxu0 0
    %3000 = vmatpush2.bf16.msra.mxu0 0
    %3001 = vmatprep.subr.bf16.mxu0 0
    %3002 = vmatpush2.bf16.msra.mxu0 0
    %3003 = vmatprep.subr.bf16.mxu0 0
    %3004 = vmatpush2.bf16.msra.mxu0 0
    %3005 = vmatprep.subr.bf16.mxu0 0
    %3006 = vmatpush2.bf16.msra.mxu0 0
    %3007 = vmatprep.subr.bf16.mxu0 0
    %3008 = vmatpush2.bf16.msra.mxu0 0
    %3009 = vmatprep.subr.bf16.mxu0 0
    %3010 = vmatpush2.bf16.msra.mxu0 0
    %3011 = vmatprep.mubr.bf16.mxu0 0
    %3012 = vmatmul.mubr.bf16.gmra.mxu0 %v2974
    %v3013 = vpop.f32.mrf.mxu0
    %v3014 = vadd.f32 0.0, %v3013
    %v3015 = vpop.f32.mrf.mxu0
    %v3016 = vpop.f32.mrf.mxu0
    %v3017 = vadd.f32 0.0, %v3016
    %v3018 = vpop.f32.mrf.mxu0
    %3019 = vmatprep.mubr.bf16.mxu0 0
    %3020 = vmatmul.mubr.bf16.gmra.mxu0 %v2977
    %v3021 = vpop.f32.mrf.mxu0
    %v3022 = vadd.f32 0.0, %v3021
    %v3023 = vpop.f32.mrf.mxu0
    %v3024 = vpop.f32.mrf.mxu0
    %v3025 = vadd.f32 0.0, %v3024
    %v3026 = vpop.f32.mrf.mxu0
    %3027 = vdwg.mxu0
    %3028 = vadd.xlane.f32.xlu0 %v3014
    %v3029 = vpop.xlane.xlu0 %3028
    %3030 = vadd.xlane.f32.xlu0 %v3017
    %v3031 = vpop.xlane.xlu0 %3030
    %3032 = vadd.xlane.f32.xlu0 %v3022
    %v3033 = vpop.xlane.xlu0 %3032
    %3034 = vadd.xlane.f32.xlu0 %v3025
    %v3035 = vpop.xlane.xlu0 %3034
    %v3036 = vmul.f32 %v3014, %v3014
    %v3037 = vmul.f32 %v3017, %v3017
    %v3038 = vmul.f32 %v3022, %v3022
    %v3039 = vmul.f32 %v3025, %v3025
    %3040 = vadd.xlane.f32.xlu0 %v3036
    %v3041 = vpop.xlane.xlu0 %3040
    %3042 = vadd.xlane.f32.xlu0 %v3037
    %v3043 = vpop.xlane.xlu0 %3042
    %3044 = vadd.xlane.f32.xlu0 %v3038
    %v3045 = vpop.xlane.xlu0 %3044
    %3046 = vadd.xlane.f32.xlu0 %v3039
    %v3047 = vpop.xlane.xlu0 %3046
    %v3048 = vmul.f32 %v3029, 0.0078125
    %v3049 = vmul.f32 %v3031, 0.0078125
    %v3050 = vmul.f32 %v3033, 0.0078125
    %v3051 = vmul.f32 %v3035, 0.0078125
    %v3052 = vmul.f32 %v3041, 0.0078125
    %v3053 = vmul.f32 %v3043, 0.0078125
    %v3054 = vmul.f32 %v3045, 0.0078125
    %v3055 = vmul.f32 %v3047, 0.0078125
    %v3056 = vmul.f32 %v3048, %v3048
    %v3057 = vmul.f32 %v3049, %v3049
    %v3058 = vmul.f32 %v3050, %v3050
    %v3059 = vmul.f32 %v3051, %v3051
    %v3060 = vsub.f32 %v3052, %v3056
    %v3061 = vsub.f32 %v3053, %v3057
    %v3062 = vsub.f32 %v3054, %v3058
    %v3063 = vsub.f32 %v3055, %v3059
    %v3064 = vsub.f32 %v3014, %v3048
    %v3065 = vsub.f32 %v3017, %v3049
    %v3066 = vsub.f32 %v3022, %v3050
    %v3067 = vsub.f32 %v3025, %v3051
    %v3068 = vadd.f32 %v3060, 1e-05
    %v3069 = vadd.f32 %v3061, 1e-05
    %v3070 = vadd.f32 %v3062, 1e-05
    %v3071 = vadd.f32 %v3063, 1e-05
    %v3072 = vrsqrt.pop %v3068
    %v3073 = vrsqrt.pop %v3069
    %v3074 = vrsqrt.pop %v3070
    %v3075 = vrsqrt.pop %v3071
    %v3076 = vmul.f32 %v3064, %v3072
    %v3077 = vmul.f32 %v3065, %v3073
    %v3078 = vmul.f32 %v3066, %v3074
    %v3079 = vmul.f32 %v3067, %v3075
    %v3080 = vmax.f32 %v3076, 0.0
    %v3081 = vmax.f32 %v3077, 0.0
    %v3082 = vmax.f32 %v3078, 0.0
    %v3083 = vmax.f32 %v3079, 0.0
    %v3084 = vadd.f32 %v2824, %v3080
    %v3085 = vadd.f32 %v2825, %v3081
    %v3086 = vadd.f32 %v2826, %v3082
    %v3087 = vadd.f32 %v2827, %v3083
    %v3088 = vpack.c.bf16 %v3085, %v3084
    %v3089 = vpack.c.bf16 %v3087, %v3086
    %3090 = vmatprep.subr.bf16.mxu0 %v104
    %3091 = vmatpush1.bf16.msra.mxu0 %v103
    %3092 = vmatprep.subr.bf16.mxu0 %v102
    %3093 = vmatpush1.bf16.msra.mxu0 %v101
    %3094 = vmatprep.subr.bf16.mxu0 %v100
    %3095 = vmatpush1.bf16.msra.mxu0 %v99
    %3096 = vmatprep.subr.bf16.mxu0 %v98
    %3097 = vmatpush1.bf16.msra.mxu0 %v97
    %3098 = vmatprep.subr.bf16.mxu0 %v96
    %3099 = vmatpush1.bf16.msra.mxu0 %v95
    %3100 = vmatprep.subr.bf16.mxu0 %v94
    %3101 = vmatpush1.bf16.msra.mxu0 %v93
    %3102 = vmatprep.subr.bf16.mxu0 %v92
    %3103 = vmatpush1.bf16.msra.mxu0 %v91
    %3104 = vmatprep.subr.bf16.mxu0 %v90
    %3105 = vmatpush1.bf16.msra.mxu0 %v89
    %3106 = vmatprep.subr.bf16.mxu0 0
    %3107 = vmatpush2.bf16.msra.mxu0 0
    %3108 = vmatprep.subr.bf16.mxu0 0
    %3109 = vmatpush2.bf16.msra.mxu0 0
    %3110 = vmatprep.subr.bf16.mxu0 0
    %3111 = vmatpush2.bf16.msra.mxu0 0
    %3112 = vmatprep.subr.bf16.mxu0 0
    %3113 = vmatpush2.bf16.msra.mxu0 0
    %3114 = vmatprep.subr.bf16.mxu0 0
    %3115 = vmatpush2.bf16.msra.mxu0 0
    %3116 = vmatprep.subr.bf16.mxu0 0
    %3117 = vmatpush2.bf16.msra.mxu0 0
    %3118 = vmatprep.subr.bf16.mxu0 0
    %3119 = vmatpush2.bf16.msra.mxu0 0
    %3120 = vmatprep.subr.bf16.mxu0 0
    %3121 = vmatpush2.bf16.msra.mxu0 0
    %3122 = vmatprep.mubr.bf16.mxu0 0
    %3123 = vmatmul.mubr.bf16.gmra.mxu0 %v3088
    %v3124 = vpop.f32.mrf.mxu0
    %v3125 = vadd.f32 0.0, %v3124
    %v3126 = vpop.f32.mrf.mxu0
    %v3127 = vadd.f32 0.0, %v3126
    %v3128 = vpop.f32.mrf.mxu0
    %v3129 = vadd.f32 0.0, %v3128
    %v3130 = vpop.f32.mrf.mxu0
    %v3131 = vadd.f32 0.0, %v3130
    %3132 = vmatprep.mubr.bf16.mxu0 0
    %3133 = vmatmul.mubr.bf16.gmra.mxu0 %v3089
    %v3134 = vpop.f32.mrf.mxu0
    %v3135 = vadd.f32 0.0, %v3134
    %v3136 = vpop.f32.mrf.mxu0
    %v3137 = vadd.f32 0.0, %v3136
    %v3138 = vpop.f32.mrf.mxu0
    %v3139 = vadd.f32 0.0, %v3138
    %v3140 = vpop.f32.mrf.mxu0
    %v3141 = vadd.f32 0.0, %v3140
    %3142 = vdwg.mxu0
    %v3143 = vpack.c.bf16 %v3129, %v3125
    %v3144 = vpack.c.bf16 %v3131, %v3127
    %v3145 = vpack.c.bf16 %v3139, %v3135
    %v3146 = vpack.c.bf16 %v3141, %v3137
    %s3147 = scalar_lea.vmem %s3, 400
    %v3148 = vld [vmem:[%s3147] sm:$0xf]
    %v3149 = vld [vmem:[%s3147 + $0x4] sm:$0xf]
    %v3150 = vld [vmem:[%s3147 + $0x8] sm:$0xf]
    %v3151 = vld [vmem:[%s3147 + $0xc] sm:$0xf]
    %s3152 = scalar_lea.vmem %s3, 416
    %v3153 = vld [vmem:[%s3152] sm:$0xf]
    %v3154 = vld [vmem:[%s3152 + $0x4] sm:$0xf]
    %v3155 = vld [vmem:[%s3152 + $0x8] sm:$0xf]
    %v3156 = vld [vmem:[%s3152 + $0xc] sm:$0xf]
    %v3161 = vunpack.c.l.b16 %v3153
    %v3162 = vunpack.c.l.b16 %v3154
    %v3163 = vunpack.c.l.b16 %v3155
    %v3164 = vunpack.c.l.b16 %v3156
    %v3165 = vpack.c.b16 %v3162, %v3161
    %v3166 = vpack.c.b16 %v3164, %v3163
    %v3168 = vsel %vm197, %v3165, 0
    %v3171 = vsel %vm197, %v3166, 0
    %3173 = vmatprep.subr.bf16.mxu0 0
    %3174 = vmatpush1.bf16.msra.mxu0 0
    %3175 = vmatprep.subr.bf16.mxu0 0
    %3176 = vmatpush1.bf16.msra.mxu0 0
    %3177 = vmatprep.subr.bf16.mxu0 0
    %3178 = vmatpush1.bf16.msra.mxu0 0
    %3179 = vmatprep.subr.bf16.mxu0 0
    %3180 = vmatpush1.bf16.msra.mxu0 0
    %3181 = vmatprep.subr.bf16.mxu0 0
    %3182 = vmatpush1.bf16.msra.mxu0 0
    %3183 = vmatprep.subr.bf16.mxu0 0
    %3184 = vmatpush1.bf16.msra.mxu0 0
    %3185 = vmatprep.subr.bf16.mxu0 0
    %3186 = vmatpush1.bf16.msra.mxu0 %v3145
    %3187 = vmatprep.subr.bf16.mxu0 0
    %3188 = vmatpush1.bf16.msra.mxu0 %v3143
    %3189 = vmatprep.subr.bf16.mxu0 0
    %3190 = vmatpush2.bf16.msra.mxu0 0
    %3191 = vmatprep.subr.bf16.mxu0 0
    %3192 = vmatpush2.bf16.msra.mxu0 0
    %3193 = vmatprep.subr.bf16.mxu0 0
    %3194 = vmatpush2.bf16.msra.mxu0 0
    %3195 = vmatprep.subr.bf16.mxu0 0
    %3196 = vmatpush2.bf16.msra.mxu0 0
    %3197 = vmatprep.subr.bf16.mxu0 0
    %3198 = vmatpush2.bf16.msra.mxu0 0
    %3199 = vmatprep.subr.bf16.mxu0 0
    %3200 = vmatpush2.bf16.msra.mxu0 0
    %3201 = vmatprep.subr.bf16.mxu0 0
    %3202 = vmatpush2.bf16.msra.mxu0 0
    %3203 = vmatprep.subr.bf16.mxu0 0
    %3204 = vmatpush2.bf16.msra.mxu0 0
    %3205 = vmatprep.mubr.bf16.mxu0 0
    %3206 = vmatmul.mubr.bf16.gmra.mxu0 %v3168
    %v3207 = vpop.f32.mrf.mxu0
    %v3208 = vadd.f32 0.0, %v3207
    %v3209 = vpop.f32.mrf.mxu0
    %v3210 = vpop.f32.mrf.mxu0
    %v3211 = vadd.f32 0.0, %v3210
    %v3212 = vpop.f32.mrf.mxu0
    %3213 = vmatprep.mubr.bf16.mxu0 0
    %3214 = vmatmul.mubr.bf16.gmra.mxu0 %v3171
    %v3215 = vpop.f32.mrf.mxu0
    %v3216 = vadd.f32 0.0, %v3215
    %v3217 = vpop.f32.mrf.mxu0
    %v3218 = vpop.f32.mrf.mxu0
    %v3219 = vadd.f32 0.0, %v3218
    %v3220 = vpop.f32.mrf.mxu0
    %3221 = vdwg.mxu0
    %v3226 = vunpack.c.l.b16 %v3148
    %v3227 = vunpack.c.l.b16 %v3149
    %v3228 = vunpack.c.l.b16 %v3150
    %v3229 = vunpack.c.l.b16 %v3151
    %v3230 = vpack.c.b16 %v3227, %v3226
    %v3231 = vpack.c.b16 %v3229, %v3228
    %v3233 = vsel %vm197, %v3230, 0
    %v3236 = vsel %vm197, %v3231, 0
    %3238 = vmatprep.subr.bf16.mxu0 0
    %3239 = vmatpush1.bf16.msra.mxu0 0
    %3240 = vmatprep.subr.bf16.mxu0 0
    %3241 = vmatpush1.bf16.msra.mxu0 0
    %3242 = vmatprep.subr.bf16.mxu0 0
    %3243 = vmatpush1.bf16.msra.mxu0 0
    %3244 = vmatprep.subr.bf16.mxu0 0
    %3245 = vmatpush1.bf16.msra.mxu0 0
    %3246 = vmatprep.subr.bf16.mxu0 0
    %3247 = vmatpush1.bf16.msra.mxu0 0
    %3248 = vmatprep.subr.bf16.mxu0 0
    %3249 = vmatpush1.bf16.msra.mxu0 0
    %3250 = vmatprep.subr.bf16.mxu0 0
    %3251 = vmatpush1.bf16.msra.mxu0 %v3089
    %3252 = vmatprep.subr.bf16.mxu0 0
    %3253 = vmatpush1.bf16.msra.mxu0 %v3088
    %3254 = vmatprep.subr.bf16.mxu0 0
    %3255 = vmatpush2.bf16.msra.mxu0 0
    %3256 = vmatprep.subr.bf16.mxu0 0
    %3257 = vmatpush2.bf16.msra.mxu0 0
    %3258 = vmatprep.subr.bf16.mxu0 0
    %3259 = vmatpush2.bf16.msra.mxu0 0
    %3260 = vmatprep.subr.bf16.mxu0 0
    %3261 = vmatpush2.bf16.msra.mxu0 0
    %3262 = vmatprep.subr.bf16.mxu0 0
    %3263 = vmatpush2.bf16.msra.mxu0 0
    %3264 = vmatprep.subr.bf16.mxu0 0
    %3265 = vmatpush2.bf16.msra.mxu0 0
    %3266 = vmatprep.subr.bf16.mxu0 0
    %3267 = vmatpush2.bf16.msra.mxu0 0
    %3268 = vmatprep.subr.bf16.mxu0 0
    %3269 = vmatpush2.bf16.msra.mxu0 0
    %3270 = vmatprep.mubr.bf16.mxu0 0
    %3271 = vmatmul.mubr.bf16.gmra.mxu0 %v3233
    %v3272 = vpop.f32.mrf.mxu0
    %v3273 = vadd.f32 %v3208, %v3272
    %v3274 = vpop.f32.mrf.mxu0
    %v3275 = vpop.f32.mrf.mxu0
    %v3276 = vadd.f32 %v3211, %v3275
    %v3277 = vpop.f32.mrf.mxu0
    %3278 = vmatprep.mubr.bf16.mxu0 0
    %3279 = vmatmul.mubr.bf16.gmra.mxu0 %v3236
    %v3280 = vpop.f32.mrf.mxu0
    %v3281 = vadd.f32 %v3216, %v3280
    %v3282 = vpop.f32.mrf.mxu0
    %v3283 = vpop.f32.mrf.mxu0
    %v3284 = vadd.f32 %v3219, %v3283
    %v3285 = vpop.f32.mrf.mxu0
    %3286 = vdwg.mxu0
    %s3287 = scalar_lea.vmem %s3, 432
    %v3288 = vld [vmem:[%s3287] sm:$0xf]
    %v3289 = vld [vmem:[%s3287 + $0x4] sm:$0xf]
    %v3290 = vld [vmem:[%s3287 + $0x8] sm:$0xf]
    %v3291 = vld [vmem:[%s3287 + $0xc] sm:$0xf]
    %v3296 = vunpack.c.l.b16 %v3288
    %v3297 = vunpack.c.l.b16 %v3289
    %v3298 = vunpack.c.l.b16 %v3290
    %v3299 = vunpack.c.l.b16 %v3291
    %v3300 = vpack.c.b16 %v3297, %v3296
    %v3301 = vpack.c.b16 %v3299, %v3298
    %v3303 = vsel %vm197, %v3300, 0
    %v3306 = vsel %vm197, %v3301, 0
    %3308 = vmatprep.subr.bf16.mxu0 0
    %3309 = vmatpush1.bf16.msra.mxu0 0
    %3310 = vmatprep.subr.bf16.mxu0 0
    %3311 = vmatpush1.bf16.msra.mxu0 0
    %3312 = vmatprep.subr.bf16.mxu0 0
    %3313 = vmatpush1.bf16.msra.mxu0 0
    %3314 = vmatprep.subr.bf16.mxu0 0
    %3315 = vmatpush1.bf16.msra.mxu0 0
    %3316 = vmatprep.subr.bf16.mxu0 0
    %3317 = vmatpush1.bf16.msra.mxu0 0
    %3318 = vmatprep.subr.bf16.mxu0 0
    %3319 = vmatpush1.bf16.msra.mxu0 0
    %3320 = vmatprep.subr.bf16.mxu0 0
    %3321 = vmatpush1.bf16.msra.mxu0 %v3146
    %3322 = vmatprep.subr.bf16.mxu0 0
    %3323 = vmatpush1.bf16.msra.mxu0 %v3144
    %3324 = vmatprep.subr.bf16.mxu0 0
    %3325 = vmatpush2.bf16.msra.mxu0 0
    %3326 = vmatprep.subr.bf16.mxu0 0
    %3327 = vmatpush2.bf16.msra.mxu0 0
    %3328 = vmatprep.subr.bf16.mxu0 0
    %3329 = vmatpush2.bf16.msra.mxu0 0
    %3330 = vmatprep.subr.bf16.mxu0 0
    %3331 = vmatpush2.bf16.msra.mxu0 0
    %3332 = vmatprep.subr.bf16.mxu0 0
    %3333 = vmatpush2.bf16.msra.mxu0 0
    %3334 = vmatprep.subr.bf16.mxu0 0
    %3335 = vmatpush2.bf16.msra.mxu0 0
    %3336 = vmatprep.subr.bf16.mxu0 0
    %3337 = vmatpush2.bf16.msra.mxu0 0
    %3338 = vmatprep.subr.bf16.mxu0 0
    %3339 = vmatpush2.bf16.msra.mxu0 0
    %3340 = vmatprep.mubr.bf16.mxu0 0
    %3341 = vmatmul.mubr.bf16.gmra.mxu0 %v3303
    %v3342 = vpop.f32.mrf.mxu0
    %v3343 = vadd.f32 0.0, %v3342
    %v3344 = vpop.f32.mrf.mxu0
    %v3345 = vpop.f32.mrf.mxu0
    %v3346 = vadd.f32 0.0, %v3345
    %v3347 = vpop.f32.mrf.mxu0
    %3348 = vmatprep.mubr.bf16.mxu0 0
    %3349 = vmatmul.mubr.bf16.gmra.mxu0 %v3306
    %v3350 = vpop.f32.mrf.mxu0
    %v3351 = vadd.f32 0.0, %v3350
    %v3352 = vpop.f32.mrf.mxu0
    %v3353 = vpop.f32.mrf.mxu0
    %v3354 = vadd.f32 0.0, %v3353
    %v3355 = vpop.f32.mrf.mxu0
    %3356 = vdwg.mxu0
    %v3357 = vadd.f32 %v3273, %v3343
    %v3358 = vadd.f32 %v3276, %v3346
    %v3359 = vadd.f32 %v3281, %v3351
    %v3360 = vadd.f32 %v3284, %v3354
    %s3361 = scalar_lea.vmem %s2, 160
    %v3362 = vld [vmem:[%s3361] sm:$0xff]
    %v3363 = vld [vmem:[%s3361 + $0x8] sm:$0xff]
    %v3364 = vld [vmem:[%s3361 + $0x10] sm:$0xff]
    %v3365 = vld [vmem:[%s3361 + $0x18] sm:$0xff]
    %v3366 = vadd.f32 %v3357, %v3362
    %v3367 = vadd.f32 %v3358, %v3363
    %v3368 = vadd.f32 %v3359, %v3364
    %v3369 = vadd.f32 %v3360, %v3365
    %3370 = vadd.xlane.f32.xlu0 %v3366
    %v3371 = vpop.xlane.xlu0 %3370
    %3372 = vadd.xlane.f32.xlu0 %v3367
    %v3373 = vpop.xlane.xlu0 %3372
    %3374 = vadd.xlane.f32.xlu0 %v3368
    %v3375 = vpop.xlane.xlu0 %3374
    %3376 = vadd.xlane.f32.xlu0 %v3369
    %v3377 = vpop.xlane.xlu0 %3376
    %v3378 = vmul.f32 %v3366, %v3366
    %v3379 = vmul.f32 %v3367, %v3367
    %v3380 = vmul.f32 %v3368, %v3368
    %v3381 = vmul.f32 %v3369, %v3369
    %3382 = vadd.xlane.f32.xlu0 %v3378
    %v3383 = vpop.xlane.xlu0 %3382
    %3384 = vadd.xlane.f32.xlu0 %v3379
    %v3385 = vpop.xlane.xlu0 %3384
    %3386 = vadd.xlane.f32.xlu0 %v3380
    %v3387 = vpop.xlane.xlu0 %3386
    %3388 = vadd.xlane.f32.xlu0 %v3381
    %v3389 = vpop.xlane.xlu0 %3388
    %v3390 = vmul.f32 %v3371, 0.0078125
    %v3391 = vmul.f32 %v3373, 0.0078125
    %v3392 = vmul.f32 %v3375, 0.0078125
    %v3393 = vmul.f32 %v3377, 0.0078125
    %v3394 = vmul.f32 %v3383, 0.0078125
    %v3395 = vmul.f32 %v3385, 0.0078125
    %v3396 = vmul.f32 %v3387, 0.0078125
    %v3397 = vmul.f32 %v3389, 0.0078125
    %v3398 = vmul.f32 %v3390, %v3390
    %v3399 = vmul.f32 %v3391, %v3391
    %v3400 = vmul.f32 %v3392, %v3392
    %v3401 = vmul.f32 %v3393, %v3393
    %v3402 = vsub.f32 %v3394, %v3398
    %v3403 = vsub.f32 %v3395, %v3399
    %v3404 = vsub.f32 %v3396, %v3400
    %v3405 = vsub.f32 %v3397, %v3401
    %v3406 = vsub.f32 %v3366, %v3390
    %v3407 = vsub.f32 %v3367, %v3391
    %v3408 = vsub.f32 %v3368, %v3392
    %v3409 = vsub.f32 %v3369, %v3393
    %v3410 = vadd.f32 %v3402, 1e-05
    %v3411 = vadd.f32 %v3403, 1e-05
    %v3412 = vadd.f32 %v3404, 1e-05
    %v3413 = vadd.f32 %v3405, 1e-05
    %v3414 = vrsqrt.pop %v3410
    %v3415 = vrsqrt.pop %v3411
    %v3416 = vrsqrt.pop %v3412
    %v3417 = vrsqrt.pop %v3413
    %v3418 = vmul.f32 %v3406, %v3414
    %v3419 = vmul.f32 %v3407, %v3415
    %v3420 = vmul.f32 %v3408, %v3416
    %v3421 = vmul.f32 %v3409, %v3417
    %s3422 = scalar_lea.vmem %s3, 448
    %v3423 = vld [vmem:[%s3422] sm:$0xf]
    %v3424 = vld [vmem:[%s3422 + $0x4] sm:$0xf]
    %v3425 = vld [vmem:[%s3422 + $0x8] sm:$0xf]
    %v3426 = vld [vmem:[%s3422 + $0xc] sm:$0xf]
    %v3427 = vpack.c.bf16 %v3419, %v3418
    %v3428 = vpack.c.bf16 %v3421, %v3420
    %v3433 = vunpack.c.l.b16 %v3423
    %v3434 = vunpack.c.l.b16 %v3424
    %v3435 = vunpack.c.l.b16 %v3425
    %v3436 = vunpack.c.l.b16 %v3426
    %v3437 = vpack.c.b16 %v3434, %v3433
    %v3438 = vpack.c.b16 %v3436, %v3435
    %v3440 = vsel %vm197, %v3437, 0
    %v3443 = vsel %vm197, %v3438, 0
    %3445 = vmatprep.subr.bf16.mxu0 0
    %3446 = vmatpush1.bf16.msra.mxu0 0
    %3447 = vmatprep.subr.bf16.mxu0 0
    %3448 = vmatpush1.bf16.msra.mxu0 0
    %3449 = vmatprep.subr.bf16.mxu0 0
    %3450 = vmatpush1.bf16.msra.mxu0 0
    %3451 = vmatprep.subr.bf16.mxu0 0
    %3452 = vmatpush1.bf16.msra.mxu0 0
    %3453 = vmatprep.subr.bf16.mxu0 0
    %3454 = vmatpush1.bf16.msra.mxu0 0
    %3455 = vmatprep.subr.bf16.mxu0 0
    %3456 = vmatpush1.bf16.msra.mxu0 0
    %3457 = vmatprep.subr.bf16.mxu0 0
    %3458 = vmatpush1.bf16.msra.mxu0 %v3428
    %3459 = vmatprep.subr.bf16.mxu0 0
    %3460 = vmatpush1.bf16.msra.mxu0 %v3427
    %3461 = vmatprep.subr.bf16.mxu0 0
    %3462 = vmatpush2.bf16.msra.mxu0 0
    %3463 = vmatprep.subr.bf16.mxu0 0
    %3464 = vmatpush2.bf16.msra.mxu0 0
    %3465 = vmatprep.subr.bf16.mxu0 0
    %3466 = vmatpush2.bf16.msra.mxu0 0
    %3467 = vmatprep.subr.bf16.mxu0 0
    %3468 = vmatpush2.bf16.msra.mxu0 0
    %3469 = vmatprep.subr.bf16.mxu0 0
    %3470 = vmatpush2.bf16.msra.mxu0 0
    %3471 = vmatprep.subr.bf16.mxu0 0
    %3472 = vmatpush2.bf16.msra.mxu0 0
    %3473 = vmatprep.subr.bf16.mxu0 0
    %3474 = vmatpush2.bf16.msra.mxu0 0
    %3475 = vmatprep.subr.bf16.mxu0 0
    %3476 = vmatpush2.bf16.msra.mxu0 0
    %3477 = vmatprep.mubr.bf16.mxu0 0
    %3478 = vmatmul.mubr.bf16.gmra.mxu0 %v3440
    %v3479 = vpop.f32.mrf.mxu0
    %v3480 = vadd.f32 0.0, %v3479
    %v3481 = vpop.f32.mrf.mxu0
    %v3482 = vpop.f32.mrf.mxu0
    %v3483 = vadd.f32 0.0, %v3482
    %v3484 = vpop.f32.mrf.mxu0
    %3485 = vmatprep.mubr.bf16.mxu0 0
    %3486 = vmatmul.mubr.bf16.gmra.mxu0 %v3443
    %v3487 = vpop.f32.mrf.mxu0
    %v3488 = vadd.f32 0.0, %v3487
    %v3489 = vpop.f32.mrf.mxu0
    %v3490 = vpop.f32.mrf.mxu0
    %v3491 = vadd.f32 0.0, %v3490
    %v3492 = vpop.f32.mrf.mxu0
    %3493 = vdwg.mxu0
    %3494 = vadd.xlane.f32.xlu0 %v3480
    %v3495 = vpop.xlane.xlu0 %3494
    %3496 = vadd.xlane.f32.xlu0 %v3483
    %v3497 = vpop.xlane.xlu0 %3496
    %3498 = vadd.xlane.f32.xlu0 %v3488
    %v3499 = vpop.xlane.xlu0 %3498
    %3500 = vadd.xlane.f32.xlu0 %v3491
    %v3501 = vpop.xlane.xlu0 %3500
    %v3502 = vmul.f32 %v3480, %v3480
    %v3503 = vmul.f32 %v3483, %v3483
    %v3504 = vmul.f32 %v3488, %v3488
    %v3505 = vmul.f32 %v3491, %v3491
    %3506 = vadd.xlane.f32.xlu0 %v3502
    %v3507 = vpop.xlane.xlu0 %3506
    %3508 = vadd.xlane.f32.xlu0 %v3503
    %v3509 = vpop.xlane.xlu0 %3508
    %3510 = vadd.xlane.f32.xlu0 %v3504
    %v3511 = vpop.xlane.xlu0 %3510
    %3512 = vadd.xlane.f32.xlu0 %v3505
    %v3513 = vpop.xlane.xlu0 %3512
    %v3514 = vmul.f32 %v3495, 0.0078125
    %v3515 = vmul.f32 %v3497, 0.0078125
    %v3516 = vmul.f32 %v3499, 0.0078125
    %v3517 = vmul.f32 %v3501, 0.0078125
    %v3518 = vmul.f32 %v3507, 0.0078125
    %v3519 = vmul.f32 %v3509, 0.0078125
    %v3520 = vmul.f32 %v3511, 0.0078125
    %v3521 = vmul.f32 %v3513, 0.0078125
    %v3522 = vmul.f32 %v3514, %v3514
    %v3523 = vmul.f32 %v3515, %v3515
    %v3524 = vmul.f32 %v3516, %v3516
    %v3525 = vmul.f32 %v3517, %v3517
    %v3526 = vsub.f32 %v3518, %v3522
    %v3527 = vsub.f32 %v3519, %v3523
    %v3528 = vsub.f32 %v3520, %v3524
    %v3529 = vsub.f32 %v3521, %v3525
    %v3530 = vsub.f32 %v3480, %v3514
    %v3531 = vsub.f32 %v3483, %v3515
    %v3532 = vsub.f32 %v3488, %v3516
    %v3533 = vsub.f32 %v3491, %v3517
    %v3534 = vadd.f32 %v3526, 1e-05
    %v3535 = vadd.f32 %v3527, 1e-05
    %v3536 = vadd.f32 %v3528, 1e-05
    %v3537 = vadd.f32 %v3529, 1e-05
    %v3538 = vrsqrt.pop %v3534
    %v3539 = vrsqrt.pop %v3535
    %v3540 = vrsqrt.pop %v3536
    %v3541 = vrsqrt.pop %v3537
    %v3542 = vmul.f32 %v3530, %v3538
    %v3543 = vmul.f32 %v3531, %v3539
    %v3544 = vmul.f32 %v3532, %v3540
    %v3545 = vmul.f32 %v3533, %v3541
    %v3546 = vmax.f32 %v3542, 0.0
    %v3547 = vmax.f32 %v3543, 0.0
    %v3548 = vmax.f32 %v3544, 0.0
    %v3549 = vmax.f32 %v3545, 0.0
    %s3550 = scalar_lea.vmem %s3, 464
    %v3551 = vld [vmem:[%s3550] sm:$0xf]
    %v3552 = vld [vmem:[%s3550 + $0x4] sm:$0xf]
    %v3553 = vld [vmem:[%s3550 + $0x8] sm:$0xf]
    %v3554 = vld [vmem:[%s3550 + $0xc] sm:$0xf]
    %v3555 = vpack.c.bf16 %v3547, %v3546
    %v3556 = vpack.c.bf16 %v3549, %v3548
    %v3561 = vunpack.c.l.b16 %v3551
    %v3562 = vunpack.c.l.b16 %v3552
    %v3563 = vunpack.c.l.b16 %v3553
    %v3564 = vunpack.c.l.b16 %v3554
    %v3565 = vpack.c.b16 %v3562, %v3561
    %v3566 = vpack.c.b16 %v3564, %v3563
    %v3568 = vsel %vm197, %v3565, 0
    %v3571 = vsel %vm197, %v3566, 0
    %3573 = vmatprep.subr.bf16.mxu0 0
    %3574 = vmatpush1.bf16.msra.mxu0 0
    %3575 = vmatprep.subr.bf16.mxu0 0
    %3576 = vmatpush1.bf16.msra.mxu0 0
    %3577 = vmatprep.subr.bf16.mxu0 0
    %3578 = vmatpush1.bf16.msra.mxu0 0
    %3579 = vmatprep.subr.bf16.mxu0 0
    %3580 = vmatpush1.bf16.msra.mxu0 0
    %3581 = vmatprep.subr.bf16.mxu0 0
    %3582 = vmatpush1.bf16.msra.mxu0 0
    %3583 = vmatprep.subr.bf16.mxu0 0
    %3584 = vmatpush1.bf16.msra.mxu0 0
    %3585 = vmatprep.subr.bf16.mxu0 0
    %3586 = vmatpush1.bf16.msra.mxu0 %v3556
    %3587 = vmatprep.subr.bf16.mxu0 0
    %3588 = vmatpush1.bf16.msra.mxu0 %v3555
    %3589 = vmatprep.subr.bf16.mxu0 0
    %3590 = vmatpush2.bf16.msra.mxu0 0
    %3591 = vmatprep.subr.bf16.mxu0 0
    %3592 = vmatpush2.bf16.msra.mxu0 0
    %3593 = vmatprep.subr.bf16.mxu0 0
    %3594 = vmatpush2.bf16.msra.mxu0 0
    %3595 = vmatprep.subr.bf16.mxu0 0
    %3596 = vmatpush2.bf16.msra.mxu0 0
    %3597 = vmatprep.subr.bf16.mxu0 0
    %3598 = vmatpush2.bf16.msra.mxu0 0
    %3599 = vmatprep.subr.bf16.mxu0 0
    %3600 = vmatpush2.bf16.msra.mxu0 0
    %3601 = vmatprep.subr.bf16.mxu0 0
    %3602 = vmatpush2.bf16.msra.mxu0 0
    %3603 = vmatprep.subr.bf16.mxu0 0
    %3604 = vmatpush2.bf16.msra.mxu0 0
    %3605 = vmatprep.mubr.bf16.mxu0 0
    %3606 = vmatmul.mubr.bf16.gmra.mxu0 %v3568
    %v3607 = vpop.f32.mrf.mxu0
    %v3608 = vadd.f32 0.0, %v3607
    %v3609 = vpop.f32.mrf.mxu0
    %v3610 = vpop.f32.mrf.mxu0
    %v3611 = vadd.f32 0.0, %v3610
    %v3612 = vpop.f32.mrf.mxu0
    %3613 = vmatprep.mubr.bf16.mxu0 0
    %3614 = vmatmul.mubr.bf16.gmra.mxu0 %v3571
    %v3615 = vpop.f32.mrf.mxu0
    %v3616 = vadd.f32 0.0, %v3615
    %v3617 = vpop.f32.mrf.mxu0
    %v3618 = vpop.f32.mrf.mxu0
    %v3619 = vadd.f32 0.0, %v3618
    %v3620 = vpop.f32.mrf.mxu0
    %3621 = vdwg.mxu0
    %3622 = vadd.xlane.f32.xlu0 %v3608
    %v3623 = vpop.xlane.xlu0 %3622
    %3624 = vadd.xlane.f32.xlu0 %v3611
    %v3625 = vpop.xlane.xlu0 %3624
    %3626 = vadd.xlane.f32.xlu0 %v3616
    %v3627 = vpop.xlane.xlu0 %3626
    %3628 = vadd.xlane.f32.xlu0 %v3619
    %v3629 = vpop.xlane.xlu0 %3628
    %v3630 = vmul.f32 %v3608, %v3608
    %v3631 = vmul.f32 %v3611, %v3611
    %v3632 = vmul.f32 %v3616, %v3616
    %v3633 = vmul.f32 %v3619, %v3619
    %3634 = vadd.xlane.f32.xlu0 %v3630
    %v3635 = vpop.xlane.xlu0 %3634
    %3636 = vadd.xlane.f32.xlu0 %v3631
    %v3637 = vpop.xlane.xlu0 %3636
    %3638 = vadd.xlane.f32.xlu0 %v3632
    %v3639 = vpop.xlane.xlu0 %3638
    %3640 = vadd.xlane.f32.xlu0 %v3633
    %v3641 = vpop.xlane.xlu0 %3640
    %v3642 = vmul.f32 %v3623, 0.0078125
    %v3643 = vmul.f32 %v3625, 0.0078125
    %v3644 = vmul.f32 %v3627, 0.0078125
    %v3645 = vmul.f32 %v3629, 0.0078125
    %v3646 = vmul.f32 %v3635, 0.0078125
    %v3647 = vmul.f32 %v3637, 0.0078125
    %v3648 = vmul.f32 %v3639, 0.0078125
    %v3649 = vmul.f32 %v3641, 0.0078125
    %v3650 = vmul.f32 %v3642, %v3642
    %v3651 = vmul.f32 %v3643, %v3643
    %v3652 = vmul.f32 %v3644, %v3644
    %v3653 = vmul.f32 %v3645, %v3645
    %v3654 = vsub.f32 %v3646, %v3650
    %v3655 = vsub.f32 %v3647, %v3651
    %v3656 = vsub.f32 %v3648, %v3652
    %v3657 = vsub.f32 %v3649, %v3653
    %v3658 = vsub.f32 %v3608, %v3642
    %v3659 = vsub.f32 %v3611, %v3643
    %v3660 = vsub.f32 %v3616, %v3644
    %v3661 = vsub.f32 %v3619, %v3645
    %v3662 = vadd.f32 %v3654, 1e-05
    %v3663 = vadd.f32 %v3655, 1e-05
    %v3664 = vadd.f32 %v3656, 1e-05
    %v3665 = vadd.f32 %v3657, 1e-05
    %v3666 = vrsqrt.pop %v3662
    %v3667 = vrsqrt.pop %v3663
    %v3668 = vrsqrt.pop %v3664
    %v3669 = vrsqrt.pop %v3665
    %v3670 = vmul.f32 %v3658, %v3666
    %v3671 = vmul.f32 %v3659, %v3667
    %v3672 = vmul.f32 %v3660, %v3668
    %v3673 = vmul.f32 %v3661, %v3669
    %v3674 = vmax.f32 %v3670, 0.0
    %v3675 = vmax.f32 %v3671, 0.0
    %v3676 = vmax.f32 %v3672, 0.0
    %v3677 = vmax.f32 %v3673, 0.0
    %v3678 = vadd.f32 %v3418, %v3674
    %v3679 = vadd.f32 %v3419, %v3675
    %v3680 = vadd.f32 %v3420, %v3676
    %v3681 = vadd.f32 %v3421, %v3677
    %3682 = vst [vmem:[#allocation2] sm:$0xff] %v3678
    %3683 = vst [vmem:[#allocation2 + $0x8] sm:$0xff] %v3679
    %3684 = vst [vmem:[#allocation2 + $0x10] sm:$0xff] %v3680
    %3685 = vst [vmem:[#allocation2 + $0x18] sm:$0xff] %v3681
    // Predicated region
    $region18: #{hic_encoder_forward.1} parent=1 // pred_check
      _
    $region19: #{hic_encoder_forward.1} parent=1 // pred_check_branch
      %3687 = sbr.rel (0) target = $region21
    $region20: #{hic_encoder_forward.1} parent=1 // pred_region
      %s3689 = ssub.s32 512, 512
      %3690 = vsyncadd [#allocation3], %s3689
      %s3691 = sshll.u32 [#allocation2], 4
      %s3692 = int_to_ptr.vmem [resolvable:$true] %s3691
      %3697 = dma.vmem_to_hbm [thread:$0]  %s3692, 512, %s4, [#allocation3], 128, 128, 8
    $region21: #{hic_encoder_forward.1} parent=1 // pred_fallthru
      _
    // Predicated region
    $region22: #{hic_encoder_forward.1} parent=1 // pred_check
      _
    $region23: #{hic_encoder_forward.1} parent=1 // pred_check_branch
      %3699 = sbr.rel (0) target = $region25
    $region24: #{hic_encoder_forward.1} parent=1 // pred_region
      %3700 = dma.done [#allocation3], 512
    $region25: #{hic_encoder_forward.1} parent=1 // pred_fallthru
      _
    %3701 = vsyncpa [#allocation3], 1

</llo_original>
